<compile_context>
chip_gen: v7x
topology: tpu7x:2x2x1
jax: 0.10.0
libtpu: 0.0.40
codegen_flags: <defaults>
</compile_context>

<pallas_src>
import functools

import jax
import jax.numpy as jnp
from jax import lax
from jax.experimental import pallas as pl
from jax.experimental.pallas import tpu as pltpu


def cbam_kernel(x_ref, w1_ref, b1_ref, w2_ref, b2_ref, wsp_ref, bsp_ref,
                o_ref, pad_ref, *, Nb, W, K, HW, HWp, OFF):
    """One grid step = Nb batch elements.

    x_ref   : (Nb, C, HWp) VMEM  (lanes >= HW are zero padding)
    w1_ref  : (Cr, C)      fc1 weight
    b1_ref  : (Cr, 1)      fc1 bias
    w2_ref  : (C, Cr)      fc2 weight
    b2_ref  : (C, 1)       fc2 bias
    wsp_ref : (2*K*K,)     spatial conv weight, SMEM, flat [plane, ky, kx]
    bsp_ref : (1,)         spatial conv bias, SMEM
    o_ref   : (Nb, C, HWp) VMEM
    pad_ref : (2*Nb, OFF + HWp + OFF) VMEM scratch (zero-padded spatial stats)
    """
    half = K // 2
    off = half * W + half                 # flat offset of spatial (half, half)

    # ---------- pooled statistics: whole-block reductions ----------
    avg_nc = jnp.sum(x_ref[...], axis=2) * jnp.float32(1.0 / HW)      # (Nb, C)
    if HWp != HW:
        lane = lax.broadcasted_iota(jnp.int32, (1, 1, HWp), 2)
        max_nc = jnp.max(jnp.where(lane < HW, x_ref[...],
                                   jnp.float32(-jnp.inf)), axis=2)    # (Nb, C)
    else:
        max_nc = jnp.max(x_ref[...], axis=2)                          # (Nb, C)
    avg_s = jnp.mean(x_ref[...], axis=1)                              # (Nb, HWp)
    max_s = jnp.max(x_ref[...], axis=1)                               # (Nb, HWp)

    # ---------- channel attention: shared MLP (tiny MXU matmuls) ----------
    pooled_nc = jnp.concatenate([avg_nc, max_nc], axis=0)             # (2Nb, C)
    nt = (((1,), (1,)), ((), ()))          # contract channel dim of both sides
    h = lax.dot_general(w1_ref[...], pooled_nc, nt,
                        preferred_element_type=jnp.float32)           # (Cr, 2Nb)
    h = jnp.maximum(h + b1_ref[...], 0.0)
    mo = jnp.dot(w2_ref[...], h,
                 preferred_element_type=jnp.float32) + b2_ref[...]    # (C, 2Nb)
    ca = jax.nn.sigmoid(mo[:, :Nb] + mo[:, Nb:2 * Nb])                # (C, Nb)

    # ---------- spatial attention: KxK conv on [avg_s; max_s] ----------
    stats = jnp.concatenate([avg_s, max_s], axis=0)                   # (2Nb, HWp)
    # Re-zero the lane-aligned halo regions every step (scratch is per-core
    # and the "parallel" batch axis may start a core at program_id != 0).
    zero_halo = jnp.zeros((2 * Nb, OFF), jnp.float32)
    pad_ref[:, :OFF] = zero_halo                      # unmasked, lane-aligned
    pad_ref[:, OFF + HWp:] = zero_halo
    pad_ref[:, OFF:OFF + HWp] = stats                 # lane-dense store

    is_avg_row = lax.broadcasted_iota(jnp.int32, (2 * Nb, 1), 0) < Nb
    col = lax.broadcasted_iota(jnp.int32, (1, HWp), 1) % W
    acc = jnp.zeros((2 * Nb, HWp), jnp.float32)
    for kx in range(K):
        dx = kx - half
        inner = jnp.zeros((2 * Nb, HWp), jnp.float32)
        for ky in range(K):
            wa = wsp_ref[ky * K + kx]                 # avg-plane weight (SMEM)
            wm = wsp_ref[K * K + ky * K + kx]         # max-plane weight (SMEM)
            wcol = jnp.where(is_avg_row, wa, wm)      # (2Nb, 1)
            start = OFF - off + ky * W + kx
            # Single shifted slab per tap covers both stat planes.
            inner = inner + wcol * pad_ref[:, start:start + HWp]
        # Horizontal zero-padding mask depends only on kx -> K selects total.
        mask = ((col + dx) >= 0) & ((col + dx) < W)
        acc = acc + jnp.where(mask, inner, 0.0)
    conv = acc[:Nb, :] + acc[Nb:2 * Nb, :] + bsp_ref[0]
    sa = jax.nn.sigmoid(conv)                                         # (Nb, HWp)

    # ---------- combine: (ca*x) * (sa*x), per batch element ----------
    for b in range(Nb):
        xb = x_ref[b]                                                 # (C, HWp)
        cab = ca[:, b:b + 1]                                          # (C, 1)
        sab = sa[b:b + 1, :]                                          # (1, HWp)
        o_ref[b] = ((cab * xb) * (sab * xb)).astype(o_ref.dtype)


def _round_up(x, m):
    return ((x + m - 1) // m) * m


def _vmem_capacity_bytes():
    try:
        return int(pltpu.get_tpu_info().vmem_capacity_bytes)
    except Exception:
        return 64 << 20      # conservative (v7x per-core VMEM)


def _pick_batch_tile(N, C, HWp, vmem_cap):
    """Generation-aware batch tile: ~1/3 of VMEM for the double-buffered
    x/o blocks, while keeping the grid at >= 4 steps when the batch allows
    (DMA/compute overlap, and both v7x TensorCores stay busy)."""
    per_b = C * HWp * 4                         # one (C, HWp) f32 slab
    budget = max(vmem_cap // 3, 4 << 20)
    cap = max(1, budget // (4 * per_b))         # in + out, double-buffered
    if N >= 4:
        cap = min(cap, N // 4)
    return int(max(1, min(cap, N)))


def cbam_pallas(x, fc1_w, fc1_b, fc2_w, fc2_b, conv_w, conv_b):
    """x: (N, C, H, W) f32 NCHW.  Params use PyTorch conventions:
       fc1_w (Cr,C), fc1_b (Cr,), fc2_w (C,Cr), fc2_b (C,), conv_w (1,2,K,K),
       conv_b (1,)."""
    N, C, H, W = x.shape
    HW = H * W
    K = conv_w.shape[-1]
    Cr = fc1_w.shape[0]
    half = K // 2
    off = half * W + half
    OFF = _round_up(off, 128)            # lane-aligned start of the stats region
    HWp = _round_up(HW, 128)             # lane-dense spatial axis
    pad_len = OFF + HWp + OFF

    vmem_cap = _vmem_capacity_bytes()
    Nb = _pick_batch_tile(N, C, HWp, vmem_cap)
    Np = _round_up(N, Nb)                # pad batch instead of an Nb=1 fallback

    x_flat = x.reshape(N, C, HW).astype(jnp.float32)
    if Np != N or HWp != HW:
        x_flat = jnp.pad(x_flat, ((0, Np - N), (0, 0), (0, HWp - HW)))

    w1 = fc1_w.astype(jnp.float32)                        # (Cr, C)
    b1 = fc1_b.reshape(Cr, 1).astype(jnp.float32)
    w2 = fc2_w.astype(jnp.float32)                        # (C, Cr)
    b2 = fc2_b.reshape(C, 1).astype(jnp.float32)
    wsp = conv_w.reshape(-1).astype(jnp.float32)          # (2*K*K,)
    bsp = conv_b.reshape(-1).astype(jnp.float32)          # (1,)

    block_bytes = Nb * C * HWp * 4
    vmem_need = 4 * block_bytes + 2 * Nb * pad_len * 4 + (2 << 20)
    vmem_limit = int(min(int(vmem_cap * 0.9), max(vmem_need, 32 << 20)))

    kernel = functools.partial(cbam_kernel, Nb=Nb, W=W, K=K,
                               HW=HW, HWp=HWp, OFF=OFF)

    out = pl.pallas_call(
        kernel,
        out_shape=jax.ShapeDtypeStruct((Np, C, HWp), x.dtype),
        grid_spec=pltpu.PrefetchScalarGridSpec(
            num_scalar_prefetch=0,
            grid=(Np // Nb,),
            in_specs=[
                pl.BlockSpec((Nb, C, HWp), lambda n: (n, 0, 0)),
                pl.BlockSpec((Cr, C), lambda n: (0, 0)),
                pl.BlockSpec((Cr, 1), lambda n: (0, 0)),
                pl.BlockSpec((C, Cr), lambda n: (0, 0)),
                pl.BlockSpec((C, 1), lambda n: (0, 0)),
                pl.BlockSpec(memory_space=pltpu.MemorySpace.SMEM),
                pl.BlockSpec(memory_space=pltpu.MemorySpace.SMEM),
            ],
            out_specs=pl.BlockSpec((Nb, C, HWp), lambda n: (n, 0, 0)),
            scratch_shapes=[pltpu.VMEM((2 * Nb, pad_len), jnp.float32)],
        ),
        compiler_params=pltpu.CompilerParams(
            dimension_semantics=("parallel",),    # batch tiles are independent
            vmem_limit_bytes=vmem_limit),
    )(x_flat, w1, b1, w2, b2, wsp, bsp)

    return out[:N, :, :HW].reshape(N, C, H, W)


def cbam_ref(x, fc1_w, fc1_b, fc2_w, fc2_b, conv_w, conv_b):
    """Pure-JAX reference mirroring the PyTorch module."""
    hp = lax.Precision.HIGHEST
    pad = conv_w.shape[-1] // 2
    avg = jnp.mean(x, axis=(2, 3))                        # (N, C)
    mx = jnp.max(x, axis=(2, 3))

    def mlp(v):
        h = jnp.maximum(jnp.dot(v, fc1_w.T, precision=hp) + fc1_b, 0.0)
        return jnp.dot(h, fc2_w.T, precision=hp) + fc2_b

    ca = jax.nn.sigmoid(mlp(avg) + mlp(mx))[:, :, None, None]
    avg_s = jnp.mean(x, axis=1, keepdims=True)
    max_s = jnp.max(x, axis=1, keepdims=True)
    comb = jnp.concatenate([avg_s, max_s], axis=1)
    conv = lax.conv_general_dilated(
        comb, conv_w, (1, 1), ((pad, pad), (pad, pad)),
        dimension_numbers=("NCHW", "OIHW", "NCHW"), precision=hp)
    sa = jax.nn.sigmoid(conv + conv_b.reshape(1, 1, 1, 1))
    return (ca * x) * (sa * x)


if __name__ == "__main__":
    # in_channels must be >= 16 because ChannelAttention uses reduction_ratio=16.
    # N=16 exercises a multi-step (>=4) grid and the per-step halo re-zeroing
    # while staying tiny (2 MiB input).  H*W=256 is already lane-dense; the
    # wrapper also handles non-multiple-of-128 spatial sizes.
    N, C, H, W, K = 16, 32, 16, 16, 7
    Cr = C // 16

    key = jax.random.PRNGKey(0)
    ks = jax.random.split(key, 7)
    x = jax.random.normal(ks[0], (N, C, H, W), jnp.float32)
    fc1_w = jax.random.normal(ks[1], (Cr, C), jnp.float32) * 0.2
    fc1_b = jax.random.normal(ks[2], (Cr,), jnp.float32) * 0.1
    fc2_w = jax.random.normal(ks[3], (C, Cr), jnp.float32) * 0.2
    fc2_b = jax.random.normal(ks[4], (C,), jnp.float32) * 0.1
    conv_w = jax.random.normal(ks[5], (1, 2, K, K), jnp.float32) * 0.1
    conv_b = jax.random.normal(ks[6], (1,), jnp.float32) * 0.1

    out = cbam_pallas(x, fc1_w, fc1_b, fc2_w, fc2_b, conv_w, conv_b)
    out = jax.block_until_ready(out)

    ref = cbam_ref(x, fc1_w, fc1_b, fc2_w, fc2_b, conv_w, conv_b)
    assert out.shape == x.shape
    assert jnp.allclose(out, ref, atol=1e-2, rtol=1e-2), (
        f"max abs err = {float(jnp.max(jnp.abs(out - ref)))}")
    print("KERNEL_OK")
</pallas_src>

<mosaic_0001>
module attributes {stable_mosaic.version = 11 : i64} {
  func.func @cbam_kernel(%arg0: i32, %arg1: memref<4x32x256xf32, #tpu.memory_space<vmem>>, %arg2: memref<2x32xf32, #tpu.memory_space<vmem>>, %arg3: memref<2x1xf32, #tpu.memory_space<vmem>>, %arg4: memref<32x2xf32, #tpu.memory_space<vmem>>, %arg5: memref<32x1xf32, #tpu.memory_space<vmem>>, %arg6: memref<98xf32, #tpu.memory_space<smem>>, %arg7: memref<1xf32, #tpu.memory_space<smem>>, %arg8: memref<4x32x256xf32, #tpu.memory_space<vmem>>, %arg9: memref<8x512xf32, #tpu.memory_space<vmem>>) attributes {dimension_semantics = [#tpu.dimension_semantics<parallel>], iteration_bounds = array<i64: 4>, scalar_prefetch = 0 : i64, scratch_operands = 1 : i64, tpu.core_type = #tpu.core_type<tc>, window_params = [{transform_indices = @transform_0, window_bounds = array<i64: 4, 32, 256>}, {pipeline_mode = #tpu.pipeline_mode<synchronous>, transform_indices = @transform_1, window_bounds = array<i64: 2, 32>}, {pipeline_mode = #tpu.pipeline_mode<synchronous>, transform_indices = @transform_2, window_bounds = array<i64: 2, 1>}, {pipeline_mode = #tpu.pipeline_mode<synchronous>, transform_indices = @transform_3, window_bounds = array<i64: 32, 2>}, {pipeline_mode = #tpu.pipeline_mode<synchronous>, transform_indices = @transform_4, window_bounds = array<i64: 32, 1>}, {transform_indices = @transform_5, window_bounds = array<i64: 98>}, {transform_indices = @transform_6, window_bounds = array<i64: 1>}, {transform_indices = @transform_7, window_bounds = array<i64: 4, 32, 256>}]} {
    %c0 = arith.constant 0 : index
    %c0_0 = arith.constant 0 : index
    %c0_1 = arith.constant 0 : index
    %0 = vector.load %arg1[%c0, %c0_0, %c0_1] : memref<4x32x256xf32, #tpu.memory_space<vmem>>, vector<4x32x256xf32>
    %cst = arith.constant dense<0.000000e+00> : vector<4x32xf32>
    %1 = vector.multi_reduction <add>, %0, %cst [2] : vector<4x32x256xf32> to vector<4x32xf32>
    %cst_2 = arith.constant 3.906250e-03 : f32
    %2 = vector.broadcast %cst_2 : f32 to vector<4x32xf32>
    %3 = arith.mulf %1, %2 : vector<4x32xf32>
    %c0_3 = arith.constant 0 : index
    %c0_4 = arith.constant 0 : index
    %c0_5 = arith.constant 0 : index
    %4 = vector.load %arg1[%c0_3, %c0_4, %c0_5] : memref<4x32x256xf32, #tpu.memory_space<vmem>>, vector<4x32x256xf32>
    %cst_6 = arith.constant dense<0xFF800000> : vector<4x32xf32>
    %5 = vector.multi_reduction <maximumf>, %4, %cst_6 [2] : vector<4x32x256xf32> to vector<4x32xf32>
    %c0_7 = arith.constant 0 : index
    %c0_8 = arith.constant 0 : index
    %c0_9 = arith.constant 0 : index
    %6 = vector.load %arg1[%c0_7, %c0_8, %c0_9] : memref<4x32x256xf32, #tpu.memory_space<vmem>>, vector<4x32x256xf32>
    %cst_10 = arith.constant dense<0.000000e+00> : vector<4x256xf32>
    %7 = vector.multi_reduction <add>, %6, %cst_10 [1] : vector<4x32x256xf32> to vector<4x256xf32>
    %cst_11 = arith.constant 3.200000e+01 : f32
    %8 = vector.broadcast %cst_11 : f32 to vector<4x256xf32>
    %9 = arith.divf %7, %8 : vector<4x256xf32>
    %c0_12 = arith.constant 0 : index
    %c0_13 = arith.constant 0 : index
    %c0_14 = arith.constant 0 : index
    %10 = vector.load %arg1[%c0_12, %c0_13, %c0_14] : memref<4x32x256xf32, #tpu.memory_space<vmem>>, vector<4x32x256xf32>
    %cst_15 = arith.constant dense<0xFF800000> : vector<4x256xf32>
    %11 = vector.multi_reduction <maximumf>, %10, %cst_15 [1] : vector<4x32x256xf32> to vector<4x256xf32>
    %12 = tpu.concatenate %3, %5 in 0 : vector<4x32xf32>, vector<4x32xf32> -> vector<8x32xf32>
    %c0_16 = arith.constant 0 : index
    %c0_17 = arith.constant 0 : index
    %13 = vector.load %arg2[%c0_16, %c0_17] : memref<2x32xf32, #tpu.memory_space<vmem>>, vector<2x32xf32>
    %cst_18 = arith.constant dense<0.000000e+00> : vector<2x8xf32>
    %14 = tpu.matmul %13, %12, %cst_18 {dimension_numbers = #tpu.dot_dimension_numbers<[1], [1], [0], [0], [0, 0, 1, 0], [], []>} : vector<2x32xf32>, vector<8x32xf32>, vector<2x8xf32> -> vector<2x8xf32>
    %c0_19 = arith.constant 0 : index
    %c0_20 = arith.constant 0 : index
    %15 = vector.load %arg3[%c0_19, %c0_20] : memref<2x1xf32, #tpu.memory_space<vmem>>, vector<2x1xf32>
    %16 = vector.broadcast %15 : vector<2x1xf32> to vector<2x8xf32>
    %17 = arith.addf %14, %16 : vector<2x8xf32>
    %cst_21 = arith.constant 0.000000e+00 : f32
    %18 = vector.broadcast %cst_21 : f32 to vector<2x8xf32>
    %19 = arith.maximumf %17, %18 : vector<2x8xf32>
    %c0_22 = arith.constant 0 : index
    %c0_23 = arith.constant 0 : index
    %20 = vector.load %arg4[%c0_22, %c0_23] : memref<32x2xf32, #tpu.memory_space<vmem>>, vector<32x2xf32>
    %cst_24 = arith.constant dense<0.000000e+00> : vector<32x8xf32>
    %21 = tpu.matmul %20, %19, %cst_24 {dimension_numbers = #tpu.dot_dimension_numbers<[1], [0], [0], [1], [0, 0, 1, 1], [], []>} : vector<32x2xf32>, vector<2x8xf32>, vector<32x8xf32> -> vector<32x8xf32>
    %c0_25 = arith.constant 0 : index
    %c0_26 = arith.constant 0 : index
    %22 = vector.load %arg5[%c0_25, %c0_26] : memref<32x1xf32, #tpu.memory_space<vmem>>, vector<32x1xf32>
    %23 = vector.broadcast %22 : vector<32x1xf32> to vector<32x8xf32>
    %24 = arith.addf %21, %23 : vector<32x8xf32>
    %25 = vector.extract_strided_slice %24 {offsets = [0, 0], sizes = [32, 4], strides = [1, 1]} : vector<32x8xf32> to vector<32x4xf32>
    %26 = vector.extract_strided_slice %24 {offsets = [0, 4], sizes = [32, 4], strides = [1, 1]} : vector<32x8xf32> to vector<32x4xf32>
    %27 = arith.addf %25, %26 : vector<32x4xf32>
    %28 = arith.negf %27 : vector<32x4xf32>
    %29 = math.exp %28 : vector<32x4xf32>
    %cst_27 = arith.constant 1.000000e+00 : f32
    %30 = vector.broadcast %cst_27 : f32 to vector<32x4xf32>
    %31 = arith.addf %30, %29 : vector<32x4xf32>
    %32 = arith.divf %30, %31 : vector<32x4xf32>
    %33 = tpu.concatenate %9, %11 in 0 : vector<4x256xf32>, vector<4x256xf32> -> vector<8x256xf32>
    %cst_28 = arith.constant 0.000000e+00 : f32
    %34 = vector.broadcast %cst_28 : f32 to vector<8x128xf32>
    %c0_29 = arith.constant 0 : index
    %c0_30 = arith.constant 0 : index
    %35 = vector.load %arg9[%c0_29, %c0_30] : memref<8x512xf32, #tpu.memory_space<vmem>>, vector<8x128xf32>
    tpu.vector_store %arg9[%c0_29, %c0_30], %34 {strides = array<i32>} : memref<8x512xf32, #tpu.memory_space<vmem>>, vector<8x128xf32>,
    %c0_31 = arith.constant 0 : index
    %c384 = arith.constant 384 : index
    %36 = vector.load %arg9[%c0_31, %c384] : memref<8x512xf32, #tpu.memory_space<vmem>>, vector<8x128xf32>
    tpu.vector_store %arg9[%c0_31, %c384], %34 {strides = array<i32>} : memref<8x512xf32, #tpu.memory_space<vmem>>, vector<8x128xf32>,
    %c0_32 = arith.constant 0 : index
    %c128 = arith.constant 128 : index
    %37 = vector.load %arg9[%c0_32, %c128] : memref<8x512xf32, #tpu.memory_space<vmem>>, vector<8x256xf32>
    tpu.vector_store %arg9[%c0_32, %c128], %33 {strides = array<i32>} : memref<8x512xf32, #tpu.memory_space<vmem>>, vector<8x256xf32>,
    %38 = tpu.iota {dimensions = array<i32: 0>} : vector<8x1xi32>
    %c4_i32 = arith.constant 4 : i32
    %39 = vector.broadcast %c4_i32 : i32 to vector<8x1xi32>
    %40 = arith.cmpi slt, %38, %39 : vector<8x1xi32>
    %41 = tpu.iota {dimensions = array<i32: 1>} : vector<1x256xi32>
    %c16_i32 = arith.constant 16 : i32
    %c0_i32 = arith.constant 0 : i32
    %42 = arith.cmpi eq, %c16_i32, %c0_i32 : i32
    %c1_i32 = arith.constant 1 : i32
    %43 = arith.select %42, %c1_i32, %c16_i32 : i32
    %44 = vector.broadcast %43 : i32 to vector<1x256xi32>
    %45 = arith.remsi %41, %44 : vector<1x256xi32>
    %c0_i32_33 = arith.constant 0 : i32
    %46 = vector.broadcast %c0_i32_33 : i32 to vector<1x256xi32>
    %47 = arith.cmpi ne, %45, %46 : vector<1x256xi32>
    %c0_i32_34 = arith.constant 0 : i32
    %48 = vector.broadcast %c0_i32_34 : i32 to vector<1x256xi32>
    %49 = arith.cmpi slt, %45, %48 : vector<1x256xi32>
    %c0_i32_35 = arith.constant 0 : i32
    %50 = arith.cmpi slt, %43, %c0_i32_35 : i32
    %51 = vector.broadcast %50 : i1 to vector<1x256xi1>
    %52 = vector.broadcast %51 : vector<1x256xi1> to vector<1x256xi1>
    %53 = arith.xori %49, %52 : vector<1x256xi1>
    %54 = arith.andi %53, %47 : vector<1x256xi1>
    %55 = vector.broadcast %43 : i32 to vector<1x256xi32>
    %56 = arith.addi %45, %55 : vector<1x256xi32>
    %57 = arith.select %54, %56, %45 : vector<1x256xi1>, vector<1x256xi32>
    %cst_36 = arith.constant 0.000000e+00 : f32
    %58 = vector.broadcast %cst_36 : f32 to vector<8x256xf32>
    %cst_37 = arith.constant 0.000000e+00 : f32
    %59 = vector.broadcast %cst_37 : f32 to vector<8x256xf32>
    %c0_38 = arith.constant 0 : index
    %60 = memref.load %arg6[%c0_38] : memref<98xf32, #tpu.memory_space<smem>>
    %c49 = arith.constant 49 : index
    %61 = memref.load %arg6[%c49] : memref<98xf32, #tpu.memory_space<smem>>
    %62 = vector.broadcast %60 : f32 to vector<8x1xf32>
    %63 = vector.broadcast %61 : f32 to vector<8x1xf32>
    %64 = arith.select %40, %62, %63 : vector<8x1xi1>, vector<8x1xf32>
    %c0_39 = arith.constant 0 : index
    %c77 = arith.constant 77 : index
    %65 = vector.load %arg9[%c0_39, %c77] : memref<8x512xf32, #tpu.memory_space<vmem>>, vector<8x256xf32>
    %66 = vector.broadcast %64 : vector<8x1xf32> to vector<8x256xf32>
    %67 = arith.mulf %66, %65 : vector<8x256xf32>
    %68 = arith.addf %59, %67 : vector<8x256xf32>
    %c7 = arith.constant 7 : index
    %69 = memref.load %arg6[%c7] : memref<98xf32, #tpu.memory_space<smem>>
    %c56 = arith.constant 56 : index
    %70 = memref.load %arg6[%c56] : memref<98xf32, #tpu.memory_space<smem>>
    %71 = vector.broadcast %69 : f32 to vector<8x1xf32>
    %72 = vector.broadcast %70 : f32 to vector<8x1xf32>
    %73 = arith.select %40, %71, %72 : vector<8x1xi1>, vector<8x1xf32>
    %c0_40 = arith.constant 0 : index
    %c93 = arith.constant 93 : index
    %74 = vector.load %arg9[%c0_40, %c93] : memref<8x512xf32, #tpu.memory_space<vmem>>, vector<8x256xf32>
    %75 = vector.broadcast %73 : vector<8x1xf32> to vector<8x256xf32>
    %76 = arith.mulf %75, %74 : vector<8x256xf32>
    %77 = arith.addf %68, %76 : vector<8x256xf32>
    %c14 = arith.constant 14 : index
    %78 = memref.load %arg6[%c14] : memref<98xf32, #tpu.memory_space<smem>>
    %c63 = arith.constant 63 : index
    %79 = memref.load %arg6[%c63] : memref<98xf32, #tpu.memory_space<smem>>
    %80 = vector.broadcast %78 : f32 to vector<8x1xf32>
    %81 = vector.broadcast %79 : f32 to vector<8x1xf32>
    %82 = arith.select %40, %80, %81 : vector<8x1xi1>, vector<8x1xf32>
    %c0_41 = arith.constant 0 : index
    %c109 = arith.constant 109 : index
    %83 = vector.load %arg9[%c0_41, %c109] : memref<8x512xf32, #tpu.memory_space<vmem>>, vector<8x256xf32>
    %84 = vector.broadcast %82 : vector<8x1xf32> to vector<8x256xf32>
    %85 = arith.mulf %84, %83 : vector<8x256xf32>
    %86 = arith.addf %77, %85 : vector<8x256xf32>
    %c21 = arith.constant 21 : index
    %87 = memref.load %arg6[%c21] : memref<98xf32, #tpu.memory_space<smem>>
    %c70 = arith.constant 70 : index
    %88 = memref.load %arg6[%c70] : memref<98xf32, #tpu.memory_space<smem>>
    %89 = vector.broadcast %87 : f32 to vector<8x1xf32>
    %90 = vector.broadcast %88 : f32 to vector<8x1xf32>
    %91 = arith.select %40, %89, %90 : vector<8x1xi1>, vector<8x1xf32>
    %c0_42 = arith.constant 0 : index
    %c125 = arith.constant 125 : index
    %92 = vector.load %arg9[%c0_42, %c125] : memref<8x512xf32, #tpu.memory_space<vmem>>, vector<8x256xf32>
    %93 = vector.broadcast %91 : vector<8x1xf32> to vector<8x256xf32>
    %94 = arith.mulf %93, %92 : vector<8x256xf32>
    %95 = arith.addf %86, %94 : vector<8x256xf32>
    %c28 = arith.constant 28 : index
    %96 = memref.load %arg6[%c28] : memref<98xf32, #tpu.memory_space<smem>>
    %c77_43 = arith.constant 77 : index
    %97 = memref.load %arg6[%c77_43] : memref<98xf32, #tpu.memory_space<smem>>
    %98 = vector.broadcast %96 : f32 to vector<8x1xf32>
    %99 = vector.broadcast %97 : f32 to vector<8x1xf32>
    %100 = arith.select %40, %98, %99 : vector<8x1xi1>, vector<8x1xf32>
    %c0_44 = arith.constant 0 : index
    %c141 = arith.constant 141 : index
    %101 = vector.load %arg9[%c0_44, %c141] : memref<8x512xf32, #tpu.memory_space<vmem>>, vector<8x256xf32>
    %102 = vector.broadcast %100 : vector<8x1xf32> to vector<8x256xf32>
    %103 = arith.mulf %102, %101 : vector<8x256xf32>
    %104 = arith.addf %95, %103 : vector<8x256xf32>
    %c35 = arith.constant 35 : index
    %105 = memref.load %arg6[%c35] : memref<98xf32, #tpu.memory_space<smem>>
    %c84 = arith.constant 84 : index
    %106 = memref.load %arg6[%c84] : memref<98xf32, #tpu.memory_space<smem>>
    %107 = vector.broadcast %105 : f32 to vector<8x1xf32>
    %108 = vector.broadcast %106 : f32 to vector<8x1xf32>
    %109 = arith.select %40, %107, %108 : vector<8x1xi1>, vector<8x1xf32>
    %c0_45 = arith.constant 0 : index
    %c157 = arith.constant 157 : index
    %110 = vector.load %arg9[%c0_45, %c157] : memref<8x512xf32, #tpu.memory_space<vmem>>, vector<8x256xf32>
    %111 = vector.broadcast %109 : vector<8x1xf32> to vector<8x256xf32>
    %112 = arith.mulf %111, %110 : vector<8x256xf32>
    %113 = arith.addf %104, %112 : vector<8x256xf32>
    %c42 = arith.constant 42 : index
    %114 = memref.load %arg6[%c42] : memref<98xf32, #tpu.memory_space<smem>>
    %c91 = arith.constant 91 : index
    %115 = memref.load %arg6[%c91] : memref<98xf32, #tpu.memory_space<smem>>
    %116 = vector.broadcast %114 : f32 to vector<8x1xf32>
    %117 = vector.broadcast %115 : f32 to vector<8x1xf32>
    %118 = arith.select %40, %116, %117 : vector<8x1xi1>, vector<8x1xf32>
    %c0_46 = arith.constant 0 : index
    %c173 = arith.constant 173 : index
    %119 = vector.load %arg9[%c0_46, %c173] : memref<8x512xf32, #tpu.memory_space<vmem>>, vector<8x256xf32>
    %120 = vector.broadcast %118 : vector<8x1xf32> to vector<8x256xf32>
    %121 = arith.mulf %120, %119 : vector<8x256xf32>
    %122 = arith.addf %113, %121 : vector<8x256xf32>
    %c-3_i32 = arith.constant -3 : i32
    %123 = vector.broadcast %c-3_i32 : i32 to vector<1x256xi32>
    %124 = arith.addi %57, %123 : vector<1x256xi32>
    %c0_i32_47 = arith.constant 0 : i32
    %125 = vector.broadcast %c0_i32_47 : i32 to vector<1x256xi32>
    %126 = arith.cmpi sge, %124, %125 : vector<1x256xi32>
    %c-3_i32_48 = arith.constant -3 : i32
    %127 = vector.broadcast %c-3_i32_48 : i32 to vector<1x256xi32>
    %128 = arith.addi %57, %127 : vector<1x256xi32>
    %c16_i32_49 = arith.constant 16 : i32
    %129 = vector.broadcast %c16_i32_49 : i32 to vector<1x256xi32>
    %130 = arith.cmpi slt, %128, %129 : vector<1x256xi32>
    %131 = arith.andi %126, %130 : vector<1x256xi1>
    %cst_50 = arith.constant 0.000000e+00 : f32
    %132 = vector.shape_cast %131 : vector<1x256xi1> to vector<1x256xi1>
    %133 = vector.broadcast %132 : vector<1x256xi1> to vector<8x256xi1>
    %134 = vector.broadcast %cst_50 : f32 to vector<8x256xf32>
    %135 = arith.select %133, %122, %134 : vector<8x256xi1>, vector<8x256xf32>
    %136 = arith.addf %58, %135 : vector<8x256xf32>
    %cst_51 = arith.constant 0.000000e+00 : f32
    %137 = vector.broadcast %cst_51 : f32 to vector<8x256xf32>
    %c1 = arith.constant 1 : index
    %138 = memref.load %arg6[%c1] : memref<98xf32, #tpu.memory_space<smem>>
    %c50 = arith.constant 50 : index
    %139 = memref.load %arg6[%c50] : memref<98xf32, #tpu.memory_space<smem>>
    %140 = vector.broadcast %138 : f32 to vector<8x1xf32>
    %141 = vector.broadcast %139 : f32 to vector<8x1xf32>
    %142 = arith.select %40, %140, %141 : vector<8x1xi1>, vector<8x1xf32>
    %c0_52 = arith.constant 0 : index
    %c78 = arith.constant 78 : index
    %143 = vector.load %arg9[%c0_52, %c78] : memref<8x512xf32, #tpu.memory_space<vmem>>, vector<8x256xf32>
    %144 = vector.broadcast %142 : vector<8x1xf32> to vector<8x256xf32>
    %145 = arith.mulf %144, %143 : vector<8x256xf32>
    %146 = arith.addf %137, %145 : vector<8x256xf32>
    %c8 = arith.constant 8 : index
    %147 = memref.load %arg6[%c8] : memref<98xf32, #tpu.memory_space<smem>>
    %c57 = arith.constant 57 : index
    %148 = memref.load %arg6[%c57] : memref<98xf32, #tpu.memory_space<smem>>
    %149 = vector.broadcast %147 : f32 to vector<8x1xf32>
    %150 = vector.broadcast %148 : f32 to vector<8x1xf32>
    %151 = arith.select %40, %149, %150 : vector<8x1xi1>, vector<8x1xf32>
    %c0_53 = arith.constant 0 : index
    %c94 = arith.constant 94 : index
    %152 = vector.load %arg9[%c0_53, %c94] : memref<8x512xf32, #tpu.memory_space<vmem>>, vector<8x256xf32>
    %153 = vector.broadcast %151 : vector<8x1xf32> to vector<8x256xf32>
    %154 = arith.mulf %153, %152 : vector<8x256xf32>
    %155 = arith.addf %146, %154 : vector<8x256xf32>
    %c15 = arith.constant 15 : index
    %156 = memref.load %arg6[%c15] : memref<98xf32, #tpu.memory_space<smem>>
    %c64 = arith.constant 64 : index
    %157 = memref.load %arg6[%c64] : memref<98xf32, #tpu.memory_space<smem>>
    %158 = vector.broadcast %156 : f32 to vector<8x1xf32>
    %159 = vector.broadcast %157 : f32 to vector<8x1xf32>
    %160 = arith.select %40, %158, %159 : vector<8x1xi1>, vector<8x1xf32>
    %c0_54 = arith.constant 0 : index
    %c110 = arith.constant 110 : index
    %161 = vector.load %arg9[%c0_54, %c110] : memref<8x512xf32, #tpu.memory_space<vmem>>, vector<8x256xf32>
    %162 = vector.broadcast %160 : vector<8x1xf32> to vector<8x256xf32>
    %163 = arith.mulf %162, %161 : vector<8x256xf32>
    %164 = arith.addf %155, %163 : vector<8x256xf32>
    %c22 = arith.constant 22 : index
    %165 = memref.load %arg6[%c22] : memref<98xf32, #tpu.memory_space<smem>>
    %c71 = arith.constant 71 : index
    %166 = memref.load %arg6[%c71] : memref<98xf32, #tpu.memory_space<smem>>
    %167 = vector.broadcast %165 : f32 to vector<8x1xf32>
    %168 = vector.broadcast %166 : f32 to vector<8x1xf32>
    %169 = arith.select %40, %167, %168 : vector<8x1xi1>, vector<8x1xf32>
    %c0_55 = arith.constant 0 : index
    %c126 = arith.constant 126 : index
    %170 = vector.load %arg9[%c0_55, %c126] : memref<8x512xf32, #tpu.memory_space<vmem>>, vector<8x256xf32>
    %171 = vector.broadcast %169 : vector<8x1xf32> to vector<8x256xf32>
    %172 = arith.mulf %171, %170 : vector<8x256xf32>
    %173 = arith.addf %164, %172 : vector<8x256xf32>
    %c29 = arith.constant 29 : index
    %174 = memref.load %arg6[%c29] : memref<98xf32, #tpu.memory_space<smem>>
    %c78_56 = arith.constant 78 : index
    %175 = memref.load %arg6[%c78_56] : memref<98xf32, #tpu.memory_space<smem>>
    %176 = vector.broadcast %174 : f32 to vector<8x1xf32>
    %177 = vector.broadcast %175 : f32 to vector<8x1xf32>
    %178 = arith.select %40, %176, %177 : vector<8x1xi1>, vector<8x1xf32>
    %c0_57 = arith.constant 0 : index
    %c142 = arith.constant 142 : index
    %179 = vector.load %arg9[%c0_57, %c142] : memref<8x512xf32, #tpu.memory_space<vmem>>, vector<8x256xf32>
    %180 = vector.broadcast %178 : vector<8x1xf32> to vector<8x256xf32>
    %181 = arith.mulf %180, %179 : vector<8x256xf32>
    %182 = arith.addf %173, %181 : vector<8x256xf32>
    %c36 = arith.constant 36 : index
    %183 = memref.load %arg6[%c36] : memref<98xf32, #tpu.memory_space<smem>>
    %c85 = arith.constant 85 : index
    %184 = memref.load %arg6[%c85] : memref<98xf32, #tpu.memory_space<smem>>
    %185 = vector.broadcast %183 : f32 to vector<8x1xf32>
    %186 = vector.broadcast %184 : f32 to vector<8x1xf32>
    %187 = arith.select %40, %185, %186 : vector<8x1xi1>, vector<8x1xf32>
    %c0_58 = arith.constant 0 : index
    %c158 = arith.constant 158 : index
    %188 = vector.load %arg9[%c0_58, %c158] : memref<8x512xf32, #tpu.memory_space<vmem>>, vector<8x256xf32>
    %189 = vector.broadcast %187 : vector<8x1xf32> to vector<8x256xf32>
    %190 = arith.mulf %189, %188 : vector<8x256xf32>
    %191 = arith.addf %182, %190 : vector<8x256xf32>
    %c43 = arith.constant 43 : index
    %192 = memref.load %arg6[%c43] : memref<98xf32, #tpu.memory_space<smem>>
    %c92 = arith.constant 92 : index
    %193 = memref.load %arg6[%c92] : memref<98xf32, #tpu.memory_space<smem>>
    %194 = vector.broadcast %192 : f32 to vector<8x1xf32>
    %195 = vector.broadcast %193 : f32 to vector<8x1xf32>
    %196 = arith.select %40, %194, %195 : vector<8x1xi1>, vector<8x1xf32>
    %c0_59 = arith.constant 0 : index
    %c174 = arith.constant 174 : index
    %197 = vector.load %arg9[%c0_59, %c174] : memref<8x512xf32, #tpu.memory_space<vmem>>, vector<8x256xf32>
    %198 = vector.broadcast %196 : vector<8x1xf32> to vector<8x256xf32>
    %199 = arith.mulf %198, %197 : vector<8x256xf32>
    %200 = arith.addf %191, %199 : vector<8x256xf32>
    %c-2_i32 = arith.constant -2 : i32
    %201 = vector.broadcast %c-2_i32 : i32 to vector<1x256xi32>
    %202 = arith.addi %57, %201 : vector<1x256xi32>
    %c0_i32_60 = arith.constant 0 : i32
    %203 = vector.broadcast %c0_i32_60 : i32 to vector<1x256xi32>
    %204 = arith.cmpi sge, %202, %203 : vector<1x256xi32>
    %c-2_i32_61 = arith.constant -2 : i32
    %205 = vector.broadcast %c-2_i32_61 : i32 to vector<1x256xi32>
    %206 = arith.addi %57, %205 : vector<1x256xi32>
    %c16_i32_62 = arith.constant 16 : i32
    %207 = vector.broadcast %c16_i32_62 : i32 to vector<1x256xi32>
    %208 = arith.cmpi slt, %206, %207 : vector<1x256xi32>
    %209 = arith.andi %204, %208 : vector<1x256xi1>
    %cst_63 = arith.constant 0.000000e+00 : f32
    %210 = vector.shape_cast %209 : vector<1x256xi1> to vector<1x256xi1>
    %211 = vector.broadcast %210 : vector<1x256xi1> to vector<8x256xi1>
    %212 = vector.broadcast %cst_63 : f32 to vector<8x256xf32>
    %213 = arith.select %211, %200, %212 : vector<8x256xi1>, vector<8x256xf32>
    %214 = arith.addf %136, %213 : vector<8x256xf32>
    %cst_64 = arith.constant 0.000000e+00 : f32
    %215 = vector.broadcast %cst_64 : f32 to vector<8x256xf32>
    %c2 = arith.constant 2 : index
    %216 = memref.load %arg6[%c2] : memref<98xf32, #tpu.memory_space<smem>>
    %c51 = arith.constant 51 : index
    %217 = memref.load %arg6[%c51] : memref<98xf32, #tpu.memory_space<smem>>
    %218 = vector.broadcast %216 : f32 to vector<8x1xf32>
    %219 = vector.broadcast %217 : f32 to vector<8x1xf32>
    %220 = arith.select %40, %218, %219 : vector<8x1xi1>, vector<8x1xf32>
    %c0_65 = arith.constant 0 : index
    %c79 = arith.constant 79 : index
    %221 = vector.load %arg9[%c0_65, %c79] : memref<8x512xf32, #tpu.memory_space<vmem>>, vector<8x256xf32>
    %222 = vector.broadcast %220 : vector<8x1xf32> to vector<8x256xf32>
    %223 = arith.mulf %222, %221 : vector<8x256xf32>
    %224 = arith.addf %215, %223 : vector<8x256xf32>
    %c9 = arith.constant 9 : index
    %225 = memref.load %arg6[%c9] : memref<98xf32, #tpu.memory_space<smem>>
    %c58 = arith.constant 58 : index
    %226 = memref.load %arg6[%c58] : memref<98xf32, #tpu.memory_space<smem>>
    %227 = vector.broadcast %225 : f32 to vector<8x1xf32>
    %228 = vector.broadcast %226 : f32 to vector<8x1xf32>
    %229 = arith.select %40, %227, %228 : vector<8x1xi1>, vector<8x1xf32>
    %c0_66 = arith.constant 0 : index
    %c95 = arith.constant 95 : index
    %230 = vector.load %arg9[%c0_66, %c95] : memref<8x512xf32, #tpu.memory_space<vmem>>, vector<8x256xf32>
    %231 = vector.broadcast %229 : vector<8x1xf32> to vector<8x256xf32>
    %232 = arith.mulf %231, %230 : vector<8x256xf32>
    %233 = arith.addf %224, %232 : vector<8x256xf32>
    %c16 = arith.constant 16 : index
    %234 = memref.load %arg6[%c16] : memref<98xf32, #tpu.memory_space<smem>>
    %c65 = arith.constant 65 : index
    %235 = memref.load %arg6[%c65] : memref<98xf32, #tpu.memory_space<smem>>
    %236 = vector.broadcast %234 : f32 to vector<8x1xf32>
    %237 = vector.broadcast %235 : f32 to vector<8x1xf32>
    %238 = arith.select %40, %236, %237 : vector<8x1xi1>, vector<8x1xf32>
    %c0_67 = arith.constant 0 : index
    %c111 = arith.constant 111 : index
    %239 = vector.load %arg9[%c0_67, %c111] : memref<8x512xf32, #tpu.memory_space<vmem>>, vector<8x256xf32>
    %240 = vector.broadcast %238 : vector<8x1xf32> to vector<8x256xf32>
    %241 = arith.mulf %240, %239 : vector<8x256xf32>
    %242 = arith.addf %233, %241 : vector<8x256xf32>
    %c23 = arith.constant 23 : index
    %243 = memref.load %arg6[%c23] : memref<98xf32, #tpu.memory_space<smem>>
    %c72 = arith.constant 72 : index
    %244 = memref.load %arg6[%c72] : memref<98xf32, #tpu.memory_space<smem>>
    %245 = vector.broadcast %243 : f32 to vector<8x1xf32>
    %246 = vector.broadcast %244 : f32 to vector<8x1xf32>
    %247 = arith.select %40, %245, %246 : vector<8x1xi1>, vector<8x1xf32>
    %c0_68 = arith.constant 0 : index
    %c127 = arith.constant 127 : index
    %248 = vector.load %arg9[%c0_68, %c127] : memref<8x512xf32, #tpu.memory_space<vmem>>, vector<8x256xf32>
    %249 = vector.broadcast %247 : vector<8x1xf32> to vector<8x256xf32>
    %250 = arith.mulf %249, %248 : vector<8x256xf32>
    %251 = arith.addf %242, %250 : vector<8x256xf32>
    %c30 = arith.constant 30 : index
    %252 = memref.load %arg6[%c30] : memref<98xf32, #tpu.memory_space<smem>>
    %c79_69 = arith.constant 79 : index
    %253 = memref.load %arg6[%c79_69] : memref<98xf32, #tpu.memory_space<smem>>
    %254 = vector.broadcast %252 : f32 to vector<8x1xf32>
    %255 = vector.broadcast %253 : f32 to vector<8x1xf32>
    %256 = arith.select %40, %254, %255 : vector<8x1xi1>, vector<8x1xf32>
    %c0_70 = arith.constant 0 : index
    %c143 = arith.constant 143 : index
    %257 = vector.load %arg9[%c0_70, %c143] : memref<8x512xf32, #tpu.memory_space<vmem>>, vector<8x256xf32>
    %258 = vector.broadcast %256 : vector<8x1xf32> to vector<8x256xf32>
    %259 = arith.mulf %258, %257 : vector<8x256xf32>
    %260 = arith.addf %251, %259 : vector<8x256xf32>
    %c37 = arith.constant 37 : index
    %261 = memref.load %arg6[%c37] : memref<98xf32, #tpu.memory_space<smem>>
    %c86 = arith.constant 86 : index
    %262 = memref.load %arg6[%c86] : memref<98xf32, #tpu.memory_space<smem>>
    %263 = vector.broadcast %261 : f32 to vector<8x1xf32>
    %264 = vector.broadcast %262 : f32 to vector<8x1xf32>
    %265 = arith.select %40, %263, %264 : vector<8x1xi1>, vector<8x1xf32>
    %c0_71 = arith.constant 0 : index
    %c159 = arith.constant 159 : index
    %266 = vector.load %arg9[%c0_71, %c159] : memref<8x512xf32, #tpu.memory_space<vmem>>, vector<8x256xf32>
    %267 = vector.broadcast %265 : vector<8x1xf32> to vector<8x256xf32>
    %268 = arith.mulf %267, %266 : vector<8x256xf32>
    %269 = arith.addf %260, %268 : vector<8x256xf32>
    %c44 = arith.constant 44 : index
    %270 = memref.load %arg6[%c44] : memref<98xf32, #tpu.memory_space<smem>>
    %c93_72 = arith.constant 93 : index
    %271 = memref.load %arg6[%c93_72] : memref<98xf32, #tpu.memory_space<smem>>
    %272 = vector.broadcast %270 : f32 to vector<8x1xf32>
    %273 = vector.broadcast %271 : f32 to vector<8x1xf32>
    %274 = arith.select %40, %272, %273 : vector<8x1xi1>, vector<8x1xf32>
    %c0_73 = arith.constant 0 : index
    %c175 = arith.constant 175 : index
    %275 = vector.load %arg9[%c0_73, %c175] : memref<8x512xf32, #tpu.memory_space<vmem>>, vector<8x256xf32>
    %276 = vector.broadcast %274 : vector<8x1xf32> to vector<8x256xf32>
    %277 = arith.mulf %276, %275 : vector<8x256xf32>
    %278 = arith.addf %269, %277 : vector<8x256xf32>
    %c-1_i32 = arith.constant -1 : i32
    %279 = vector.broadcast %c-1_i32 : i32 to vector<1x256xi32>
    %280 = arith.addi %57, %279 : vector<1x256xi32>
    %c0_i32_74 = arith.constant 0 : i32
    %281 = vector.broadcast %c0_i32_74 : i32 to vector<1x256xi32>
    %282 = arith.cmpi sge, %280, %281 : vector<1x256xi32>
    %c-1_i32_75 = arith.constant -1 : i32
    %283 = vector.broadcast %c-1_i32_75 : i32 to vector<1x256xi32>
    %284 = arith.addi %57, %283 : vector<1x256xi32>
    %c16_i32_76 = arith.constant 16 : i32
    %285 = vector.broadcast %c16_i32_76 : i32 to vector<1x256xi32>
    %286 = arith.cmpi slt, %284, %285 : vector<1x256xi32>
    %287 = arith.andi %282, %286 : vector<1x256xi1>
    %cst_77 = arith.constant 0.000000e+00 : f32
    %288 = vector.shape_cast %287 : vector<1x256xi1> to vector<1x256xi1>
    %289 = vector.broadcast %288 : vector<1x256xi1> to vector<8x256xi1>
    %290 = vector.broadcast %cst_77 : f32 to vector<8x256xf32>
    %291 = arith.select %289, %278, %290 : vector<8x256xi1>, vector<8x256xf32>
    %292 = arith.addf %214, %291 : vector<8x256xf32>
    %cst_78 = arith.constant 0.000000e+00 : f32
    %293 = vector.broadcast %cst_78 : f32 to vector<8x256xf32>
    %c3 = arith.constant 3 : index
    %294 = memref.load %arg6[%c3] : memref<98xf32, #tpu.memory_space<smem>>
    %c52 = arith.constant 52 : index
    %295 = memref.load %arg6[%c52] : memref<98xf32, #tpu.memory_space<smem>>
    %296 = vector.broadcast %294 : f32 to vector<8x1xf32>
    %297 = vector.broadcast %295 : f32 to vector<8x1xf32>
    %298 = arith.select %40, %296, %297 : vector<8x1xi1>, vector<8x1xf32>
    %c0_79 = arith.constant 0 : index
    %c80 = arith.constant 80 : index
    %299 = vector.load %arg9[%c0_79, %c80] : memref<8x512xf32, #tpu.memory_space<vmem>>, vector<8x256xf32>
    %300 = vector.broadcast %298 : vector<8x1xf32> to vector<8x256xf32>
    %301 = arith.mulf %300, %299 : vector<8x256xf32>
    %302 = arith.addf %293, %301 : vector<8x256xf32>
    %c10 = arith.constant 10 : index
    %303 = memref.load %arg6[%c10] : memref<98xf32, #tpu.memory_space<smem>>
    %c59 = arith.constant 59 : index
    %304 = memref.load %arg6[%c59] : memref<98xf32, #tpu.memory_space<smem>>
    %305 = vector.broadcast %303 : f32 to vector<8x1xf32>
    %306 = vector.broadcast %304 : f32 to vector<8x1xf32>
    %307 = arith.select %40, %305, %306 : vector<8x1xi1>, vector<8x1xf32>
    %c0_80 = arith.constant 0 : index
    %c96 = arith.constant 96 : index
    %308 = vector.load %arg9[%c0_80, %c96] : memref<8x512xf32, #tpu.memory_space<vmem>>, vector<8x256xf32>
    %309 = vector.broadcast %307 : vector<8x1xf32> to vector<8x256xf32>
    %310 = arith.mulf %309, %308 : vector<8x256xf32>
    %311 = arith.addf %302, %310 : vector<8x256xf32>
    %c17 = arith.constant 17 : index
    %312 = memref.load %arg6[%c17] : memref<98xf32, #tpu.memory_space<smem>>
    %c66 = arith.constant 66 : index
    %313 = memref.load %arg6[%c66] : memref<98xf32, #tpu.memory_space<smem>>
    %314 = vector.broadcast %312 : f32 to vector<8x1xf32>
    %315 = vector.broadcast %313 : f32 to vector<8x1xf32>
    %316 = arith.select %40, %314, %315 : vector<8x1xi1>, vector<8x1xf32>
    %c0_81 = arith.constant 0 : index
    %c112 = arith.constant 112 : index
    %317 = vector.load %arg9[%c0_81, %c112] : memref<8x512xf32, #tpu.memory_space<vmem>>, vector<8x256xf32>
    %318 = vector.broadcast %316 : vector<8x1xf32> to vector<8x256xf32>
    %319 = arith.mulf %318, %317 : vector<8x256xf32>
    %320 = arith.addf %311, %319 : vector<8x256xf32>
    %c24 = arith.constant 24 : index
    %321 = memref.load %arg6[%c24] : memref<98xf32, #tpu.memory_space<smem>>
    %c73 = arith.constant 73 : index
    %322 = memref.load %arg6[%c73] : memref<98xf32, #tpu.memory_space<smem>>
    %323 = vector.broadcast %321 : f32 to vector<8x1xf32>
    %324 = vector.broadcast %322 : f32 to vector<8x1xf32>
    %325 = arith.select %40, %323, %324 : vector<8x1xi1>, vector<8x1xf32>
    %c0_82 = arith.constant 0 : index
    %c128_83 = arith.constant 128 : index
    %326 = vector.load %arg9[%c0_82, %c128_83] : memref<8x512xf32, #tpu.memory_space<vmem>>, vector<8x256xf32>
    %327 = vector.broadcast %325 : vector<8x1xf32> to vector<8x256xf32>
    %328 = arith.mulf %327, %326 : vector<8x256xf32>
    %329 = arith.addf %320, %328 : vector<8x256xf32>
    %c31 = arith.constant 31 : index
    %330 = memref.load %arg6[%c31] : memref<98xf32, #tpu.memory_space<smem>>
    %c80_84 = arith.constant 80 : index
    %331 = memref.load %arg6[%c80_84] : memref<98xf32, #tpu.memory_space<smem>>
    %332 = vector.broadcast %330 : f32 to vector<8x1xf32>
    %333 = vector.broadcast %331 : f32 to vector<8x1xf32>
    %334 = arith.select %40, %332, %333 : vector<8x1xi1>, vector<8x1xf32>
    %c0_85 = arith.constant 0 : index
    %c144 = arith.constant 144 : index
    %335 = vector.load %arg9[%c0_85, %c144] : memref<8x512xf32, #tpu.memory_space<vmem>>, vector<8x256xf32>
    %336 = vector.broadcast %334 : vector<8x1xf32> to vector<8x256xf32>
    %337 = arith.mulf %336, %335 : vector<8x256xf32>
    %338 = arith.addf %329, %337 : vector<8x256xf32>
    %c38 = arith.constant 38 : index
    %339 = memref.load %arg6[%c38] : memref<98xf32, #tpu.memory_space<smem>>
    %c87 = arith.constant 87 : index
    %340 = memref.load %arg6[%c87] : memref<98xf32, #tpu.memory_space<smem>>
    %341 = vector.broadcast %339 : f32 to vector<8x1xf32>
    %342 = vector.broadcast %340 : f32 to vector<8x1xf32>
    %343 = arith.select %40, %341, %342 : vector<8x1xi1>, vector<8x1xf32>
    %c0_86 = arith.constant 0 : index
    %c160 = arith.constant 160 : index
    %344 = vector.load %arg9[%c0_86, %c160] : memref<8x512xf32, #tpu.memory_space<vmem>>, vector<8x256xf32>
    %345 = vector.broadcast %343 : vector<8x1xf32> to vector<8x256xf32>
    %346 = arith.mulf %345, %344 : vector<8x256xf32>
    %347 = arith.addf %338, %346 : vector<8x256xf32>
    %c45 = arith.constant 45 : index
    %348 = memref.load %arg6[%c45] : memref<98xf32, #tpu.memory_space<smem>>
    %c94_87 = arith.constant 94 : index
    %349 = memref.load %arg6[%c94_87] : memref<98xf32, #tpu.memory_space<smem>>
    %350 = vector.broadcast %348 : f32 to vector<8x1xf32>
    %351 = vector.broadcast %349 : f32 to vector<8x1xf32>
    %352 = arith.select %40, %350, %351 : vector<8x1xi1>, vector<8x1xf32>
    %c0_88 = arith.constant 0 : index
    %c176 = arith.constant 176 : index
    %353 = vector.load %arg9[%c0_88, %c176] : memref<8x512xf32, #tpu.memory_space<vmem>>, vector<8x256xf32>
    %354 = vector.broadcast %352 : vector<8x1xf32> to vector<8x256xf32>
    %355 = arith.mulf %354, %353 : vector<8x256xf32>
    %356 = arith.addf %347, %355 : vector<8x256xf32>
    %c0_i32_89 = arith.constant 0 : i32
    %357 = vector.broadcast %c0_i32_89 : i32 to vector<1x256xi32>
    %358 = arith.addi %57, %357 : vector<1x256xi32>
    %c0_i32_90 = arith.constant 0 : i32
    %359 = vector.broadcast %c0_i32_90 : i32 to vector<1x256xi32>
    %360 = arith.cmpi sge, %358, %359 : vector<1x256xi32>
    %c0_i32_91 = arith.constant 0 : i32
    %361 = vector.broadcast %c0_i32_91 : i32 to vector<1x256xi32>
    %362 = arith.addi %57, %361 : vector<1x256xi32>
    %c16_i32_92 = arith.constant 16 : i32
    %363 = vector.broadcast %c16_i32_92 : i32 to vector<1x256xi32>
    %364 = arith.cmpi slt, %362, %363 : vector<1x256xi32>
    %365 = arith.andi %360, %364 : vector<1x256xi1>
    %cst_93 = arith.constant 0.000000e+00 : f32
    %366 = vector.shape_cast %365 : vector<1x256xi1> to vector<1x256xi1>
    %367 = vector.broadcast %366 : vector<1x256xi1> to vector<8x256xi1>
    %368 = vector.broadcast %cst_93 : f32 to vector<8x256xf32>
    %369 = arith.select %367, %356, %368 : vector<8x256xi1>, vector<8x256xf32>
    %370 = arith.addf %292, %369 : vector<8x256xf32>
    %cst_94 = arith.constant 0.000000e+00 : f32
    %371 = vector.broadcast %cst_94 : f32 to vector<8x256xf32>
    %c4 = arith.constant 4 : index
    %372 = memref.load %arg6[%c4] : memref<98xf32, #tpu.memory_space<smem>>
    %c53 = arith.constant 53 : index
    %373 = memref.load %arg6[%c53] : memref<98xf32, #tpu.memory_space<smem>>
    %374 = vector.broadcast %372 : f32 to vector<8x1xf32>
    %375 = vector.broadcast %373 : f32 to vector<8x1xf32>
    %376 = arith.select %40, %374, %375 : vector<8x1xi1>, vector<8x1xf32>
    %c0_95 = arith.constant 0 : index
    %c81 = arith.constant 81 : index
    %377 = vector.load %arg9[%c0_95, %c81] : memref<8x512xf32, #tpu.memory_space<vmem>>, vector<8x256xf32>
    %378 = vector.broadcast %376 : vector<8x1xf32> to vector<8x256xf32>
    %379 = arith.mulf %378, %377 : vector<8x256xf32>
    %380 = arith.addf %371, %379 : vector<8x256xf32>
    %c11 = arith.constant 11 : index
    %381 = memref.load %arg6[%c11] : memref<98xf32, #tpu.memory_space<smem>>
    %c60 = arith.constant 60 : index
    %382 = memref.load %arg6[%c60] : memref<98xf32, #tpu.memory_space<smem>>
    %383 = vector.broadcast %381 : f32 to vector<8x1xf32>
    %384 = vector.broadcast %382 : f32 to vector<8x1xf32>
    %385 = arith.select %40, %383, %384 : vector<8x1xi1>, vector<8x1xf32>
    %c0_96 = arith.constant 0 : index
    %c97 = arith.constant 97 : index
    %386 = vector.load %arg9[%c0_96, %c97] : memref<8x512xf32, #tpu.memory_space<vmem>>, vector<8x256xf32>
    %387 = vector.broadcast %385 : vector<8x1xf32> to vector<8x256xf32>
    %388 = arith.mulf %387, %386 : vector<8x256xf32>
    %389 = arith.addf %380, %388 : vector<8x256xf32>
    %c18 = arith.constant 18 : index
    %390 = memref.load %arg6[%c18] : memref<98xf32, #tpu.memory_space<smem>>
    %c67 = arith.constant 67 : index
    %391 = memref.load %arg6[%c67] : memref<98xf32, #tpu.memory_space<smem>>
    %392 = vector.broadcast %390 : f32 to vector<8x1xf32>
    %393 = vector.broadcast %391 : f32 to vector<8x1xf32>
    %394 = arith.select %40, %392, %393 : vector<8x1xi1>, vector<8x1xf32>
    %c0_97 = arith.constant 0 : index
    %c113 = arith.constant 113 : index
    %395 = vector.load %arg9[%c0_97, %c113] : memref<8x512xf32, #tpu.memory_space<vmem>>, vector<8x256xf32>
    %396 = vector.broadcast %394 : vector<8x1xf32> to vector<8x256xf32>
    %397 = arith.mulf %396, %395 : vector<8x256xf32>
    %398 = arith.addf %389, %397 : vector<8x256xf32>
    %c25 = arith.constant 25 : index
    %399 = memref.load %arg6[%c25] : memref<98xf32, #tpu.memory_space<smem>>
    %c74 = arith.constant 74 : index
    %400 = memref.load %arg6[%c74] : memref<98xf32, #tpu.memory_space<smem>>
    %401 = vector.broadcast %399 : f32 to vector<8x1xf32>
    %402 = vector.broadcast %400 : f32 to vector<8x1xf32>
    %403 = arith.select %40, %401, %402 : vector<8x1xi1>, vector<8x1xf32>
    %c0_98 = arith.constant 0 : index
    %c129 = arith.constant 129 : index
    %404 = vector.load %arg9[%c0_98, %c129] : memref<8x512xf32, #tpu.memory_space<vmem>>, vector<8x256xf32>
    %405 = vector.broadcast %403 : vector<8x1xf32> to vector<8x256xf32>
    %406 = arith.mulf %405, %404 : vector<8x256xf32>
    %407 = arith.addf %398, %406 : vector<8x256xf32>
    %c32 = arith.constant 32 : index
    %408 = memref.load %arg6[%c32] : memref<98xf32, #tpu.memory_space<smem>>
    %c81_99 = arith.constant 81 : index
    %409 = memref.load %arg6[%c81_99] : memref<98xf32, #tpu.memory_space<smem>>
    %410 = vector.broadcast %408 : f32 to vector<8x1xf32>
    %411 = vector.broadcast %409 : f32 to vector<8x1xf32>
    %412 = arith.select %40, %410, %411 : vector<8x1xi1>, vector<8x1xf32>
    %c0_100 = arith.constant 0 : index
    %c145 = arith.constant 145 : index
    %413 = vector.load %arg9[%c0_100, %c145] : memref<8x512xf32, #tpu.memory_space<vmem>>, vector<8x256xf32>
    %414 = vector.broadcast %412 : vector<8x1xf32> to vector<8x256xf32>
    %415 = arith.mulf %414, %413 : vector<8x256xf32>
    %416 = arith.addf %407, %415 : vector<8x256xf32>
    %c39 = arith.constant 39 : index
    %417 = memref.load %arg6[%c39] : memref<98xf32, #tpu.memory_space<smem>>
    %c88 = arith.constant 88 : index
    %418 = memref.load %arg6[%c88] : memref<98xf32, #tpu.memory_space<smem>>
    %419 = vector.broadcast %417 : f32 to vector<8x1xf32>
    %420 = vector.broadcast %418 : f32 to vector<8x1xf32>
    %421 = arith.select %40, %419, %420 : vector<8x1xi1>, vector<8x1xf32>
    %c0_101 = arith.constant 0 : index
    %c161 = arith.constant 161 : index
    %422 = vector.load %arg9[%c0_101, %c161] : memref<8x512xf32, #tpu.memory_space<vmem>>, vector<8x256xf32>
    %423 = vector.broadcast %421 : vector<8x1xf32> to vector<8x256xf32>
    %424 = arith.mulf %423, %422 : vector<8x256xf32>
    %425 = arith.addf %416, %424 : vector<8x256xf32>
    %c46 = arith.constant 46 : index
    %426 = memref.load %arg6[%c46] : memref<98xf32, #tpu.memory_space<smem>>
    %c95_102 = arith.constant 95 : index
    %427 = memref.load %arg6[%c95_102] : memref<98xf32, #tpu.memory_space<smem>>
    %428 = vector.broadcast %426 : f32 to vector<8x1xf32>
    %429 = vector.broadcast %427 : f32 to vector<8x1xf32>
    %430 = arith.select %40, %428, %429 : vector<8x1xi1>, vector<8x1xf32>
    %c0_103 = arith.constant 0 : index
    %c177 = arith.constant 177 : index
    %431 = vector.load %arg9[%c0_103, %c177] : memref<8x512xf32, #tpu.memory_space<vmem>>, vector<8x256xf32>
    %432 = vector.broadcast %430 : vector<8x1xf32> to vector<8x256xf32>
    %433 = arith.mulf %432, %431 : vector<8x256xf32>
    %434 = arith.addf %425, %433 : vector<8x256xf32>
    %c1_i32_104 = arith.constant 1 : i32
    %435 = vector.broadcast %c1_i32_104 : i32 to vector<1x256xi32>
    %436 = arith.addi %57, %435 : vector<1x256xi32>
    %c0_i32_105 = arith.constant 0 : i32
    %437 = vector.broadcast %c0_i32_105 : i32 to vector<1x256xi32>
    %438 = arith.cmpi sge, %436, %437 : vector<1x256xi32>
    %c1_i32_106 = arith.constant 1 : i32
    %439 = vector.broadcast %c1_i32_106 : i32 to vector<1x256xi32>
    %440 = arith.addi %57, %439 : vector<1x256xi32>
    %c16_i32_107 = arith.constant 16 : i32
    %441 = vector.broadcast %c16_i32_107 : i32 to vector<1x256xi32>
    %442 = arith.cmpi slt, %440, %441 : vector<1x256xi32>
    %443 = arith.andi %438, %442 : vector<1x256xi1>
    %cst_108 = arith.constant 0.000000e+00 : f32
    %444 = vector.shape_cast %443 : vector<1x256xi1> to vector<1x256xi1>
    %445 = vector.broadcast %444 : vector<1x256xi1> to vector<8x256xi1>
    %446 = vector.broadcast %cst_108 : f32 to vector<8x256xf32>
    %447 = arith.select %445, %434, %446 : vector<8x256xi1>, vector<8x256xf32>
    %448 = arith.addf %370, %447 : vector<8x256xf32>
    %cst_109 = arith.constant 0.000000e+00 : f32
    %449 = vector.broadcast %cst_109 : f32 to vector<8x256xf32>
    %c5 = arith.constant 5 : index
    %450 = memref.load %arg6[%c5] : memref<98xf32, #tpu.memory_space<smem>>
    %c54 = arith.constant 54 : index
    %451 = memref.load %arg6[%c54] : memref<98xf32, #tpu.memory_space<smem>>
    %452 = vector.broadcast %450 : f32 to vector<8x1xf32>
    %453 = vector.broadcast %451 : f32 to vector<8x1xf32>
    %454 = arith.select %40, %452, %453 : vector<8x1xi1>, vector<8x1xf32>
    %c0_110 = arith.constant 0 : index
    %c82 = arith.constant 82 : index
    %455 = vector.load %arg9[%c0_110, %c82] : memref<8x512xf32, #tpu.memory_space<vmem>>, vector<8x256xf32>
    %456 = vector.broadcast %454 : vector<8x1xf32> to vector<8x256xf32>
    %457 = arith.mulf %456, %455 : vector<8x256xf32>
    %458 = arith.addf %449, %457 : vector<8x256xf32>
    %c12 = arith.constant 12 : index
    %459 = memref.load %arg6[%c12] : memref<98xf32, #tpu.memory_space<smem>>
    %c61 = arith.constant 61 : index
    %460 = memref.load %arg6[%c61] : memref<98xf32, #tpu.memory_space<smem>>
    %461 = vector.broadcast %459 : f32 to vector<8x1xf32>
    %462 = vector.broadcast %460 : f32 to vector<8x1xf32>
    %463 = arith.select %40, %461, %462 : vector<8x1xi1>, vector<8x1xf32>
    %c0_111 = arith.constant 0 : index
    %c98 = arith.constant 98 : index
    %464 = vector.load %arg9[%c0_111, %c98] : memref<8x512xf32, #tpu.memory_space<vmem>>, vector<8x256xf32>
    %465 = vector.broadcast %463 : vector<8x1xf32> to vector<8x256xf32>
    %466 = arith.mulf %465, %464 : vector<8x256xf32>
    %467 = arith.addf %458, %466 : vector<8x256xf32>
    %c19 = arith.constant 19 : index
    %468 = memref.load %arg6[%c19] : memref<98xf32, #tpu.memory_space<smem>>
    %c68 = arith.constant 68 : index
    %469 = memref.load %arg6[%c68] : memref<98xf32, #tpu.memory_space<smem>>
    %470 = vector.broadcast %468 : f32 to vector<8x1xf32>
    %471 = vector.broadcast %469 : f32 to vector<8x1xf32>
    %472 = arith.select %40, %470, %471 : vector<8x1xi1>, vector<8x1xf32>
    %c0_112 = arith.constant 0 : index
    %c114 = arith.constant 114 : index
    %473 = vector.load %arg9[%c0_112, %c114] : memref<8x512xf32, #tpu.memory_space<vmem>>, vector<8x256xf32>
    %474 = vector.broadcast %472 : vector<8x1xf32> to vector<8x256xf32>
    %475 = arith.mulf %474, %473 : vector<8x256xf32>
    %476 = arith.addf %467, %475 : vector<8x256xf32>
    %c26 = arith.constant 26 : index
    %477 = memref.load %arg6[%c26] : memref<98xf32, #tpu.memory_space<smem>>
    %c75 = arith.constant 75 : index
    %478 = memref.load %arg6[%c75] : memref<98xf32, #tpu.memory_space<smem>>
    %479 = vector.broadcast %477 : f32 to vector<8x1xf32>
    %480 = vector.broadcast %478 : f32 to vector<8x1xf32>
    %481 = arith.select %40, %479, %480 : vector<8x1xi1>, vector<8x1xf32>
    %c0_113 = arith.constant 0 : index
    %c130 = arith.constant 130 : index
    %482 = vector.load %arg9[%c0_113, %c130] : memref<8x512xf32, #tpu.memory_space<vmem>>, vector<8x256xf32>
    %483 = vector.broadcast %481 : vector<8x1xf32> to vector<8x256xf32>
    %484 = arith.mulf %483, %482 : vector<8x256xf32>
    %485 = arith.addf %476, %484 : vector<8x256xf32>
    %c33 = arith.constant 33 : index
    %486 = memref.load %arg6[%c33] : memref<98xf32, #tpu.memory_space<smem>>
    %c82_114 = arith.constant 82 : index
    %487 = memref.load %arg6[%c82_114] : memref<98xf32, #tpu.memory_space<smem>>
    %488 = vector.broadcast %486 : f32 to vector<8x1xf32>
    %489 = vector.broadcast %487 : f32 to vector<8x1xf32>
    %490 = arith.select %40, %488, %489 : vector<8x1xi1>, vector<8x1xf32>
    %c0_115 = arith.constant 0 : index
    %c146 = arith.constant 146 : index
    %491 = vector.load %arg9[%c0_115, %c146] : memref<8x512xf32, #tpu.memory_space<vmem>>, vector<8x256xf32>
    %492 = vector.broadcast %490 : vector<8x1xf32> to vector<8x256xf32>
    %493 = arith.mulf %492, %491 : vector<8x256xf32>
    %494 = arith.addf %485, %493 : vector<8x256xf32>
    %c40 = arith.constant 40 : index
    %495 = memref.load %arg6[%c40] : memref<98xf32, #tpu.memory_space<smem>>
    %c89 = arith.constant 89 : index
    %496 = memref.load %arg6[%c89] : memref<98xf32, #tpu.memory_space<smem>>
    %497 = vector.broadcast %495 : f32 to vector<8x1xf32>
    %498 = vector.broadcast %496 : f32 to vector<8x1xf32>
    %499 = arith.select %40, %497, %498 : vector<8x1xi1>, vector<8x1xf32>
    %c0_116 = arith.constant 0 : index
    %c162 = arith.constant 162 : index
    %500 = vector.load %arg9[%c0_116, %c162] : memref<8x512xf32, #tpu.memory_space<vmem>>, vector<8x256xf32>
    %501 = vector.broadcast %499 : vector<8x1xf32> to vector<8x256xf32>
    %502 = arith.mulf %501, %500 : vector<8x256xf32>
    %503 = arith.addf %494, %502 : vector<8x256xf32>
    %c47 = arith.constant 47 : index
    %504 = memref.load %arg6[%c47] : memref<98xf32, #tpu.memory_space<smem>>
    %c96_117 = arith.constant 96 : index
    %505 = memref.load %arg6[%c96_117] : memref<98xf32, #tpu.memory_space<smem>>
    %506 = vector.broadcast %504 : f32 to vector<8x1xf32>
    %507 = vector.broadcast %505 : f32 to vector<8x1xf32>
    %508 = arith.select %40, %506, %507 : vector<8x1xi1>, vector<8x1xf32>
    %c0_118 = arith.constant 0 : index
    %c178 = arith.constant 178 : index
    %509 = vector.load %arg9[%c0_118, %c178] : memref<8x512xf32, #tpu.memory_space<vmem>>, vector<8x256xf32>
    %510 = vector.broadcast %508 : vector<8x1xf32> to vector<8x256xf32>
    %511 = arith.mulf %510, %509 : vector<8x256xf32>
    %512 = arith.addf %503, %511 : vector<8x256xf32>
    %c2_i32 = arith.constant 2 : i32
    %513 = vector.broadcast %c2_i32 : i32 to vector<1x256xi32>
    %514 = arith.addi %57, %513 : vector<1x256xi32>
    %c0_i32_119 = arith.constant 0 : i32
    %515 = vector.broadcast %c0_i32_119 : i32 to vector<1x256xi32>
    %516 = arith.cmpi sge, %514, %515 : vector<1x256xi32>
    %c2_i32_120 = arith.constant 2 : i32
    %517 = vector.broadcast %c2_i32_120 : i32 to vector<1x256xi32>
    %518 = arith.addi %57, %517 : vector<1x256xi32>
    %c16_i32_121 = arith.constant 16 : i32
    %519 = vector.broadcast %c16_i32_121 : i32 to vector<1x256xi32>
    %520 = arith.cmpi slt, %518, %519 : vector<1x256xi32>
    %521 = arith.andi %516, %520 : vector<1x256xi1>
    %cst_122 = arith.constant 0.000000e+00 : f32
    %522 = vector.shape_cast %521 : vector<1x256xi1> to vector<1x256xi1>
    %523 = vector.broadcast %522 : vector<1x256xi1> to vector<8x256xi1>
    %524 = vector.broadcast %cst_122 : f32 to vector<8x256xf32>
    %525 = arith.select %523, %512, %524 : vector<8x256xi1>, vector<8x256xf32>
    %526 = arith.addf %448, %525 : vector<8x256xf32>
    %cst_123 = arith.constant 0.000000e+00 : f32
    %527 = vector.broadcast %cst_123 : f32 to vector<8x256xf32>
    %c6 = arith.constant 6 : index
    %528 = memref.load %arg6[%c6] : memref<98xf32, #tpu.memory_space<smem>>
    %c55 = arith.constant 55 : index
    %529 = memref.load %arg6[%c55] : memref<98xf32, #tpu.memory_space<smem>>
    %530 = vector.broadcast %528 : f32 to vector<8x1xf32>
    %531 = vector.broadcast %529 : f32 to vector<8x1xf32>
    %532 = arith.select %40, %530, %531 : vector<8x1xi1>, vector<8x1xf32>
    %c0_124 = arith.constant 0 : index
    %c83 = arith.constant 83 : index
    %533 = vector.load %arg9[%c0_124, %c83] : memref<8x512xf32, #tpu.memory_space<vmem>>, vector<8x256xf32>
    %534 = vector.broadcast %532 : vector<8x1xf32> to vector<8x256xf32>
    %535 = arith.mulf %534, %533 : vector<8x256xf32>
    %536 = arith.addf %527, %535 : vector<8x256xf32>
    %c13 = arith.constant 13 : index
    %537 = memref.load %arg6[%c13] : memref<98xf32, #tpu.memory_space<smem>>
    %c62 = arith.constant 62 : index
    %538 = memref.load %arg6[%c62] : memref<98xf32, #tpu.memory_space<smem>>
    %539 = vector.broadcast %537 : f32 to vector<8x1xf32>
    %540 = vector.broadcast %538 : f32 to vector<8x1xf32>
    %541 = arith.select %40, %539, %540 : vector<8x1xi1>, vector<8x1xf32>
    %c0_125 = arith.constant 0 : index
    %c99 = arith.constant 99 : index
    %542 = vector.load %arg9[%c0_125, %c99] : memref<8x512xf32, #tpu.memory_space<vmem>>, vector<8x256xf32>
    %543 = vector.broadcast %541 : vector<8x1xf32> to vector<8x256xf32>
    %544 = arith.mulf %543, %542 : vector<8x256xf32>
    %545 = arith.addf %536, %544 : vector<8x256xf32>
    %c20 = arith.constant 20 : index
    %546 = memref.load %arg6[%c20] : memref<98xf32, #tpu.memory_space<smem>>
    %c69 = arith.constant 69 : index
    %547 = memref.load %arg6[%c69] : memref<98xf32, #tpu.memory_space<smem>>
    %548 = vector.broadcast %546 : f32 to vector<8x1xf32>
    %549 = vector.broadcast %547 : f32 to vector<8x1xf32>
    %550 = arith.select %40, %548, %549 : vector<8x1xi1>, vector<8x1xf32>
    %c0_126 = arith.constant 0 : index
    %c115 = arith.constant 115 : index
    %551 = vector.load %arg9[%c0_126, %c115] : memref<8x512xf32, #tpu.memory_space<vmem>>, vector<8x256xf32>
    %552 = vector.broadcast %550 : vector<8x1xf32> to vector<8x256xf32>
    %553 = arith.mulf %552, %551 : vector<8x256xf32>
    %554 = arith.addf %545, %553 : vector<8x256xf32>
    %c27 = arith.constant 27 : index
    %555 = memref.load %arg6[%c27] : memref<98xf32, #tpu.memory_space<smem>>
    %c76 = arith.constant 76 : index
    %556 = memref.load %arg6[%c76] : memref<98xf32, #tpu.memory_space<smem>>
    %557 = vector.broadcast %555 : f32 to vector<8x1xf32>
    %558 = vector.broadcast %556 : f32 to vector<8x1xf32>
    %559 = arith.select %40, %557, %558 : vector<8x1xi1>, vector<8x1xf32>
    %c0_127 = arith.constant 0 : index
    %c131 = arith.constant 131 : index
    %560 = vector.load %arg9[%c0_127, %c131] : memref<8x512xf32, #tpu.memory_space<vmem>>, vector<8x256xf32>
    %561 = vector.broadcast %559 : vector<8x1xf32> to vector<8x256xf32>
    %562 = arith.mulf %561, %560 : vector<8x256xf32>
    %563 = arith.addf %554, %562 : vector<8x256xf32>
    %c34 = arith.constant 34 : index
    %564 = memref.load %arg6[%c34] : memref<98xf32, #tpu.memory_space<smem>>
    %c83_128 = arith.constant 83 : index
    %565 = memref.load %arg6[%c83_128] : memref<98xf32, #tpu.memory_space<smem>>
    %566 = vector.broadcast %564 : f32 to vector<8x1xf32>
    %567 = vector.broadcast %565 : f32 to vector<8x1xf32>
    %568 = arith.select %40, %566, %567 : vector<8x1xi1>, vector<8x1xf32>
    %c0_129 = arith.constant 0 : index
    %c147 = arith.constant 147 : index
    %569 = vector.load %arg9[%c0_129, %c147] : memref<8x512xf32, #tpu.memory_space<vmem>>, vector<8x256xf32>
    %570 = vector.broadcast %568 : vector<8x1xf32> to vector<8x256xf32>
    %571 = arith.mulf %570, %569 : vector<8x256xf32>
    %572 = arith.addf %563, %571 : vector<8x256xf32>
    %c41 = arith.constant 41 : index
    %573 = memref.load %arg6[%c41] : memref<98xf32, #tpu.memory_space<smem>>
    %c90 = arith.constant 90 : index
    %574 = memref.load %arg6[%c90] : memref<98xf32, #tpu.memory_space<smem>>
    %575 = vector.broadcast %573 : f32 to vector<8x1xf32>
    %576 = vector.broadcast %574 : f32 to vector<8x1xf32>
    %577 = arith.select %40, %575, %576 : vector<8x1xi1>, vector<8x1xf32>
    %c0_130 = arith.constant 0 : index
    %c163 = arith.constant 163 : index
    %578 = vector.load %arg9[%c0_130, %c163] : memref<8x512xf32, #tpu.memory_space<vmem>>, vector<8x256xf32>
    %579 = vector.broadcast %577 : vector<8x1xf32> to vector<8x256xf32>
    %580 = arith.mulf %579, %578 : vector<8x256xf32>
    %581 = arith.addf %572, %580 : vector<8x256xf32>
    %c48 = arith.constant 48 : index
    %582 = memref.load %arg6[%c48] : memref<98xf32, #tpu.memory_space<smem>>
    %c97_131 = arith.constant 97 : index
    %583 = memref.load %arg6[%c97_131] : memref<98xf32, #tpu.memory_space<smem>>
    %584 = vector.broadcast %582 : f32 to vector<8x1xf32>
    %585 = vector.broadcast %583 : f32 to vector<8x1xf32>
    %586 = arith.select %40, %584, %585 : vector<8x1xi1>, vector<8x1xf32>
    %c0_132 = arith.constant 0 : index
    %c179 = arith.constant 179 : index
    %587 = vector.load %arg9[%c0_132, %c179] : memref<8x512xf32, #tpu.memory_space<vmem>>, vector<8x256xf32>
    %588 = vector.broadcast %586 : vector<8x1xf32> to vector<8x256xf32>
    %589 = arith.mulf %588, %587 : vector<8x256xf32>
    %590 = arith.addf %581, %589 : vector<8x256xf32>
    %c3_i32 = arith.constant 3 : i32
    %591 = vector.broadcast %c3_i32 : i32 to vector<1x256xi32>
    %592 = arith.addi %57, %591 : vector<1x256xi32>
    %c0_i32_133 = arith.constant 0 : i32
    %593 = vector.broadcast %c0_i32_133 : i32 to vector<1x256xi32>
    %594 = arith.cmpi sge, %592, %593 : vector<1x256xi32>
    %c3_i32_134 = arith.constant 3 : i32
    %595 = vector.broadcast %c3_i32_134 : i32 to vector<1x256xi32>
    %596 = arith.addi %57, %595 : vector<1x256xi32>
    %c16_i32_135 = arith.constant 16 : i32
    %597 = vector.broadcast %c16_i32_135 : i32 to vector<1x256xi32>
    %598 = arith.cmpi slt, %596, %597 : vector<1x256xi32>
    %599 = arith.andi %594, %598 : vector<1x256xi1>
    %cst_136 = arith.constant 0.000000e+00 : f32
    %600 = vector.shape_cast %599 : vector<1x256xi1> to vector<1x256xi1>
    %601 = vector.broadcast %600 : vector<1x256xi1> to vector<8x256xi1>
    %602 = vector.broadcast %cst_136 : f32 to vector<8x256xf32>
    %603 = arith.select %601, %590, %602 : vector<8x256xi1>, vector<8x256xf32>
    %604 = arith.addf %526, %603 : vector<8x256xf32>
    %605 = vector.extract_strided_slice %604 {offsets = [0, 0], sizes = [4, 256], strides = [1, 1]} : vector<8x256xf32> to vector<4x256xf32>
    %606 = vector.extract_strided_slice %604 {offsets = [4, 0], sizes = [4, 256], strides = [1, 1]} : vector<8x256xf32> to vector<4x256xf32>
    %607 = arith.addf %605, %606 : vector<4x256xf32>
    %c0_137 = arith.constant 0 : index
    %608 = memref.load %arg7[%c0_137] : memref<1xf32, #tpu.memory_space<smem>>
    %609 = vector.broadcast %608 : f32 to vector<4x256xf32>
    %610 = arith.addf %607, %609 : vector<4x256xf32>
    %611 = arith.negf %610 : vector<4x256xf32>
    %612 = math.exp %611 : vector<4x256xf32>
    %cst_138 = arith.constant 1.000000e+00 : f32
    %613 = vector.broadcast %cst_138 : f32 to vector<4x256xf32>
    %614 = arith.addf %613, %612 : vector<4x256xf32>
    %615 = arith.divf %613, %614 : vector<4x256xf32>
    %c0_139 = arith.constant 0 : index
    %c0_140 = arith.constant 0 : index
    %c0_141 = arith.constant 0 : index
    %616 = vector.load %arg1[%c0_139, %c0_140, %c0_141] : memref<4x32x256xf32, #tpu.memory_space<vmem>>, vector<1x32x256xf32>
    %617 = vector.shape_cast %616 : vector<1x32x256xf32> to vector<32x256xf32>
    %618 = vector.extract_strided_slice %32 {offsets = [0, 0], sizes = [32, 1], strides = [1, 1]} : vector<32x4xf32> to vector<32x1xf32>
    %619 = vector.extract_strided_slice %615 {offsets = [0, 0], sizes = [1, 256], strides = [1, 1]} : vector<4x256xf32> to vector<1x256xf32>
    %620 = vector.broadcast %618 : vector<32x1xf32> to vector<32x256xf32>
    %621 = arith.mulf %620, %617 : vector<32x256xf32>
    %622 = vector.broadcast %619 : vector<1x256xf32> to vector<32x256xf32>
    %623 = arith.mulf %622, %617 : vector<32x256xf32>
    %624 = arith.mulf %621, %623 : vector<32x256xf32>
    %c0_142 = arith.constant 0 : index
    %c0_143 = arith.constant 0 : index
    %c0_144 = arith.constant 0 : index
    %625 = vector.load %arg8[%c0_142, %c0_143, %c0_144] : memref<4x32x256xf32, #tpu.memory_space<vmem>>, vector<1x32x256xf32>
    %626 = vector.shape_cast %625 : vector<1x32x256xf32> to vector<32x256xf32>
    %627 = vector.shape_cast %624 : vector<32x256xf32> to vector<1x32x256xf32>
    tpu.vector_store %arg8[%c0_142, %c0_143, %c0_144], %627 {strides = array<i32>} : memref<4x32x256xf32, #tpu.memory_space<vmem>>, vector<1x32x256xf32>,
    %c1_145 = arith.constant 1 : index
    %c0_146 = arith.constant 0 : index
    %c0_147 = arith.constant 0 : index
    %628 = vector.load %arg1[%c1_145, %c0_146, %c0_147] : memref<4x32x256xf32, #tpu.memory_space<vmem>>, vector<1x32x256xf32>
    %629 = vector.shape_cast %628 : vector<1x32x256xf32> to vector<32x256xf32>
    %630 = vector.extract_strided_slice %32 {offsets = [0, 1], sizes = [32, 1], strides = [1, 1]} : vector<32x4xf32> to vector<32x1xf32>
    %631 = vector.extract_strided_slice %615 {offsets = [1, 0], sizes = [1, 256], strides = [1, 1]} : vector<4x256xf32> to vector<1x256xf32>
    %632 = vector.broadcast %630 : vector<32x1xf32> to vector<32x256xf32>
    %633 = arith.mulf %632, %629 : vector<32x256xf32>
    %634 = vector.broadcast %631 : vector<1x256xf32> to vector<32x256xf32>
    %635 = arith.mulf %634, %629 : vector<32x256xf32>
    %636 = arith.mulf %633, %635 : vector<32x256xf32>
    %c1_148 = arith.constant 1 : index
    %c0_149 = arith.constant 0 : index
    %c0_150 = arith.constant 0 : index
    %637 = vector.load %arg8[%c1_148, %c0_149, %c0_150] : memref<4x32x256xf32, #tpu.memory_space<vmem>>, vector<1x32x256xf32>
    %638 = vector.shape_cast %637 : vector<1x32x256xf32> to vector<32x256xf32>
    %639 = vector.shape_cast %636 : vector<32x256xf32> to vector<1x32x256xf32>
    tpu.vector_store %arg8[%c1_148, %c0_149, %c0_150], %639 {strides = array<i32>} : memref<4x32x256xf32, #tpu.memory_space<vmem>>, vector<1x32x256xf32>,
    %c2_151 = arith.constant 2 : index
    %c0_152 = arith.constant 0 : index
    %c0_153 = arith.constant 0 : index
    %640 = vector.load %arg1[%c2_151, %c0_152, %c0_153] : memref<4x32x256xf32, #tpu.memory_space<vmem>>, vector<1x32x256xf32>
    %641 = vector.shape_cast %640 : vector<1x32x256xf32> to vector<32x256xf32>
    %642 = vector.extract_strided_slice %32 {offsets = [0, 2], sizes = [32, 1], strides = [1, 1]} : vector<32x4xf32> to vector<32x1xf32>
    %643 = vector.extract_strided_slice %615 {offsets = [2, 0], sizes = [1, 256], strides = [1, 1]} : vector<4x256xf32> to vector<1x256xf32>
    %644 = vector.broadcast %642 : vector<32x1xf32> to vector<32x256xf32>
    %645 = arith.mulf %644, %641 : vector<32x256xf32>
    %646 = vector.broadcast %643 : vector<1x256xf32> to vector<32x256xf32>
    %647 = arith.mulf %646, %641 : vector<32x256xf32>
    %648 = arith.mulf %645, %647 : vector<32x256xf32>
    %c2_154 = arith.constant 2 : index
    %c0_155 = arith.constant 0 : index
    %c0_156 = arith.constant 0 : index
    %649 = vector.load %arg8[%c2_154, %c0_155, %c0_156] : memref<4x32x256xf32, #tpu.memory_space<vmem>>, vector<1x32x256xf32>
    %650 = vector.shape_cast %649 : vector<1x32x256xf32> to vector<32x256xf32>
    %651 = vector.shape_cast %648 : vector<32x256xf32> to vector<1x32x256xf32>
    tpu.vector_store %arg8[%c2_154, %c0_155, %c0_156], %651 {strides = array<i32>} : memref<4x32x256xf32, #tpu.memory_space<vmem>>, vector<1x32x256xf32>,
    %c3_157 = arith.constant 3 : index
    %c0_158 = arith.constant 0 : index
    %c0_159 = arith.constant 0 : index
    %652 = vector.load %arg1[%c3_157, %c0_158, %c0_159] : memref<4x32x256xf32, #tpu.memory_space<vmem>>, vector<1x32x256xf32>
    %653 = vector.shape_cast %652 : vector<1x32x256xf32> to vector<32x256xf32>
    %654 = vector.extract_strided_slice %32 {offsets = [0, 3], sizes = [32, 1], strides = [1, 1]} : vector<32x4xf32> to vector<32x1xf32>
    %655 = vector.extract_strided_slice %615 {offsets = [3, 0], sizes = [1, 256], strides = [1, 1]} : vector<4x256xf32> to vector<1x256xf32>
    %656 = vector.broadcast %654 : vector<32x1xf32> to vector<32x256xf32>
    %657 = arith.mulf %656, %653 : vector<32x256xf32>
    %658 = vector.broadcast %655 : vector<1x256xf32> to vector<32x256xf32>
    %659 = arith.mulf %658, %653 : vector<32x256xf32>
    %660 = arith.mulf %657, %659 : vector<32x256xf32>
    %c3_160 = arith.constant 3 : index
    %c0_161 = arith.constant 0 : index
    %c0_162 = arith.constant 0 : index
    %661 = vector.load %arg8[%c3_160, %c0_161, %c0_162] : memref<4x32x256xf32, #tpu.memory_space<vmem>>, vector<1x32x256xf32>
    %662 = vector.shape_cast %661 : vector<1x32x256xf32> to vector<32x256xf32>
    %663 = vector.shape_cast %660 : vector<32x256xf32> to vector<1x32x256xf32>
    tpu.vector_store %arg8[%c3_160, %c0_161, %c0_162], %663 {strides = array<i32>} : memref<4x32x256xf32, #tpu.memory_space<vmem>>, vector<1x32x256xf32>,
    return
  }
  func.func @transform_0(%arg0: i32) -> (i32, i32, i32) {
    %c0_i32 = arith.constant 0 : i32
    %c0_i32_0 = arith.constant 0 : i32
    %c0_i32_1 = arith.constant 0 : i32
    return %arg0, %c0_i32, %c0_i32_0 : i32, i32, i32
  }
  func.func @transform_1(%arg0: i32) -> (i32, i32) {
    %c0_i32 = arith.constant 0 : i32
    %c0_i32_0 = arith.constant 0 : i32
    %c0_i32_1 = arith.constant 0 : i32
    return %c0_i32, %c0_i32_0 : i32, i32
  }
  func.func @transform_2(%arg0: i32) -> (i32, i32) {
    %c0_i32 = arith.constant 0 : i32
    %c0_i32_0 = arith.constant 0 : i32
    %c0_i32_1 = arith.constant 0 : i32
    return %c0_i32, %c0_i32_0 : i32, i32
  }
  func.func @transform_3(%arg0: i32) -> (i32, i32) {
    %c0_i32 = arith.constant 0 : i32
    %c0_i32_0 = arith.constant 0 : i32
    %c0_i32_1 = arith.constant 0 : i32
    return %c0_i32, %c0_i32_0 : i32, i32
  }
  func.func @transform_4(%arg0: i32) -> (i32, i32) {
    %c0_i32 = arith.constant 0 : i32
    %c0_i32_0 = arith.constant 0 : i32
    %c0_i32_1 = arith.constant 0 : i32
    return %c0_i32, %c0_i32_0 : i32, i32
  }
  func.func @transform_5(%arg0: i32) -> i32 {
    %c0_i32 = arith.constant 0 : i32
    %c0_i32_0 = arith.constant 0 : i32
    return %c0_i32 : i32
  }
  func.func @transform_6(%arg0: i32) -> i32 {
    %c0_i32 = arith.constant 0 : i32
    %c0_i32_0 = arith.constant 0 : i32
    return %c0_i32 : i32
  }
  func.func @transform_7(%arg0: i32) -> (i32, i32, i32) {
    %c0_i32 = arith.constant 0 : i32
    %c0_i32_0 = arith.constant 0 : i32
    %c0_i32_1 = arith.constant 0 : i32
    return %arg0, %c0_i32, %c0_i32_0 : i32, i32, i32
  }
}

</mosaic_0001>

<llo_original>
// kernel: tpu_custom_call.1
$region0: #{tpu_custom_call.1}
  #allocation0 [shape = 'u32[]', space=smem, size = 0x4, offset = 0x4, fixed_abs, tag = 'smem constant byte address 0x4 - core index']
  #allocation1 [shape = 'u32[144,128]{1,0:T(1,128)}', space=vmem, size = 0x12000, scoped, tag = 'internal scratch']
  #allocation2 [shape = 'f32[8,512]{1,0:T(8,128)}', space=vmem, size = 0x4000, scoped, tag = 'scratch operand']
  #allocation3 [shape = 'f32[1]{0:T(128)S(6)}', space=smem, size = 0x200, scoped, tag = 'scoped memory for tpu_custom_call.1']
  %s0 = inlined_call_operand.hbm [shape: f32[16,32,256], index: 0, kind: input, shape index: {}]
  %s1 = inlined_call_operand.vmem [shape: f32[2,32], index: 1, kind: input, shape index: {}]
  %s2 = inlined_call_operand.vmem [shape: f32[2,1], index: 2, kind: input, shape index: {}]
  %s3 = inlined_call_operand.vmem [shape: f32[32,2], index: 3, kind: input, shape index: {}]
  %s4 = inlined_call_operand.vmem [shape: f32[32,1], index: 4, kind: input, shape index: {}]
  %s5 = inlined_call_operand.vmem [shape: f32[98], index: 5, kind: input, shape index: {}]
  %s6 = inlined_call_operand.<no memory space> [shape: f32[1], index: 6, kind: input, shape index: {}]
  %s7 = inlined_call_operand.hbm [shape: f32[16,32,256], index: 7, kind: output, shape index: {}]
  %s8 = sld [smem:[#allocation0]]
  $region69: #{tpu_custom_call.1} parent=0
    _
  %s10 = ssub.s32 1, %s8
  %s11 = scalar_select 0, %s10, %s8
  %12 = sst [smem:[#allocation3]] %s6
  $region1: #{tpu_custom_call.1} parent=0
    #allocation4 [shape = 'u8[262144]{0}', space=vmem, size = 0x40000, scoped, tag = 'input window, operand 0']
    #allocation5 [shape = 's32[2]{0}', space=sflag, size = 0x8, scoped, tag = 'scoped memory for tpu_custom_call.1']
    #allocation6 [shape = 's32[2]{0}', space=sflag, size = 0x8, scoped, tag = 'scoped memory for tpu_custom_call.1']
    #allocation7 [shape = 's32[2]{0}', space=sflag, size = 0x8, scoped, tag = 'scoped memory for tpu_custom_call.1']
    #allocation8 [shape = 'u8[512]{0}', space=smem, size = 0x200, scoped, tag = 'input window, operand 5, single buffered']
    #allocation9 [shape = 'u8[262144]{0}', space=vmem, size = 0x40000, scoped, tag = 'output window, operand 0']
    %13 = vsyncpa [#allocation5], 0
    %s14 = scalar_lea.sflag [#allocation5], 1
    %15 = vsyncpa %s14, 0
    %16 = vsyncpa [#allocation7], 0
    %17 = vsyncpa [#allocation6], 0
    %s18 = scalar_lea.sflag [#allocation6], 1
    %19 = vsyncpa %s18, 0
    loop: start=0, step=1, limit=6
    $region2: #{tpu_custom_call.1} parent=1 // loop_pre_header
      _
    $region3: #{tpu_custom_call.1} parent=1 // loop_header
      %s21 = sphi 0, %s25
      %p22 = scmp.ge.s32.totalorder %s21, 6
      %s31 = sphi 0, %s33
      %s34 = sphi 0, %s31
      %s35 = sphi 0, %s34
      %s51 = sphi 0, %s35
      %s55 = sphi 0, %s55
      %s57 = sphi 0, %s55
      %s58 = sphi 0, %s57
      %s72 = sphi 0, %s58
      %s76 = sphi 0, %s76
      %s78 = sphi 0, %s76
      %s79 = sphi 0, %s78
      %s93 = sphi 0, %s79
      %s97 = sphi 0, %s97
      %s99 = sphi 0, %s97
      %s100 = sphi 0, %s99
      %s114 = sphi 0, %s100
      %s118 = sphi 0, %s118
      %s120 = sphi 0, %s118
      %s121 = sphi 0, %s120
      %s135 = sphi 0, %s121
      %s139 = sphi 0, %s139
      %s141 = sphi 0, %s139
      %s142 = sphi 0, %s141
      %s156 = sphi 0, %s142
      %s160 = sphi 0, %s160
      %s162 = sphi 0, %s160
      %s163 = sphi 0, %s162
      %s177 = sphi 0, %s163
      %s183 = sphi 0, %s185
      %s186 = sphi 0, %s183
      %s187 = sphi 0, %s186
      %s203 = sphi 0, %s187
    $region4: #{tpu_custom_call.1} parent=1 // loop_header_branch
      %24 = sbr.rel (%p22) target = $region8
    $region5: #{tpu_custom_call.1} parent=1 // loop_body
      %s26 = ssub.s32 %s21, 1
      %s27 = ssub.s32 %s21, 2
      %s28 = sadd.s32 %s21, 1
      %s29 = ssub.s32 %s21, %s28
      %p30 = scmp.eq.s32.totalorder %s29, 0
      %s32 = sadd.s32 %s31, 1
      %s33 = scalar_select %p30, %s31, %s32
      %p36 = pneg %p30
      %p37 = scmp.eq.s32.totalorder %s21, 3
      %p38 = por %p36, %p37
      %p39 = scmp.ne.s32.totalorder %s31, %s34
      %p40 = scmp.eq.s32.totalorder %s21, 0
      %p41 = por %p39, %p40
      %p42 = scmp.ne.s32.totalorder %s31, %s34
      %p43 = scmp.eq.s32.totalorder %s26, 3
      %p44 = por %p42, %p43
      %p45 = scmp.ne.s32.totalorder %s34, %s35
      %p46 = scmp.eq.s32.totalorder %s26, 0
      %p47 = por %p45, %p46
      %p48 = scmp.ne.s32.totalorder %s34, %s35
      %p49 = scmp.eq.s32.totalorder %s27, 3
      %p50 = por %p48, %p49
      %p52 = scmp.ne.s32.totalorder %s35, %s51
      %p53 = scmp.eq.s32.totalorder %s27, 0
      %p54 = por %p52, %p53
      %s56 = sadd.s32 %s55, 1
      %p59 = scmp.eq.s32.totalorder %s21, 3
      %p60 = scmp.ne.s32.totalorder %s55, %s57
      %p61 = scmp.eq.s32.totalorder %s21, 0
      %p62 = por %p60, %p61
      %p63 = scmp.ne.s32.totalorder %s55, %s57
      %p64 = scmp.eq.s32.totalorder %s26, 3
      %p65 = por %p63, %p64
      %p66 = scmp.ne.s32.totalorder %s57, %s58
      %p67 = scmp.eq.s32.totalorder %s26, 0
      %p68 = por %p66, %p67
      %p69 = scmp.ne.s32.totalorder %s57, %s58
      %p70 = scmp.eq.s32.totalorder %s27, 3
      %p71 = por %p69, %p70
      %p73 = scmp.ne.s32.totalorder %s58, %s72
      %p74 = scmp.eq.s32.totalorder %s27, 0
      %p75 = por %p73, %p74
      %s77 = sadd.s32 %s76, 1
      %p80 = scmp.eq.s32.totalorder %s21, 3
      %p81 = scmp.ne.s32.totalorder %s76, %s78
      %p82 = scmp.eq.s32.totalorder %s21, 0
      %p83 = por %p81, %p82
      %p84 = scmp.ne.s32.totalorder %s76, %s78
      %p85 = scmp.eq.s32.totalorder %s26, 3
      %p86 = por %p84, %p85
      %p87 = scmp.ne.s32.totalorder %s78, %s79
      %p88 = scmp.eq.s32.totalorder %s26, 0
      %p89 = por %p87, %p88
      %p90 = scmp.ne.s32.totalorder %s78, %s79
      %p91 = scmp.eq.s32.totalorder %s27, 3
      %p92 = por %p90, %p91
      %p94 = scmp.ne.s32.totalorder %s79, %s93
      %p95 = scmp.eq.s32.totalorder %s27, 0
      %p96 = por %p94, %p95
      %s98 = sadd.s32 %s97, 1
      %p101 = scmp.eq.s32.totalorder %s21, 3
      %p102 = scmp.ne.s32.totalorder %s97, %s99
      %p103 = scmp.eq.s32.totalorder %s21, 0
      %p104 = por %p102, %p103
      %p105 = scmp.ne.s32.totalorder %s97, %s99
      %p106 = scmp.eq.s32.totalorder %s26, 3
      %p107 = por %p105, %p106
      %p108 = scmp.ne.s32.totalorder %s99, %s100
      %p109 = scmp.eq.s32.totalorder %s26, 0
      %p110 = por %p108, %p109
      %p111 = scmp.ne.s32.totalorder %s99, %s100
      %p112 = scmp.eq.s32.totalorder %s27, 3
      %p113 = por %p111, %p112
      %p115 = scmp.ne.s32.totalorder %s100, %s114
      %p116 = scmp.eq.s32.totalorder %s27, 0
      %p117 = por %p115, %p116
      %s119 = sadd.s32 %s118, 1
      %p122 = scmp.eq.s32.totalorder %s21, 3
      %p123 = scmp.ne.s32.totalorder %s118, %s120
      %p124 = scmp.eq.s32.totalorder %s21, 0
      %p125 = por %p123, %p124
      %p126 = scmp.ne.s32.totalorder %s118, %s120
      %p127 = scmp.eq.s32.totalorder %s26, 3
      %p128 = por %p126, %p127
      %p129 = scmp.ne.s32.totalorder %s120, %s121
      %p130 = scmp.eq.s32.totalorder %s26, 0
      %p131 = por %p129, %p130
      %p132 = scmp.ne.s32.totalorder %s120, %s121
      %p133 = scmp.eq.s32.totalorder %s27, 3
      %p134 = por %p132, %p133
      %p136 = scmp.ne.s32.totalorder %s121, %s135
      %p137 = scmp.eq.s32.totalorder %s27, 0
      %p138 = por %p136, %p137
      %s140 = sadd.s32 %s139, 1
      %p143 = scmp.eq.s32.totalorder %s21, 3
      %p144 = scmp.ne.s32.totalorder %s139, %s141
      %p145 = scmp.eq.s32.totalorder %s21, 0
      %p146 = por %p144, %p145
      %p147 = scmp.ne.s32.totalorder %s139, %s141
      %p148 = scmp.eq.s32.totalorder %s26, 3
      %p149 = por %p147, %p148
      %p150 = scmp.ne.s32.totalorder %s141, %s142
      %p151 = scmp.eq.s32.totalorder %s26, 0
      %p152 = por %p150, %p151
      %p153 = scmp.ne.s32.totalorder %s141, %s142
      %p154 = scmp.eq.s32.totalorder %s27, 3
      %p155 = por %p153, %p154
      %p157 = scmp.ne.s32.totalorder %s142, %s156
      %p158 = scmp.eq.s32.totalorder %s27, 0
      %p159 = por %p157, %p158
      %s161 = sadd.s32 %s160, 1
      %p164 = scmp.eq.s32.totalorder %s21, 3
      %p165 = scmp.ne.s32.totalorder %s160, %s162
      %p166 = scmp.eq.s32.totalorder %s21, 0
      %p167 = por %p165, %p166
      %p168 = scmp.ne.s32.totalorder %s160, %s162
      %p169 = scmp.eq.s32.totalorder %s26, 3
      %p170 = por %p168, %p169
      %p171 = scmp.ne.s32.totalorder %s162, %s163
      %p172 = scmp.eq.s32.totalorder %s26, 0
      %p173 = por %p171, %p172
      %p174 = scmp.ne.s32.totalorder %s162, %s163
      %p175 = scmp.eq.s32.totalorder %s27, 3
      %p176 = por %p174, %p175
      %p178 = scmp.ne.s32.totalorder %s163, %s177
      %p179 = scmp.eq.s32.totalorder %s27, 0
      %p180 = por %p178, %p179
      %s181 = ssub.s32 %s21, %s28
      %p182 = scmp.eq.s32.totalorder %s181, 0
      %s184 = sadd.s32 %s183, 1
      %s185 = scalar_select %p182, %s183, %s184
      %p188 = pneg %p182
      %p189 = scmp.eq.s32.totalorder %s21, 3
      %p190 = por %p188, %p189
      %p191 = scmp.ne.s32.totalorder %s183, %s186
      %p192 = scmp.eq.s32.totalorder %s21, 0
      %p193 = por %p191, %p192
      %p194 = scmp.ne.s32.totalorder %s183, %s186
      %p195 = scmp.eq.s32.totalorder %s26, 3
      %p196 = por %p194, %p195
      %p197 = scmp.ne.s32.totalorder %s186, %s187
      %p198 = scmp.eq.s32.totalorder %s26, 0
      %p199 = por %p197, %p198
      %p200 = scmp.ne.s32.totalorder %s186, %s187
      %p201 = scmp.eq.s32.totalorder %s27, 3
      %p202 = por %p200, %p201
      %p204 = scmp.ne.s32.totalorder %s187, %s203
      %p205 = scmp.eq.s32.totalorder %s27, 0
      %p206 = por %p204, %p205
      %p207 = scmp.le.s32.totalorder 1, %s21
      %p208 = scmp.lt.s32.totalorder %s21, 5
      %p209 = pnand %p207, %p208
      %p210 = pneg %p209
      // Predicated region
      $region9: #{tpu_custom_call.1} parent=5 // pred_check
        _
      $region10: #{tpu_custom_call.1} parent=5 // pred_check_branch
        %212 = sbr.rel (%p209) target = $region12
      $region11: #{tpu_custom_call.1} parent=5 // pred_region
        %s213 = ssub.s32 %s21, 1
        // Predicated region
        $region13: #{tpu_custom_call.1} parent=11 // pred_check
          %p214 = pneg %p68
        $region14: #{tpu_custom_call.1} parent=11 // pred_check_branch
          %216 = sbr.rel (%p214) target = $region16
        $region15: #{tpu_custom_call.1} parent=11 // pred_region
          _
        $region16: #{tpu_custom_call.1} parent=11 // pred_fallthru
          _
        // Predicated region
        $region17: #{tpu_custom_call.1} parent=11 // pred_check
          %p217 = pneg %p89
        $region18: #{tpu_custom_call.1} parent=11 // pred_check_branch
          %219 = sbr.rel (%p217) target = $region20
        $region19: #{tpu_custom_call.1} parent=11 // pred_region
          _
        $region20: #{tpu_custom_call.1} parent=11 // pred_fallthru
          _
        // Predicated region
        $region21: #{tpu_custom_call.1} parent=11 // pred_check
          %p220 = pneg %p110
        $region22: #{tpu_custom_call.1} parent=11 // pred_check_branch
          %222 = sbr.rel (%p220) target = $region24
        $region23: #{tpu_custom_call.1} parent=11 // pred_region
          _
        $region24: #{tpu_custom_call.1} parent=11 // pred_fallthru
          _
        // Predicated region
        $region25: #{tpu_custom_call.1} parent=11 // pred_check
          %p223 = pneg %p131
        $region26: #{tpu_custom_call.1} parent=11 // pred_check_branch
          %225 = sbr.rel (%p223) target = $region28
        $region27: #{tpu_custom_call.1} parent=11 // pred_region
          _
        $region28: #{tpu_custom_call.1} parent=11 // pred_fallthru
          _
        // Predicated region
        $region29: #{tpu_custom_call.1} parent=11 // pred_check
          %p226 = pneg %p152
        $region30: #{tpu_custom_call.1} parent=11 // pred_check_branch
          %228 = sbr.rel (%p226) target = $region32
        $region31: #{tpu_custom_call.1} parent=11 // pred_region
          %s230 = ssub.s32 16, 16
          %231 = vsyncadd [#allocation7], %s230
          %s233 = sshll.u32 %s5, 4
          %s234 = int_to_ptr.vmem [resolvable:$true] %s233
          %236 = dma.vmem_to_smem %s234, 16, [#allocation8], [#allocation7]
        $region32: #{tpu_custom_call.1} parent=11 // pred_fallthru
          _
        // Predicated region
        $region33: #{tpu_custom_call.1} parent=11 // pred_check
          %p237 = pneg %p173
        $region34: #{tpu_custom_call.1} parent=11 // pred_check_branch
          %239 = sbr.rel (%p237) target = $region36
        $region35: #{tpu_custom_call.1} parent=11 // pred_region
          _
        $region36: #{tpu_custom_call.1} parent=11 // pred_fallthru
          _
      $region12: #{tpu_custom_call.1} parent=5 // pred_fallthru
        _
      %p240 = scmp.lt.s32.totalorder %s21, 4
      // Predicated region
      $region37: #{tpu_custom_call.1} parent=5 // pred_check
        %p241 = pneg %p240
      $region38: #{tpu_custom_call.1} parent=5 // pred_check_branch
        %243 = sbr.rel (%p241) target = $region40
      $region39: #{tpu_custom_call.1} parent=5 // pred_region
        // Predicated region
        $region41: #{tpu_custom_call.1} parent=39 // pred_check
          %p244 = pneg %p41
        $region42: #{tpu_custom_call.1} parent=39 // pred_check_branch
          %246 = sbr.rel (%p244) target = $region44
        $region43: #{tpu_custom_call.1} parent=39 // pred_region
          %s247 = sand.u32 %s31, 1
          %s248 = scalar_lea.sflag [#allocation5], %s247
          %s249 = sand.u32 %s31, 1
          %s250 = smul.addr %s249, 256
          %s251 = scalar_lea.vmem [#allocation4], %s250
          %s252 = smul.u32 4, %s21
          %s254 = ssub.s32 4096, 4096
          %255 = vsyncadd %s248, %s254
          %s256 = smul.addr %s252, 8
          %s257 = smul.addr %s256, 128
          %s258 = scalar_lea.hbm %s0, %s257
          %s259 = sshll.u32 %s251, 4
          %s260 = int_to_ptr.vmem [resolvable:$true] %s259
          %265 = dma.hbm_to_vmem [thread:$0]  %s258, 4096, %s260, %s248, 256, 256, 16
        $region44: #{tpu_custom_call.1} parent=39 // pred_fallthru
          _
      $region40: #{tpu_custom_call.1} parent=5 // pred_fallthru
        _
      %p266 = scmp.le.s32.totalorder 1, %s21
      %p267 = scmp.lt.s32.totalorder %s21, 5
      %p268 = pnand %p266, %p267
      %p269 = pneg %p268
      // Predicated region
      $region45: #{tpu_custom_call.1} parent=5 // pred_check
        _
      $region46: #{tpu_custom_call.1} parent=5 // pred_check_branch
        %271 = sbr.rel (%p268) target = $region48
      $region47: #{tpu_custom_call.1} parent=5 // pred_region
        %s272 = ssub.s32 %s21, 1
        %s273 = sand.u32 %s34, 1
        %s274 = scalar_lea.sflag [#allocation5], %s273
        %s275 = sand.u32 %s34, 1
        %s276 = smul.addr %s275, 256
        %s277 = scalar_lea.vmem [#allocation4], %s276
        // Predicated region
        $region49: #{tpu_custom_call.1} parent=47 // pred_check
          %p278 = pneg %p47
        $region50: #{tpu_custom_call.1} parent=47 // pred_check_branch
          %280 = sbr.rel (%p278) target = $region52
        $region51: #{tpu_custom_call.1} parent=47 // pred_region
          %281 = dma.done %s274, 4096
        $region52: #{tpu_custom_call.1} parent=47 // pred_fallthru
          _
        // Predicated region
        $region53: #{tpu_custom_call.1} parent=47 // pred_check
          %p282 = pneg %p152
        $region54: #{tpu_custom_call.1} parent=47 // pred_check_branch
          %284 = sbr.rel (%p282) target = $region56
        $region55: #{tpu_custom_call.1} parent=47 // pred_region
          %285 = dma.done [#allocation7], 16
        $region56: #{tpu_custom_call.1} parent=47 // pred_fallthru
          _
        %286 = sfence
        %s287 = sand.u32 %s34, 1
        %s288 = scalar_lea.sflag [#allocation5], %s287
        %s289 = sand.u32 %s34, 1
        %s290 = smul.addr %s289, 256
        %s291 = scalar_lea.vmem [#allocation4], %s290
        %p292 = pneg %p47
        %p293 = pneg %p44
        %p294 = pneg %p68
        %p295 = pneg %p65
        %p296 = pneg %p89
        %p297 = pneg %p86
        %p298 = pneg %p110
        %p299 = pneg %p107
        %p300 = pneg %p131
        %p301 = pneg %p128
        %p302 = pneg %p152
        %p303 = pneg %p149
        %p304 = pneg %p173
        %p305 = pneg %p170
        %p306 = pneg %p199
        %p307 = pneg %p196
        %s308 = sand.u32 %s186, 1
        %s309 = scalar_lea.sflag [#allocation6], %s308
        %s310 = sand.u32 %s186, 1
        %s311 = smul.addr %s310, 256
        %s312 = scalar_lea.vmem [#allocation9], %s311
        %s313 = smul.u32 4, %s26
        %s314 = smul.u32 4, %s26
        %v315 = vld [vmem:[%s277] sm:$0xff]
        %v316 = vld [vmem:[%s277 + $0x8] sm:$0xff]
        %v317 = vld [vmem:[%s277 + $0x10] sm:$0xff]
        %v318 = vld [vmem:[%s277 + $0x18] sm:$0xff]
        %v319 = vld [vmem:[%s277 + $0x20] sm:$0xff]
        %v320 = vld [vmem:[%s277 + $0x28] sm:$0xff]
        %v321 = vld [vmem:[%s277 + $0x30] sm:$0xff]
        %v322 = vld [vmem:[%s277 + $0x38] sm:$0xff]
        %v323 = vld [vmem:[%s277 + $0x40] sm:$0xff]
        %v324 = vld [vmem:[%s277 + $0x48] sm:$0xff]
        %v325 = vld [vmem:[%s277 + $0x50] sm:$0xff]
        %v326 = vld [vmem:[%s277 + $0x58] sm:$0xff]
        %v327 = vld [vmem:[%s277 + $0x60] sm:$0xff]
        %v328 = vld [vmem:[%s277 + $0x68] sm:$0xff]
        %v329 = vld [vmem:[%s277 + $0x70] sm:$0xff]
        %v330 = vld [vmem:[%s277 + $0x78] sm:$0xff]
        %v331 = vld [vmem:[%s277 + $0x80] sm:$0xff]
        %v332 = vld [vmem:[%s277 + $0x88] sm:$0xff]
        %v333 = vld [vmem:[%s277 + $0x90] sm:$0xff]
        %v334 = vld [vmem:[%s277 + $0x98] sm:$0xff]
        %v335 = vld [vmem:[%s277 + $0xa0] sm:$0xff]
        %v336 = vld [vmem:[%s277 + $0xa8] sm:$0xff]
        %v337 = vld [vmem:[%s277 + $0xb0] sm:$0xff]
        %v338 = vld [vmem:[%s277 + $0xb8] sm:$0xff]
        %v339 = vld [vmem:[%s277 + $0xc0] sm:$0xff]
        %v340 = vld [vmem:[%s277 + $0xc8] sm:$0xff]
        %v341 = vld [vmem:[%s277 + $0xd0] sm:$0xff]
        %v342 = vld [vmem:[%s277 + $0xd8] sm:$0xff]
        %v343 = vld [vmem:[%s277 + $0xe0] sm:$0xff]
        %v344 = vld [vmem:[%s277 + $0xe8] sm:$0xff]
        %v345 = vld [vmem:[%s277 + $0xf0] sm:$0xff]
        %v346 = vld [vmem:[%s277 + $0xf8] sm:$0xff]
        %v347 = vadd.f32 %v315, %v316
        %348 = vadd.xlane.f32.xlu0 %v347
        %v349 = vpop.xlane.xlu0 %348
        %v350 = vadd.f32 %v317, %v318
        %351 = vadd.xlane.f32.xlu0 %v350
        %v352 = vpop.xlane.xlu0 %351
        %v353 = vadd.f32 %v319, %v320
        %354 = vadd.xlane.f32.xlu0 %v353
        %v355 = vpop.xlane.xlu0 %354
        %v356 = vadd.f32 %v321, %v322
        %357 = vadd.xlane.f32.xlu0 %v356
        %v358 = vpop.xlane.xlu0 %357
        %v359 = vadd.f32 %v323, %v324
        %360 = vadd.xlane.f32.xlu0 %v359
        %v361 = vpop.xlane.xlu0 %360
        %v362 = vadd.f32 %v325, %v326
        %363 = vadd.xlane.f32.xlu0 %v362
        %v364 = vpop.xlane.xlu0 %363
        %v365 = vadd.f32 %v327, %v328
        %366 = vadd.xlane.f32.xlu0 %v365
        %v367 = vpop.xlane.xlu0 %366
        %v368 = vadd.f32 %v329, %v330
        %369 = vadd.xlane.f32.xlu0 %v368
        %v370 = vpop.xlane.xlu0 %369
        %v371 = vadd.f32 %v331, %v332
        %372 = vadd.xlane.f32.xlu0 %v371
        %v373 = vpop.xlane.xlu0 %372
        %v374 = vadd.f32 %v333, %v334
        %375 = vadd.xlane.f32.xlu0 %v374
        %v376 = vpop.xlane.xlu0 %375
        %v377 = vadd.f32 %v335, %v336
        %378 = vadd.xlane.f32.xlu0 %v377
        %v379 = vpop.xlane.xlu0 %378
        %v380 = vadd.f32 %v337, %v338
        %381 = vadd.xlane.f32.xlu0 %v380
        %v382 = vpop.xlane.xlu0 %381
        %v383 = vadd.f32 %v339, %v340
        %384 = vadd.xlane.f32.xlu0 %v383
        %v385 = vpop.xlane.xlu0 %384
        %v386 = vadd.f32 %v341, %v342
        %387 = vadd.xlane.f32.xlu0 %v386
        %v388 = vpop.xlane.xlu0 %387
        %v389 = vadd.f32 %v343, %v344
        %390 = vadd.xlane.f32.xlu0 %v389
        %v391 = vpop.xlane.xlu0 %390
        %v392 = vadd.f32 %v345, %v346
        %393 = vadd.xlane.f32.xlu0 %v392
        %v394 = vpop.xlane.xlu0 %393
        %v395 = vmul.f32 %v349, 0.00390625
        %v396 = vmul.f32 %v352, 0.00390625
        %v397 = vmul.f32 %v355, 0.00390625
        %v398 = vmul.f32 %v358, 0.00390625
        %v399 = vmul.f32 %v361, 0.00390625
        %v400 = vmul.f32 %v364, 0.00390625
        %v401 = vmul.f32 %v367, 0.00390625
        %v402 = vmul.f32 %v370, 0.00390625
        %v403 = vmul.f32 %v373, 0.00390625
        %v404 = vmul.f32 %v376, 0.00390625
        %v405 = vmul.f32 %v379, 0.00390625
        %v406 = vmul.f32 %v382, 0.00390625
        %v407 = vmul.f32 %v385, 0.00390625
        %v408 = vmul.f32 %v388, 0.00390625
        %v409 = vmul.f32 %v391, 0.00390625
        %v410 = vmul.f32 %v394, 0.00390625
        %v411 = vmax.f32 %v315, %v316
        %412 = vmax.xlane.f32.xlu0 %v411
        %v413 = vpop.xlane.xlu0 %412
        %v414 = vmax.f32 %v317, %v318
        %415 = vmax.xlane.f32.xlu0 %v414
        %v416 = vpop.xlane.xlu0 %415
        %v417 = vmax.f32 %v319, %v320
        %418 = vmax.xlane.f32.xlu0 %v417
        %v419 = vpop.xlane.xlu0 %418
        %v420 = vmax.f32 %v321, %v322
        %421 = vmax.xlane.f32.xlu0 %v420
        %v422 = vpop.xlane.xlu0 %421
        %v423 = vmax.f32 %v323, %v324
        %424 = vmax.xlane.f32.xlu0 %v423
        %v425 = vpop.xlane.xlu0 %424
        %v426 = vmax.f32 %v325, %v326
        %427 = vmax.xlane.f32.xlu0 %v426
        %v428 = vpop.xlane.xlu0 %427
        %v429 = vmax.f32 %v327, %v328
        %430 = vmax.xlane.f32.xlu0 %v429
        %v431 = vpop.xlane.xlu0 %430
        %v432 = vmax.f32 %v329, %v330
        %433 = vmax.xlane.f32.xlu0 %v432
        %v434 = vpop.xlane.xlu0 %433
        %v435 = vmax.f32 %v331, %v332
        %436 = vmax.xlane.f32.xlu0 %v435
        %v437 = vpop.xlane.xlu0 %436
        %v438 = vmax.f32 %v333, %v334
        %439 = vmax.xlane.f32.xlu0 %v438
        %v440 = vpop.xlane.xlu0 %439
        %v441 = vmax.f32 %v335, %v336
        %442 = vmax.xlane.f32.xlu0 %v441
        %v443 = vpop.xlane.xlu0 %442
        %v444 = vmax.f32 %v337, %v338
        %445 = vmax.xlane.f32.xlu0 %v444
        %v446 = vpop.xlane.xlu0 %445
        %v447 = vmax.f32 %v339, %v340
        %448 = vmax.xlane.f32.xlu0 %v447
        %v449 = vpop.xlane.xlu0 %448
        %v450 = vmax.f32 %v341, %v342
        %451 = vmax.xlane.f32.xlu0 %v450
        %v452 = vpop.xlane.xlu0 %451
        %v453 = vmax.f32 %v343, %v344
        %454 = vmax.xlane.f32.xlu0 %v453
        %v455 = vpop.xlane.xlu0 %454
        %v456 = vmax.f32 %v345, %v346
        %457 = vmax.xlane.f32.xlu0 %v456
        %v458 = vpop.xlane.xlu0 %457
        %v459 = vadd.f32 %v315, %v317
        %v460 = vadd.f32 %v459, %v319
        %v461 = vadd.f32 %v460, %v321
        %v462 = vrot.slane %v461, 4
        %v463 = vadd.f32 %v461, %v462
        %v464 = vrot.slane %v463, 2
        %v465 = vadd.f32 %v463, %v464
        %v466 = vrot.slane %v465, 1
        %v467 = vadd.f32 %v465, %v466
        %v468 = vadd.f32 %v316, %v318
        %v469 = vadd.f32 %v468, %v320
        %v470 = vadd.f32 %v469, %v322
        %v471 = vrot.slane %v470, 4
        %v472 = vadd.f32 %v470, %v471
        %v473 = vrot.slane %v472, 2
        %v474 = vadd.f32 %v472, %v473
        %v475 = vrot.slane %v474, 1
        %v476 = vadd.f32 %v474, %v475
        %v477 = vadd.f32 %v323, %v325
        %v478 = vadd.f32 %v477, %v327
        %v479 = vadd.f32 %v478, %v329
        %v480 = vrot.slane %v479, 4
        %v481 = vadd.f32 %v479, %v480
        %v482 = vrot.slane %v481, 2
        %v483 = vadd.f32 %v481, %v482
        %v484 = vrot.slane %v483, 1
        %v485 = vadd.f32 %v483, %v484
        %v486 = vadd.f32 %v324, %v326
        %v487 = vadd.f32 %v486, %v328
        %v488 = vadd.f32 %v487, %v330
        %v489 = vrot.slane %v488, 4
        %v490 = vadd.f32 %v488, %v489
        %v491 = vrot.slane %v490, 2
        %v492 = vadd.f32 %v490, %v491
        %v493 = vrot.slane %v492, 1
        %v494 = vadd.f32 %v492, %v493
        %v495 = vadd.f32 %v331, %v333
        %v496 = vadd.f32 %v495, %v335
        %v497 = vadd.f32 %v496, %v337
        %v498 = vrot.slane %v497, 4
        %v499 = vadd.f32 %v497, %v498
        %v500 = vrot.slane %v499, 2
        %v501 = vadd.f32 %v499, %v500
        %v502 = vrot.slane %v501, 1
        %v503 = vadd.f32 %v501, %v502
        %v504 = vadd.f32 %v332, %v334
        %v505 = vadd.f32 %v504, %v336
        %v506 = vadd.f32 %v505, %v338
        %v507 = vrot.slane %v506, 4
        %v508 = vadd.f32 %v506, %v507
        %v509 = vrot.slane %v508, 2
        %v510 = vadd.f32 %v508, %v509
        %v511 = vrot.slane %v510, 1
        %v512 = vadd.f32 %v510, %v511
        %v513 = vadd.f32 %v339, %v341
        %v514 = vadd.f32 %v513, %v343
        %v515 = vadd.f32 %v514, %v345
        %v516 = vrot.slane %v515, 4
        %v517 = vadd.f32 %v515, %v516
        %v518 = vrot.slane %v517, 2
        %v519 = vadd.f32 %v517, %v518
        %v520 = vrot.slane %v519, 1
        %v521 = vadd.f32 %v519, %v520
        %v522 = vadd.f32 %v340, %v342
        %v523 = vadd.f32 %v522, %v344
        %v524 = vadd.f32 %v523, %v346
        %v525 = vrot.slane %v524, 4
        %v526 = vadd.f32 %v524, %v525
        %v527 = vrot.slane %v526, 2
        %v528 = vadd.f32 %v526, %v527
        %v529 = vrot.slane %v528, 1
        %v530 = vadd.f32 %v528, %v529
        %v531 = vrcp.pop 32.0
        %v532 = vmul.f32 %v467, %v531
        %v533 = vmul.f32 %v476, %v531
        %v534 = vmul.f32 %v485, %v531
        %v535 = vmul.f32 %v494, %v531
        %v536 = vmul.f32 %v503, %v531
        %v537 = vmul.f32 %v512, %v531
        %v538 = vmul.f32 %v521, %v531
        %v539 = vmul.f32 %v530, %v531
        %v540 = vmax.f32 %v315, %v317
        %v541 = vmax.f32 %v540, %v319
        %v542 = vmax.f32 %v541, %v321
        %v543 = vrot.slane %v542, 4
        %v544 = vmax.f32 %v542, %v543
        %v545 = vrot.slane %v544, 2
        %v546 = vmax.f32 %v544, %v545
        %v547 = vrot.slane %v546, 1
        %v548 = vmax.f32 %v546, %v547
        %v549 = vmax.f32 %v316, %v318
        %v550 = vmax.f32 %v549, %v320
        %v551 = vmax.f32 %v550, %v322
        %v552 = vrot.slane %v551, 4
        %v553 = vmax.f32 %v551, %v552
        %v554 = vrot.slane %v553, 2
        %v555 = vmax.f32 %v553, %v554
        %v556 = vrot.slane %v555, 1
        %v557 = vmax.f32 %v555, %v556
        %v558 = vmax.f32 %v323, %v325
        %v559 = vmax.f32 %v558, %v327
        %v560 = vmax.f32 %v559, %v329
        %v561 = vrot.slane %v560, 4
        %v562 = vmax.f32 %v560, %v561
        %v563 = vrot.slane %v562, 2
        %v564 = vmax.f32 %v562, %v563
        %v565 = vrot.slane %v564, 1
        %v566 = vmax.f32 %v564, %v565
        %v567 = vmax.f32 %v324, %v326
        %v568 = vmax.f32 %v567, %v328
        %v569 = vmax.f32 %v568, %v330
        %v570 = vrot.slane %v569, 4
        %v571 = vmax.f32 %v569, %v570
        %v572 = vrot.slane %v571, 2
        %v573 = vmax.f32 %v571, %v572
        %v574 = vrot.slane %v573, 1
        %v575 = vmax.f32 %v573, %v574
        %v576 = vmax.f32 %v331, %v333
        %v577 = vmax.f32 %v576, %v335
        %v578 = vmax.f32 %v577, %v337
        %v579 = vrot.slane %v578, 4
        %v580 = vmax.f32 %v578, %v579
        %v581 = vrot.slane %v580, 2
        %v582 = vmax.f32 %v580, %v581
        %v583 = vrot.slane %v582, 1
        %v584 = vmax.f32 %v582, %v583
        %v585 = vmax.f32 %v332, %v334
        %v586 = vmax.f32 %v585, %v336
        %v587 = vmax.f32 %v586, %v338
        %v588 = vrot.slane %v587, 4
        %v589 = vmax.f32 %v587, %v588
        %v590 = vrot.slane %v589, 2
        %v591 = vmax.f32 %v589, %v590
        %v592 = vrot.slane %v591, 1
        %v593 = vmax.f32 %v591, %v592
        %v594 = vmax.f32 %v339, %v341
        %v595 = vmax.f32 %v594, %v343
        %v596 = vmax.f32 %v595, %v345
        %v597 = vrot.slane %v596, 4
        %v598 = vmax.f32 %v596, %v597
        %v599 = vrot.slane %v598, 2
        %v600 = vmax.f32 %v598, %v599
        %v601 = vrot.slane %v600, 1
        %v602 = vmax.f32 %v600, %v601
        %v603 = vmax.f32 %v340, %v342
        %v604 = vmax.f32 %v603, %v344
        %v605 = vmax.f32 %v604, %v346
        %v606 = vrot.slane %v605, 4
        %v607 = vmax.f32 %v605, %v606
        %v608 = vrot.slane %v607, 2
        %v609 = vmax.f32 %v607, %v608
        %v610 = vrot.slane %v609, 1
        %v611 = vmax.f32 %v609, %v610
        %v628 = vlaneseq
        %v629 = vand.u32 %v628, 127
        %v630 = vlaneseq
        %v631 = vshrl.u32 %v630, 7
        %v632 = vsub.s32 %v629, %v631
        %v633 = vrot.slane %v395, %v632
        %v634 = vadd.s32 %v629, 4294967288
        %v635 = vlaneseq
        %v636 = vshrl.u32 %v635, 7
        %v637 = vsub.s32 %v634, %v636
        %v638 = vrot.slane %v396, %v637
        %vm639 = vcmask 130112
        %v640 = vsel %vm639, %v638, %v633
        %v641 = vadd.s32 %v629, 4294967280
        %v642 = vlaneseq
        %v643 = vshrl.u32 %v642, 7
        %v644 = vsub.s32 %v641, %v643
        %v645 = vrot.slane %v397, %v644
        %vm646 = vcmask 195712
        %v647 = vsel %vm646, %v645, %v640
        %v648 = vadd.s32 %v629, 4294967272
        %v649 = vlaneseq
        %v650 = vshrl.u32 %v649, 7
        %v651 = vsub.s32 %v648, %v650
        %v652 = vrot.slane %v398, %v651
        %vm653 = vcmask 261312
        %v654 = vsel %vm653, %v652, %v647
        %v655 = vlaneseq
        %v656 = vshrl.u32 %v655, 7
        %v657 = vsub.s32 %v629, %v656
        %v658 = vrot.slane %v399, %v657
        %v659 = vlaneseq
        %v660 = vshrl.u32 %v659, 7
        %v661 = vsub.s32 %v634, %v660
        %v662 = vrot.slane %v400, %v661
        %v663 = vsel %vm639, %v662, %v658
        %v664 = vlaneseq
        %v665 = vshrl.u32 %v664, 7
        %v666 = vsub.s32 %v641, %v665
        %v667 = vrot.slane %v401, %v666
        %v668 = vsel %vm646, %v667, %v663
        %v669 = vlaneseq
        %v670 = vshrl.u32 %v669, 7
        %v671 = vsub.s32 %v648, %v670
        %v672 = vrot.slane %v402, %v671
        %v673 = vsel %vm653, %v672, %v668
        %v674 = vlaneseq
        %v675 = vshrl.u32 %v674, 7
        %v676 = vsub.s32 %v629, %v675
        %v677 = vrot.slane %v403, %v676
        %v678 = vlaneseq
        %v679 = vshrl.u32 %v678, 7
        %v680 = vsub.s32 %v634, %v679
        %v681 = vrot.slane %v404, %v680
        %v682 = vsel %vm639, %v681, %v677
        %v683 = vlaneseq
        %v684 = vshrl.u32 %v683, 7
        %v685 = vsub.s32 %v641, %v684
        %v686 = vrot.slane %v405, %v685
        %v687 = vsel %vm646, %v686, %v682
        %v688 = vlaneseq
        %v689 = vshrl.u32 %v688, 7
        %v690 = vsub.s32 %v648, %v689
        %v691 = vrot.slane %v406, %v690
        %v692 = vsel %vm653, %v691, %v687
        %v693 = vlaneseq
        %v694 = vshrl.u32 %v693, 7
        %v695 = vsub.s32 %v629, %v694
        %v696 = vrot.slane %v407, %v695
        %v697 = vlaneseq
        %v698 = vshrl.u32 %v697, 7
        %v699 = vsub.s32 %v634, %v698
        %v700 = vrot.slane %v408, %v699
        %v701 = vsel %vm639, %v700, %v696
        %v702 = vlaneseq
        %v703 = vshrl.u32 %v702, 7
        %v704 = vsub.s32 %v641, %v703
        %v705 = vrot.slane %v409, %v704
        %v706 = vsel %vm646, %v705, %v701
        %v707 = vlaneseq
        %v708 = vshrl.u32 %v707, 7
        %v709 = vsub.s32 %v648, %v708
        %v710 = vrot.slane %v410, %v709
        %v711 = vsel %vm653, %v710, %v706
        %vm712 = vcmask 1041409
        %v713 = vsel %vm712, %v673, %v654
        %vm714 = vcmask 1042434
        %v715 = vsel %vm714, %v692, %v713
        %vm716 = vcmask 1043459
        %v717 = vsel %vm716, %v711, %v715
        %v735 = vlaneseq
        %v736 = vshrl.u32 %v735, 7
        %v737 = vsub.s32 %v629, %v736
        %v738 = vrot.slane %v413, %v737
        %v739 = vlaneseq
        %v740 = vshrl.u32 %v739, 7
        %v741 = vsub.s32 %v634, %v740
        %v742 = vrot.slane %v416, %v741
        %v743 = vsel %vm639, %v742, %v738
        %v744 = vlaneseq
        %v745 = vshrl.u32 %v744, 7
        %v746 = vsub.s32 %v641, %v745
        %v747 = vrot.slane %v419, %v746
        %v748 = vsel %vm646, %v747, %v743
        %v749 = vlaneseq
        %v750 = vshrl.u32 %v749, 7
        %v751 = vsub.s32 %v648, %v750
        %v752 = vrot.slane %v422, %v751
        %v753 = vsel %vm653, %v752, %v748
        %v754 = vlaneseq
        %v755 = vshrl.u32 %v754, 7
        %v756 = vsub.s32 %v629, %v755
        %v757 = vrot.slane %v425, %v756
        %v758 = vlaneseq
        %v759 = vshrl.u32 %v758, 7
        %v760 = vsub.s32 %v634, %v759
        %v761 = vrot.slane %v428, %v760
        %v762 = vsel %vm639, %v761, %v757
        %v763 = vlaneseq
        %v764 = vshrl.u32 %v763, 7
        %v765 = vsub.s32 %v641, %v764
        %v766 = vrot.slane %v431, %v765
        %v767 = vsel %vm646, %v766, %v762
        %v768 = vlaneseq
        %v769 = vshrl.u32 %v768, 7
        %v770 = vsub.s32 %v648, %v769
        %v771 = vrot.slane %v434, %v770
        %v772 = vsel %vm653, %v771, %v767
        %v773 = vlaneseq
        %v774 = vshrl.u32 %v773, 7
        %v775 = vsub.s32 %v629, %v774
        %v776 = vrot.slane %v437, %v775
        %v777 = vlaneseq
        %v778 = vshrl.u32 %v777, 7
        %v779 = vsub.s32 %v634, %v778
        %v780 = vrot.slane %v440, %v779
        %v781 = vsel %vm639, %v780, %v776
        %v782 = vlaneseq
        %v783 = vshrl.u32 %v782, 7
        %v784 = vsub.s32 %v641, %v783
        %v785 = vrot.slane %v443, %v784
        %v786 = vsel %vm646, %v785, %v781
        %v787 = vlaneseq
        %v788 = vshrl.u32 %v787, 7
        %v789 = vsub.s32 %v648, %v788
        %v790 = vrot.slane %v446, %v789
        %v791 = vsel %vm653, %v790, %v786
        %v792 = vlaneseq
        %v793 = vshrl.u32 %v792, 7
        %v794 = vsub.s32 %v629, %v793
        %v795 = vrot.slane %v449, %v794
        %v796 = vlaneseq
        %v797 = vshrl.u32 %v796, 7
        %v798 = vsub.s32 %v634, %v797
        %v799 = vrot.slane %v452, %v798
        %v800 = vsel %vm639, %v799, %v795
        %v801 = vlaneseq
        %v802 = vshrl.u32 %v801, 7
        %v803 = vsub.s32 %v641, %v802
        %v804 = vrot.slane %v455, %v803
        %v805 = vsel %vm646, %v804, %v800
        %v806 = vlaneseq
        %v807 = vshrl.u32 %v806, 7
        %v808 = vsub.s32 %v648, %v807
        %v809 = vrot.slane %v458, %v808
        %v810 = vsel %vm653, %v809, %v805
        %vm811 = vcmask 1045509
        %v812 = vsel %vm811, %v772, %v753
        %vm813 = vcmask 1046534
        %v814 = vsel %vm813, %v791, %v812
        %vm815 = vcmask 1047559
        %v816 = vsel %vm815, %v810, %v814
        %vm818 = vcmask 1043456
        %v819 = vsel %vm818, %v717, %v816
        %v820 = vld [vmem:[%s1] sm:$0x3]
        %v821 = vld [vmem:[%s2] sm:$0x3]
        %823 = vset.pattern.permute.xlu0 0
        %824 = vperm.xlu0 %823, %v821
        %v825 = vpop.permute.xlu0 %824
        %vm827 = vcmask 261120
        %v829 = vsel %vm827, %v820, 0
        %v832 = vsel %vm827, %v819, 0
        %834 = vmatprep.subr.mxu0 0.0
        %835 = vmatpush1.xpose.msra.mxu0 %v832
        %836 = vmatprep.subr.mxu0 0.0
        %837 = vmatpush1.xpose.msra.mxu0 0.0
        %838 = vmatprep.subr.mxu0 0.0
        %839 = vmatpush1.xpose.msra.mxu0 0.0
        %840 = vmatprep.subr.mxu0 0.0
        %841 = vmatpush1.xpose.msra.mxu0 0.0
        %842 = vmatprep.subr.mxu0 0.0
        %843 = vmatpush1.xpose.msra.mxu0 0.0
        %844 = vmatprep.subr.mxu0 0.0
        %845 = vmatpush1.xpose.msra.mxu0 0.0
        %846 = vmatprep.subr.mxu0 0.0
        %847 = vmatpush1.xpose.msra.mxu0 0.0
        %848 = vmatprep.subr.mxu0 0.0
        %849 = vmatpush1.xpose.msra.mxu0 0.0
        %850 = vmatprep.subr.mxu0 0.0
        %851 = vmatpush1.xpose.msra.mxu0 0.0
        %852 = vmatprep.subr.mxu0 0.0
        %853 = vmatpush1.xpose.msra.mxu0 0.0
        %854 = vmatprep.subr.mxu0 0.0
        %855 = vmatpush1.xpose.msra.mxu0 0.0
        %856 = vmatprep.subr.mxu0 0.0
        %857 = vmatpush1.xpose.msra.mxu0 0.0
        %858 = vmatprep.subr.mxu0 0.0
        %859 = vmatpush1.xpose.msra.mxu0 0.0
        %860 = vmatprep.subr.mxu0 0.0
        %861 = vmatpush1.xpose.msra.mxu0 0.0
        %862 = vmatprep.subr.mxu0 0.0
        %863 = vmatpush1.xpose.msra.mxu0 0.0
        %864 = vmatprep.subr.mxu0 0.0
        %865 = vmatpush1.xpose.msra.mxu0 0.0
        %866 = vmatprep.subr.mxu0 0.0
        %867 = vmatpush1.xpose.msra.mxu0 0.0
        %868 = vmatprep.subr.mxu0 0.0
        %869 = vmatpush1.xpose.msra.mxu0 0.0
        %870 = vmatprep.subr.mxu0 0.0
        %871 = vmatpush1.xpose.msra.mxu0 0.0
        %872 = vmatprep.subr.mxu0 0.0
        %873 = vmatpush1.xpose.msra.mxu0 0.0
        %874 = vmatprep.subr.mxu0 0.0
        %875 = vmatpush1.xpose.msra.mxu0 0.0
        %876 = vmatprep.subr.mxu0 0.0
        %877 = vmatpush1.xpose.msra.mxu0 0.0
        %878 = vmatprep.subr.mxu0 0.0
        %879 = vmatpush1.xpose.msra.mxu0 0.0
        %880 = vmatprep.subr.mxu0 0.0
        %881 = vmatpush1.xpose.msra.mxu0 0.0
        %882 = vmatprep.subr.mxu0 0.0
        %883 = vmatpush1.xpose.msra.mxu0 0.0
        %884 = vmatprep.subr.mxu0 0.0
        %885 = vmatpush1.xpose.msra.mxu0 0.0
        %886 = vmatprep.subr.mxu0 0.0
        %887 = vmatpush1.xpose.msra.mxu0 0.0
        %888 = vmatprep.subr.mxu0 0.0
        %889 = vmatpush1.xpose.msra.mxu0 0.0
        %890 = vmatprep.subr.mxu0 0.0
        %891 = vmatpush1.xpose.msra.mxu0 0.0
        %892 = vmatprep.subr.mxu0 0.0
        %893 = vmatpush1.xpose.msra.mxu0 0.0
        %894 = vmatprep.subr.mxu0 0.0
        %895 = vmatpush1.xpose.msra.mxu0 0.0
        %896 = vmatprep.subr.mxu0 0.0
        %897 = vmatpush1.xpose.msra.mxu0 0.0
        %898 = vmatprep.mubr.f32.mxu0 0.0
        %899 = vmatmul.mubr.f32.gmra.mrb[0].mxu0 %v829
        %v900 = vpop.f32.mrb[0].mxu0
        %v901 = vadd.f32 %v825, %v900
        %v902 = vpop.f32.mrb[0].mxu0
        %903 = vdwg.mxu0
        %v904 = vmax.f32 %v901, 0.0
        %v905 = vld [vmem:[%s3] sm:$0xff]
        %v906 = vld [vmem:[%s3 + $0x8] sm:$0xff]
        %v907 = vld [vmem:[%s3 + $0x10] sm:$0xff]
        %v908 = vld [vmem:[%s3 + $0x18] sm:$0xff]
        %v909 = vld [vmem:[%s4] sm:$0xff]
        %v910 = vld [vmem:[%s4 + $0x8] sm:$0xff]
        %v911 = vld [vmem:[%s4 + $0x10] sm:$0xff]
        %v912 = vld [vmem:[%s4 + $0x18] sm:$0xff]
        %914 = vset.pattern.permute.xlu0 0
        %915 = vperm.xlu0 %914, %v909
        %v916 = vpop.permute.xlu0 %915
        %919 = vset.pattern.permute.xlu0 0
        %920 = vperm.xlu0 %919, %v910
        %v921 = vpop.permute.xlu0 %920
        %924 = vset.pattern.permute.xlu0 0
        %925 = vperm.xlu0 %924, %v911
        %v926 = vpop.permute.xlu0 %925
        %929 = vset.pattern.permute.xlu0 0
        %930 = vperm.xlu0 %929, %v912
        %v931 = vpop.permute.xlu0 %930
        %vm933 = vcmask 15360
        %v935 = vsel %vm933, %v905, 0
        %v938 = vsel %vm933, %v906, 0
        %v941 = vsel %vm933, %v907, 0
        %v944 = vsel %vm933, %v908, 0
        %vm946 = vcmask 1041408
        %v948 = vsel %vm946, %v904, 0
        %950 = vmatprep.subr.mxu0 0.0
        %951 = vmatpush1.msra.mxu0 %v948
        %952 = vmatprep.subr.mxu0 0.0
        %953 = vmatpush1.msra.mxu0 0.0
        %954 = vmatprep.subr.mxu0 0.0
        %955 = vmatpush1.msra.mxu0 0.0
        %956 = vmatprep.subr.mxu0 0.0
        %957 = vmatpush1.msra.mxu0 0.0
        %958 = vmatprep.subr.mxu0 0.0
        %959 = vmatpush1.msra.mxu0 0.0
        %960 = vmatprep.subr.mxu0 0.0
        %961 = vmatpush1.msra.mxu0 0.0
        %962 = vmatprep.subr.mxu0 0.0
        %963 = vmatpush1.msra.mxu0 0.0
        %964 = vmatprep.subr.mxu0 0.0
        %965 = vmatpush1.msra.mxu0 0.0
        %966 = vmatprep.subr.mxu0 0.0
        %967 = vmatpush1.msra.mxu0 0.0
        %968 = vmatprep.subr.mxu0 0.0
        %969 = vmatpush1.msra.mxu0 0.0
        %970 = vmatprep.subr.mxu0 0.0
        %971 = vmatpush1.msra.mxu0 0.0
        %972 = vmatprep.subr.mxu0 0.0
        %973 = vmatpush1.msra.mxu0 0.0
        %974 = vmatprep.subr.mxu0 0.0
        %975 = vmatpush1.msra.mxu0 0.0
        %976 = vmatprep.subr.mxu0 0.0
        %977 = vmatpush1.msra.mxu0 0.0
        %978 = vmatprep.subr.mxu0 0.0
        %979 = vmatpush1.msra.mxu0 0.0
        %980 = vmatprep.subr.mxu0 0.0
        %981 = vmatpush1.msra.mxu0 0.0
        %982 = vmatprep.subr.mxu0 0.0
        %983 = vmatpush1.msra.mxu0 0.0
        %984 = vmatprep.subr.mxu0 0.0
        %985 = vmatpush1.msra.mxu0 0.0
        %986 = vmatprep.subr.mxu0 0.0
        %987 = vmatpush1.msra.mxu0 0.0
        %988 = vmatprep.subr.mxu0 0.0
        %989 = vmatpush1.msra.mxu0 0.0
        %990 = vmatprep.subr.mxu0 0.0
        %991 = vmatpush1.msra.mxu0 0.0
        %992 = vmatprep.subr.mxu0 0.0
        %993 = vmatpush1.msra.mxu0 0.0
        %994 = vmatprep.subr.mxu0 0.0
        %995 = vmatpush1.msra.mxu0 0.0
        %996 = vmatprep.subr.mxu0 0.0
        %997 = vmatpush1.msra.mxu0 0.0
        %998 = vmatprep.subr.mxu0 0.0
        %999 = vmatpush1.msra.mxu0 0.0
        %1000 = vmatprep.subr.mxu0 0.0
        %1001 = vmatpush1.msra.mxu0 0.0
        %1002 = vmatprep.subr.mxu0 0.0
        %1003 = vmatpush1.msra.mxu0 0.0
        %1004 = vmatprep.subr.mxu0 0.0
        %1005 = vmatpush1.msra.mxu0 0.0
        %1006 = vmatprep.subr.mxu0 0.0
        %1007 = vmatpush1.msra.mxu0 0.0
        %1008 = vmatprep.subr.mxu0 0.0
        %1009 = vmatpush1.msra.mxu0 0.0
        %1010 = vmatprep.subr.mxu0 0.0
        %1011 = vmatpush1.msra.mxu0 0.0
        %1012 = vmatprep.subr.mxu0 0.0
        %1013 = vmatpush1.msra.mxu0 0.0
        %1014 = vmatprep.mubr.f32.mxu0 0.0
        %1015 = vmatmul.mubr.f32.gmra.mrb[0].mxu0 %v935
        %v1016 = vpop.f32.mrb[0].mxu0
        %v1017 = vadd.f32 %v916, %v1016
        %v1018 = vpop.f32.mrb[0].mxu0
        %1019 = vmatprep.mubr.f32.mxu0 0.0
        %1020 = vmatmul.mubr.f32.gmra.mrb[0].mxu0 %v938
        %v1021 = vpop.f32.mrb[0].mxu0
        %v1022 = vadd.f32 %v921, %v1021
        %v1023 = vpop.f32.mrb[0].mxu0
        %1024 = vmatprep.mubr.f32.mxu0 0.0
        %1025 = vmatmul.mubr.f32.gmra.mrb[0].mxu0 %v941
        %v1026 = vpop.f32.mrb[0].mxu0
        %v1027 = vadd.f32 %v926, %v1026
        %v1028 = vpop.f32.mrb[0].mxu0
        %1029 = vmatprep.mubr.f32.mxu0 0.0
        %1030 = vmatmul.mubr.f32.gmra.mrb[0].mxu0 %v944
        %v1031 = vpop.f32.mrb[0].mxu0
        %v1032 = vadd.f32 %v931, %v1031
        %v1033 = vpop.f32.mrb[0].mxu0
        %1034 = vdwg.mxu0
        %1039 = vrot.lane.b32.xlu0 %v1017, 124
        %v1040 = vpop.permute.xlu0 %1039
        %1041 = vrot.lane.b32.xlu0 %v1022, 124
        %v1042 = vpop.permute.xlu0 %1041
        %1043 = vrot.lane.b32.xlu0 %v1027, 124
        %v1044 = vpop.permute.xlu0 %1043
        %1045 = vrot.lane.b32.xlu0 %v1032, 124
        %v1046 = vpop.permute.xlu0 %1045
        %v1051 = vadd.f32 %v1017, %v1040
        %v1052 = vadd.f32 %v1022, %v1042
        %v1053 = vadd.f32 %v1027, %v1044
        %v1054 = vadd.f32 %v1032, %v1046
        %v1055 = vxor.u32 %v1051, 2147483648
        %v1056 = vxor.u32 %v1052, 2147483648
        %v1057 = vxor.u32 %v1053, 2147483648
        %v1058 = vxor.u32 %v1054, 2147483648
        %v1059 = vmul.f32 %v1055, 1.442695
        %v1060 = vpow.pop %v1059
        %v1061 = vmul.f32 %v1056, 1.442695
        %v1062 = vpow.pop %v1061
        %v1063 = vmul.f32 %v1057, 1.442695
        %v1064 = vpow.pop %v1063
        %v1065 = vmul.f32 %v1058, 1.442695
        %v1066 = vpow.pop %v1065
        %v1067 = vadd.f32 %v1060, 1.0
        %v1068 = vadd.f32 %v1062, 1.0
        %v1069 = vadd.f32 %v1064, 1.0
        %v1070 = vadd.f32 %v1066, 1.0
        %v1071 = vrcp.pop %v1067
        %v1072 = vmul.f32 1.0, %v1071
        %v1073 = vrcp.pop %v1068
        %v1074 = vmul.f32 1.0, %v1073
        %v1075 = vrcp.pop %v1069
        %v1076 = vmul.f32 1.0, %v1075
        %v1077 = vrcp.pop %v1070
        %v1078 = vmul.f32 1.0, %v1077
        %v1087 = vsel %vm712, %v534, %v532
        %v1088 = vsel %vm714, %v536, %v1087
        %v1089 = vsel %vm716, %v538, %v1088
        %v1090 = vsel %vm712, %v535, %v533
        %v1091 = vsel %vm714, %v537, %v1090
        %v1092 = vsel %vm716, %v539, %v1091
        %v1103 = vsel %vm811, %v566, %v548
        %v1104 = vsel %vm813, %v584, %v1103
        %v1105 = vsel %vm815, %v602, %v1104
        %v1106 = vsel %vm811, %v575, %v557
        %v1107 = vsel %vm813, %v593, %v1106
        %v1108 = vsel %vm815, %v611, %v1107
        %v1111 = vsel %vm818, %v1089, %v1105
        %v1112 = vsel %vm818, %v1092, %v1108
        %1113 = vst [vmem:[#allocation2] sm:$0xff] 0.0
        %1114 = vst [vmem:[#allocation2 + $0x18] sm:$0xff] 0.0
        %1115 = vst [vmem:[#allocation2 + $0x8] sm:$0xff] %v1111
        %1116 = vst [vmem:[#allocation2 + $0x10] sm:$0xff] %v1112
        %v1117 = vlaneseq
        %v1118 = vshrl.u32 %v1117, 7
        %vm1119 = vcmp.lt.s32.totalorder %v1118, 4
        %v1120 = vadd.s32 %v629, 128
        %vm1121 = vcmp.lt.s32.totalorder %v629, 0
        %v1122 = vsub.s32 0, %v629
        %v1123 = vsel %vm1121, %v1122, %v629
        %v1124 = vshrl.u32 %v1123, 4
        %v1125 = vand.u32 %v1123, 15
        %v1126 = vsub.s32 0, %v1125
        %v1127 = vsel %vm1121, %v1126, %v1125
        %vm1128 = vcmp.lt.s32.totalorder %v1120, 0
        %v1129 = vsub.s32 0, %v1120
        %v1130 = vsel %vm1128, %v1129, %v1120
        %v1131 = vshrl.u32 %v1130, 4
        %v1132 = vand.u32 %v1130, 15
        %v1133 = vsub.s32 0, %v1132
        %v1134 = vsel %vm1128, %v1133, %v1132
        %vm1135 = vcmp.ne.s32.totalorder %v1127, 0
        %vm1136 = vcmp.ne.s32.totalorder %v1134, 0
        %vm1137 = vcmp.lt.s32.totalorder %v1127, 0
        %vm1138 = vcmp.lt.s32.totalorder %v1134, 0
        %vm1139 = vmand %vm1137, %vm1135
        %vm1140 = vmand %vm1138, %vm1136
        %v1141 = vadd.s32 %v1127, 16
        %v1142 = vadd.s32 %v1134, 16
        %v1143 = vsel %vm1139, %v1141, %v1127
        %v1144 = vsel %vm1140, %v1142, %v1134
        %s1145 = sld [smem:[#allocation8]]
        %s1146 = sld [smem:[#allocation8 + $0x31]]
        %v1147 = vstv %s1145
        %v1148 = vstv %s1146
        %v1149 = vsel %vm1119, %v1147, %v1148
        %v1150 = vld [vmem:[#allocation2] sm:$0xff]
        %v1151 = vld [vmem:[#allocation2 + $0x8] sm:$0xff]
        %v1152 = vld [vmem:[#allocation2 + $0x10] sm:$0xff]
        %v1153 = vmul.f32 %v1149, %v1150
        %v1154 = vmul.f32 %v1149, %v1151
        %v1155 = vmul.f32 %v1149, %v1152
        %v1156 = vadd.f32 %v1153, 0.0
        %v1157 = vadd.f32 %v1154, 0.0
        %v1158 = vadd.f32 %v1155, 0.0
        %s1159 = sld [smem:[#allocation8 + $0x7]]
        %s1160 = sld [smem:[#allocation8 + $0x38]]
        %v1161 = vstv %s1159
        %v1162 = vstv %s1160
        %v1163 = vsel %vm1119, %v1161, %v1162
        %v1164 = vmul.f32 %v1163, %v1150
        %v1165 = vmul.f32 %v1163, %v1151
        %v1166 = vmul.f32 %v1163, %v1152
        %1170 = vrot.lane.b32.xlu0 %v1164, 112
        %v1171 = vpop.permute.xlu0 %1170
        %1172 = vrot.lane.b32.xlu0 %v1165, 112
        %v1173 = vpop.permute.xlu0 %1172
        %1174 = vrot.lane.b32.xlu0 %v1166, 112
        %v1175 = vpop.permute.xlu0 %1174
        %vm1176 = vcmask 916480
        %v1177 = vsel %vm1176, %v1171, %v1173
        %v1178 = vsel %vm1176, %v1173, %v1175
        %v1182 = vadd.f32 %v1156, %v1177
        %v1183 = vadd.f32 %v1157, %v1178
        %v1184 = vadd.f32 %v1158, %v1175
        %s1185 = sld [smem:[#allocation8 + $0xe]]
        %s1186 = sld [smem:[#allocation8 + $0x3f]]
        %v1187 = vstv %s1185
        %v1188 = vstv %s1186
        %v1189 = vsel %vm1119, %v1187, %v1188
        %v1190 = vmul.f32 %v1189, %v1150
        %v1191 = vmul.f32 %v1189, %v1151
        %v1192 = vmul.f32 %v1189, %v1152
        %1196 = vrot.lane.b32.xlu0 %v1190, 96
        %v1197 = vpop.permute.xlu0 %1196
        %1198 = vrot.lane.b32.xlu0 %v1191, 96
        %v1199 = vpop.permute.xlu0 %1198
        %1200 = vrot.lane.b32.xlu0 %v1192, 96
        %v1201 = vpop.permute.xlu0 %1200
        %vm1202 = vcmask 785408
        %v1203 = vsel %vm1202, %v1197, %v1199
        %v1204 = vsel %vm1202, %v1199, %v1201
        %v1208 = vadd.f32 %v1182, %v1203
        %v1209 = vadd.f32 %v1183, %v1204
        %v1210 = vadd.f32 %v1184, %v1201
        %s1211 = sld [smem:[#allocation8 + $0x15]]
        %s1212 = sld [smem:[#allocation8 + $0x46]]
        %v1213 = vstv %s1211
        %v1214 = vstv %s1212
        %v1215 = vsel %vm1119, %v1213, %v1214
        %v1216 = vmul.f32 %v1215, %v1150
        %v1217 = vmul.f32 %v1215, %v1151
        %v1218 = vmul.f32 %v1215, %v1152
        %1222 = vrot.lane.b32.xlu0 %v1216, 80
        %v1223 = vpop.permute.xlu0 %1222
        %1224 = vrot.lane.b32.xlu0 %v1217, 80
        %v1225 = vpop.permute.xlu0 %1224
        %1226 = vrot.lane.b32.xlu0 %v1218, 80
        %v1227 = vpop.permute.xlu0 %1226
        %vm1228 = vcmask 654336
        %v1229 = vsel %vm1228, %v1223, %v1225
        %v1230 = vsel %vm1228, %v1225, %v1227
        %v1234 = vadd.f32 %v1208, %v1229
        %v1235 = vadd.f32 %v1209, %v1230
        %v1236 = vadd.f32 %v1210, %v1227
        %s1237 = sld [smem:[#allocation8 + $0x1c]]
        %s1238 = sld [smem:[#allocation8 + $0x4d]]
        %v1239 = vstv %s1237
        %v1240 = vstv %s1238
        %v1241 = vsel %vm1119, %v1239, %v1240
        %v1242 = vld [vmem:[#allocation2 + $0x8] sm:$0xff]
        %v1243 = vld [vmem:[#allocation2 + $0x10] sm:$0xff]
        %v1244 = vld [vmem:[#allocation2 + $0x18] sm:$0xff]
        %v1245 = vmul.f32 %v1241, %v1242
        %v1246 = vmul.f32 %v1241, %v1243
        %v1247 = vmul.f32 %v1241, %v1244
        %1251 = vrot.lane.b32.xlu0 %v1245, 64
        %v1252 = vpop.permute.xlu0 %1251
        %1253 = vrot.lane.b32.xlu0 %v1246, 64
        %v1254 = vpop.permute.xlu0 %1253
        %1255 = vrot.lane.b32.xlu0 %v1247, 64
        %v1256 = vpop.permute.xlu0 %1255
        %vm1257 = vcmask 523264
        %v1258 = vsel %vm1257, %v1252, %v1254
        %v1259 = vsel %vm1257, %v1254, %v1256
        %v1263 = vadd.f32 %v1234, %v1252
        %v1264 = vadd.f32 %v1235, %v1258
        %v1265 = vadd.f32 %v1236, %v1259
        %s1266 = sld [smem:[#allocation8 + $0x23]]
        %s1267 = sld [smem:[#allocation8 + $0x54]]
        %v1268 = vstv %s1266
        %v1269 = vstv %s1267
        %v1270 = vsel %vm1119, %v1268, %v1269
        %v1271 = vmul.f32 %v1270, %v1242
        %v1272 = vmul.f32 %v1270, %v1243
        %v1273 = vmul.f32 %v1270, %v1244
        %1277 = vrot.lane.b32.xlu0 %v1271, 48
        %v1278 = vpop.permute.xlu0 %1277
        %1279 = vrot.lane.b32.xlu0 %v1272, 48
        %v1280 = vpop.permute.xlu0 %1279
        %1281 = vrot.lane.b32.xlu0 %v1273, 48
        %v1282 = vpop.permute.xlu0 %1281
        %vm1283 = vcmask 392192
        %v1284 = vsel %vm1283, %v1278, %v1280
        %v1285 = vsel %vm1283, %v1280, %v1282
        %v1289 = vadd.f32 %v1263, %v1278
        %v1290 = vadd.f32 %v1264, %v1284
        %v1291 = vadd.f32 %v1265, %v1285
        %s1292 = sld [smem:[#allocation8 + $0x2a]]
        %s1293 = sld [smem:[#allocation8 + $0x5b]]
        %v1294 = vstv %s1292
        %v1295 = vstv %s1293
        %v1296 = vsel %vm1119, %v1294, %v1295
        %v1297 = vmul.f32 %v1296, %v1242
        %v1298 = vmul.f32 %v1296, %v1243
        %v1299 = vmul.f32 %v1296, %v1244
        %1303 = vrot.lane.b32.xlu0 %v1297, 32
        %v1304 = vpop.permute.xlu0 %1303
        %1305 = vrot.lane.b32.xlu0 %v1298, 32
        %v1306 = vpop.permute.xlu0 %1305
        %1307 = vrot.lane.b32.xlu0 %v1299, 32
        %v1308 = vpop.permute.xlu0 %1307
        %v1309 = vsel %vm827, %v1304, %v1306
        %v1310 = vsel %vm827, %v1306, %v1308
        %v1314 = vadd.f32 %v1289, %v1304
        %v1315 = vadd.f32 %v1290, %v1309
        %v1316 = vadd.f32 %v1291, %v1310
        %v1317 = vadd.s32 %v1143, 4294967293
        %v1318 = vadd.s32 %v1144, 4294967293
        %vm1319 = vcmp.ge.s32.totalorder %v1317, 0
        %vm1320 = vcmp.ge.s32.totalorder %v1318, 0
        %vm1321 = vcmp.lt.s32.totalorder %v1317, 16
        %vm1322 = vcmp.lt.s32.totalorder %v1318, 16
        %vm1323 = vmand %vm1319, %vm1321
        %vm1324 = vmand %vm1320, %vm1322
        %v1325 = vsel %vm1323, 1, 0
        %v1326 = vsel %vm1324, 1, 0
        %vm1327 = vcmp.eq.s32.totalorder %v1325, 1
        %vm1328 = vcmp.eq.s32.totalorder %v1326, 1
        %1332 = vrot.lane.b32.xlu0 %v1314, 51
        %v1333 = vpop.permute.xlu0 %1332
        %1334 = vrot.lane.b32.xlu0 %v1315, 51
        %v1335 = vpop.permute.xlu0 %1334
        %1336 = vrot.lane.b32.xlu0 %v1316, 51
        %v1337 = vpop.permute.xlu0 %1336
        %vm1338 = vcmask 416768
        %v1339 = vsel %vm1338, %v1333, %v1335
        %v1340 = vsel %vm1338, %v1335, %v1337
        %v1343 = vsel %vm1327, %v1339, 0.0
        %v1344 = vsel %vm1328, %v1340, 0.0
        %v1345 = vadd.f32 %v1343, 0.0
        %v1346 = vadd.f32 %v1344, 0.0
        %s1347 = sld [smem:[#allocation8 + $0x1]]
        %s1348 = sld [smem:[#allocation8 + $0x32]]
        %v1349 = vstv %s1347
        %v1350 = vstv %s1348
        %v1351 = vsel %vm1119, %v1349, %v1350
        %v1352 = vmul.f32 %v1351, %v1150
        %v1353 = vmul.f32 %v1351, %v1151
        %v1354 = vmul.f32 %v1351, %v1152
        %v1355 = vadd.f32 %v1352, 0.0
        %v1356 = vadd.f32 %v1353, 0.0
        %v1357 = vadd.f32 %v1354, 0.0
        %s1358 = sld [smem:[#allocation8 + $0x8]]
        %s1359 = sld [smem:[#allocation8 + $0x39]]
        %v1360 = vstv %s1358
        %v1361 = vstv %s1359
        %v1362 = vsel %vm1119, %v1360, %v1361
        %v1363 = vmul.f32 %v1362, %v1150
        %v1364 = vmul.f32 %v1362, %v1151
        %v1365 = vmul.f32 %v1362, %v1152
        %1369 = vrot.lane.b32.xlu0 %v1363, 112
        %v1370 = vpop.permute.xlu0 %1369
        %1371 = vrot.lane.b32.xlu0 %v1364, 112
        %v1372 = vpop.permute.xlu0 %1371
        %1373 = vrot.lane.b32.xlu0 %v1365, 112
        %v1374 = vpop.permute.xlu0 %1373
        %v1375 = vsel %vm1176, %v1370, %v1372
        %v1376 = vsel %vm1176, %v1372, %v1374
        %v1380 = vadd.f32 %v1355, %v1375
        %v1381 = vadd.f32 %v1356, %v1376
        %v1382 = vadd.f32 %v1357, %v1374
        %s1383 = sld [smem:[#allocation8 + $0xf]]
        %s1384 = sld [smem:[#allocation8 + $0x40]]
        %v1385 = vstv %s1383
        %v1386 = vstv %s1384
        %v1387 = vsel %vm1119, %v1385, %v1386
        %v1388 = vmul.f32 %v1387, %v1150
        %v1389 = vmul.f32 %v1387, %v1151
        %v1390 = vmul.f32 %v1387, %v1152
        %1394 = vrot.lane.b32.xlu0 %v1388, 96
        %v1395 = vpop.permute.xlu0 %1394
        %1396 = vrot.lane.b32.xlu0 %v1389, 96
        %v1397 = vpop.permute.xlu0 %1396
        %1398 = vrot.lane.b32.xlu0 %v1390, 96
        %v1399 = vpop.permute.xlu0 %1398
        %v1400 = vsel %vm1202, %v1395, %v1397
        %v1401 = vsel %vm1202, %v1397, %v1399
        %v1405 = vadd.f32 %v1380, %v1400
        %v1406 = vadd.f32 %v1381, %v1401
        %v1407 = vadd.f32 %v1382, %v1399
        %s1408 = sld [smem:[#allocation8 + $0x16]]
        %s1409 = sld [smem:[#allocation8 + $0x47]]
        %v1410 = vstv %s1408
        %v1411 = vstv %s1409
        %v1412 = vsel %vm1119, %v1410, %v1411
        %v1413 = vmul.f32 %v1412, %v1150
        %v1414 = vmul.f32 %v1412, %v1151
        %v1415 = vmul.f32 %v1412, %v1152
        %1419 = vrot.lane.b32.xlu0 %v1413, 80
        %v1420 = vpop.permute.xlu0 %1419
        %1421 = vrot.lane.b32.xlu0 %v1414, 80
        %v1422 = vpop.permute.xlu0 %1421
        %1423 = vrot.lane.b32.xlu0 %v1415, 80
        %v1424 = vpop.permute.xlu0 %1423
        %v1425 = vsel %vm1228, %v1420, %v1422
        %v1426 = vsel %vm1228, %v1422, %v1424
        %v1430 = vadd.f32 %v1405, %v1425
        %v1431 = vadd.f32 %v1406, %v1426
        %v1432 = vadd.f32 %v1407, %v1424
        %s1433 = sld [smem:[#allocation8 + $0x1d]]
        %s1434 = sld [smem:[#allocation8 + $0x4e]]
        %v1435 = vstv %s1433
        %v1436 = vstv %s1434
        %v1437 = vsel %vm1119, %v1435, %v1436
        %v1438 = vmul.f32 %v1437, %v1242
        %v1439 = vmul.f32 %v1437, %v1243
        %v1440 = vmul.f32 %v1437, %v1244
        %1444 = vrot.lane.b32.xlu0 %v1438, 64
        %v1445 = vpop.permute.xlu0 %1444
        %1446 = vrot.lane.b32.xlu0 %v1439, 64
        %v1447 = vpop.permute.xlu0 %1446
        %1448 = vrot.lane.b32.xlu0 %v1440, 64
        %v1449 = vpop.permute.xlu0 %1448
        %v1450 = vsel %vm1257, %v1445, %v1447
        %v1451 = vsel %vm1257, %v1447, %v1449
        %v1455 = vadd.f32 %v1430, %v1445
        %v1456 = vadd.f32 %v1431, %v1450
        %v1457 = vadd.f32 %v1432, %v1451
        %s1458 = sld [smem:[#allocation8 + $0x24]]
        %s1459 = sld [smem:[#allocation8 + $0x55]]
        %v1460 = vstv %s1458
        %v1461 = vstv %s1459
        %v1462 = vsel %vm1119, %v1460, %v1461
        %v1463 = vmul.f32 %v1462, %v1242
        %v1464 = vmul.f32 %v1462, %v1243
        %v1465 = vmul.f32 %v1462, %v1244
        %1469 = vrot.lane.b32.xlu0 %v1463, 48
        %v1470 = vpop.permute.xlu0 %1469
        %1471 = vrot.lane.b32.xlu0 %v1464, 48
        %v1472 = vpop.permute.xlu0 %1471
        %1473 = vrot.lane.b32.xlu0 %v1465, 48
        %v1474 = vpop.permute.xlu0 %1473
        %v1475 = vsel %vm1283, %v1470, %v1472
        %v1476 = vsel %vm1283, %v1472, %v1474
        %v1480 = vadd.f32 %v1455, %v1470
        %v1481 = vadd.f32 %v1456, %v1475
        %v1482 = vadd.f32 %v1457, %v1476
        %s1483 = sld [smem:[#allocation8 + $0x2b]]
        %s1484 = sld [smem:[#allocation8 + $0x5c]]
        %v1485 = vstv %s1483
        %v1486 = vstv %s1484
        %v1487 = vsel %vm1119, %v1485, %v1486
        %v1488 = vmul.f32 %v1487, %v1242
        %v1489 = vmul.f32 %v1487, %v1243
        %v1490 = vmul.f32 %v1487, %v1244
        %1494 = vrot.lane.b32.xlu0 %v1488, 32
        %v1495 = vpop.permute.xlu0 %1494
        %1496 = vrot.lane.b32.xlu0 %v1489, 32
        %v1497 = vpop.permute.xlu0 %1496
        %1498 = vrot.lane.b32.xlu0 %v1490, 32
        %v1499 = vpop.permute.xlu0 %1498
        %v1500 = vsel %vm827, %v1495, %v1497
        %v1501 = vsel %vm827, %v1497, %v1499
        %v1505 = vadd.f32 %v1480, %v1495
        %v1506 = vadd.f32 %v1481, %v1500
        %v1507 = vadd.f32 %v1482, %v1501
        %v1508 = vadd.s32 %v1143, 4294967294
        %v1509 = vadd.s32 %v1144, 4294967294
        %vm1510 = vcmp.ge.s32.totalorder %v1508, 0
        %vm1511 = vcmp.ge.s32.totalorder %v1509, 0
        %vm1512 = vcmp.lt.s32.totalorder %v1508, 16
        %vm1513 = vcmp.lt.s32.totalorder %v1509, 16
        %vm1514 = vmand %vm1510, %vm1512
        %vm1515 = vmand %vm1511, %vm1513
        %v1516 = vsel %vm1514, 1, 0
        %v1517 = vsel %vm1515, 1, 0
        %vm1518 = vcmp.eq.s32.totalorder %v1516, 1
        %vm1519 = vcmp.eq.s32.totalorder %v1517, 1
        %1523 = vrot.lane.b32.xlu0 %v1505, 50
        %v1524 = vpop.permute.xlu0 %1523
        %1525 = vrot.lane.b32.xlu0 %v1506, 50
        %v1526 = vpop.permute.xlu0 %1525
        %1527 = vrot.lane.b32.xlu0 %v1507, 50
        %v1528 = vpop.permute.xlu0 %1527
        %vm1529 = vcmask 408576
        %v1530 = vsel %vm1529, %v1524, %v1526
        %v1531 = vsel %vm1529, %v1526, %v1528
        %v1534 = vsel %vm1518, %v1530, 0.0
        %v1535 = vsel %vm1519, %v1531, 0.0
        %v1536 = vadd.f32 %v1345, %v1534
        %v1537 = vadd.f32 %v1346, %v1535
        %s1538 = sld [smem:[#allocation8 + $0x2]]
        %s1539 = sld [smem:[#allocation8 + $0x33]]
        %v1540 = vstv %s1538
        %v1541 = vstv %s1539
        %v1542 = vsel %vm1119, %v1540, %v1541
        %v1543 = vmul.f32 %v1542, %v1150
        %v1544 = vmul.f32 %v1542, %v1151
        %v1545 = vmul.f32 %v1542, %v1152
        %v1546 = vadd.f32 %v1543, 0.0
        %v1547 = vadd.f32 %v1544, 0.0
        %v1548 = vadd.f32 %v1545, 0.0
        %s1549 = sld [smem:[#allocation8 + $0x9]]
        %s1550 = sld [smem:[#allocation8 + $0x3a]]
        %v1551 = vstv %s1549
        %v1552 = vstv %s1550
        %v1553 = vsel %vm1119, %v1551, %v1552
        %v1554 = vmul.f32 %v1553, %v1150
        %v1555 = vmul.f32 %v1553, %v1151
        %v1556 = vmul.f32 %v1553, %v1152
        %1560 = vrot.lane.b32.xlu0 %v1554, 112
        %v1561 = vpop.permute.xlu0 %1560
        %1562 = vrot.lane.b32.xlu0 %v1555, 112
        %v1563 = vpop.permute.xlu0 %1562
        %1564 = vrot.lane.b32.xlu0 %v1556, 112
        %v1565 = vpop.permute.xlu0 %1564
        %v1566 = vsel %vm1176, %v1561, %v1563
        %v1567 = vsel %vm1176, %v1563, %v1565
        %v1571 = vadd.f32 %v1546, %v1566
        %v1572 = vadd.f32 %v1547, %v1567
        %v1573 = vadd.f32 %v1548, %v1565
        %s1574 = sld [smem:[#allocation8 + $0x10]]
        %s1575 = sld [smem:[#allocation8 + $0x41]]
        %v1576 = vstv %s1574
        %v1577 = vstv %s1575
        %v1578 = vsel %vm1119, %v1576, %v1577
        %v1579 = vmul.f32 %v1578, %v1150
        %v1580 = vmul.f32 %v1578, %v1151
        %v1581 = vmul.f32 %v1578, %v1152
        %1585 = vrot.lane.b32.xlu0 %v1579, 96
        %v1586 = vpop.permute.xlu0 %1585
        %1587 = vrot.lane.b32.xlu0 %v1580, 96
        %v1588 = vpop.permute.xlu0 %1587
        %1589 = vrot.lane.b32.xlu0 %v1581, 96
        %v1590 = vpop.permute.xlu0 %1589
        %v1591 = vsel %vm1202, %v1586, %v1588
        %v1592 = vsel %vm1202, %v1588, %v1590
        %v1596 = vadd.f32 %v1571, %v1591
        %v1597 = vadd.f32 %v1572, %v1592
        %v1598 = vadd.f32 %v1573, %v1590
        %s1599 = sld [smem:[#allocation8 + $0x17]]
        %s1600 = sld [smem:[#allocation8 + $0x48]]
        %v1601 = vstv %s1599
        %v1602 = vstv %s1600
        %v1603 = vsel %vm1119, %v1601, %v1602
        %v1604 = vmul.f32 %v1603, %v1150
        %v1605 = vmul.f32 %v1603, %v1151
        %v1606 = vmul.f32 %v1603, %v1152
        %1610 = vrot.lane.b32.xlu0 %v1604, 80
        %v1611 = vpop.permute.xlu0 %1610
        %1612 = vrot.lane.b32.xlu0 %v1605, 80
        %v1613 = vpop.permute.xlu0 %1612
        %1614 = vrot.lane.b32.xlu0 %v1606, 80
        %v1615 = vpop.permute.xlu0 %1614
        %v1616 = vsel %vm1228, %v1611, %v1613
        %v1617 = vsel %vm1228, %v1613, %v1615
        %v1621 = vadd.f32 %v1596, %v1616
        %v1622 = vadd.f32 %v1597, %v1617
        %v1623 = vadd.f32 %v1598, %v1615
        %s1624 = sld [smem:[#allocation8 + $0x1e]]
        %s1625 = sld [smem:[#allocation8 + $0x4f]]
        %v1626 = vstv %s1624
        %v1627 = vstv %s1625
        %v1628 = vsel %vm1119, %v1626, %v1627
        %v1629 = vmul.f32 %v1628, %v1242
        %v1630 = vmul.f32 %v1628, %v1243
        %v1631 = vmul.f32 %v1628, %v1244
        %1635 = vrot.lane.b32.xlu0 %v1629, 64
        %v1636 = vpop.permute.xlu0 %1635
        %1637 = vrot.lane.b32.xlu0 %v1630, 64
        %v1638 = vpop.permute.xlu0 %1637
        %1639 = vrot.lane.b32.xlu0 %v1631, 64
        %v1640 = vpop.permute.xlu0 %1639
        %v1641 = vsel %vm1257, %v1636, %v1638
        %v1642 = vsel %vm1257, %v1638, %v1640
        %v1646 = vadd.f32 %v1621, %v1636
        %v1647 = vadd.f32 %v1622, %v1641
        %v1648 = vadd.f32 %v1623, %v1642
        %s1649 = sld [smem:[#allocation8 + $0x25]]
        %s1650 = sld [smem:[#allocation8 + $0x56]]
        %v1651 = vstv %s1649
        %v1652 = vstv %s1650
        %v1653 = vsel %vm1119, %v1651, %v1652
        %v1654 = vmul.f32 %v1653, %v1242
        %v1655 = vmul.f32 %v1653, %v1243
        %v1656 = vmul.f32 %v1653, %v1244
        %1660 = vrot.lane.b32.xlu0 %v1654, 48
        %v1661 = vpop.permute.xlu0 %1660
        %1662 = vrot.lane.b32.xlu0 %v1655, 48
        %v1663 = vpop.permute.xlu0 %1662
        %1664 = vrot.lane.b32.xlu0 %v1656, 48
        %v1665 = vpop.permute.xlu0 %1664
        %v1666 = vsel %vm1283, %v1661, %v1663
        %v1667 = vsel %vm1283, %v1663, %v1665
        %v1671 = vadd.f32 %v1646, %v1661
        %v1672 = vadd.f32 %v1647, %v1666
        %v1673 = vadd.f32 %v1648, %v1667
        %s1674 = sld [smem:[#allocation8 + $0x2c]]
        %s1675 = sld [smem:[#allocation8 + $0x5d]]
        %v1676 = vstv %s1674
        %v1677 = vstv %s1675
        %v1678 = vsel %vm1119, %v1676, %v1677
        %v1679 = vmul.f32 %v1678, %v1242
        %v1680 = vmul.f32 %v1678, %v1243
        %v1681 = vmul.f32 %v1678, %v1244
        %1685 = vrot.lane.b32.xlu0 %v1679, 32
        %v1686 = vpop.permute.xlu0 %1685
        %1687 = vrot.lane.b32.xlu0 %v1680, 32
        %v1688 = vpop.permute.xlu0 %1687
        %1689 = vrot.lane.b32.xlu0 %v1681, 32
        %v1690 = vpop.permute.xlu0 %1689
        %v1691 = vsel %vm827, %v1686, %v1688
        %v1692 = vsel %vm827, %v1688, %v1690
        %v1696 = vadd.f32 %v1671, %v1686
        %v1697 = vadd.f32 %v1672, %v1691
        %v1698 = vadd.f32 %v1673, %v1692
        %v1699 = vadd.s32 %v1143, 4294967295
        %v1700 = vadd.s32 %v1144, 4294967295
        %vm1701 = vcmp.ge.s32.totalorder %v1699, 0
        %vm1702 = vcmp.ge.s32.totalorder %v1700, 0
        %vm1703 = vcmp.lt.s32.totalorder %v1699, 16
        %vm1704 = vcmp.lt.s32.totalorder %v1700, 16
        %vm1705 = vmand %vm1701, %vm1703
        %vm1706 = vmand %vm1702, %vm1704
        %v1707 = vsel %vm1705, 1, 0
        %v1708 = vsel %vm1706, 1, 0
        %vm1709 = vcmp.eq.s32.totalorder %v1707, 1
        %vm1710 = vcmp.eq.s32.totalorder %v1708, 1
        %1714 = vrot.lane.b32.xlu0 %v1696, 49
        %v1715 = vpop.permute.xlu0 %1714
        %1716 = vrot.lane.b32.xlu0 %v1697, 49
        %v1717 = vpop.permute.xlu0 %1716
        %1718 = vrot.lane.b32.xlu0 %v1698, 49
        %v1719 = vpop.permute.xlu0 %1718
        %vm1720 = vcmask 400384
        %v1721 = vsel %vm1720, %v1715, %v1717
        %v1722 = vsel %vm1720, %v1717, %v1719
        %v1725 = vsel %vm1709, %v1721, 0.0
        %v1726 = vsel %vm1710, %v1722, 0.0
        %v1727 = vadd.f32 %v1536, %v1725
        %v1728 = vadd.f32 %v1537, %v1726
        %s1729 = sld [smem:[#allocation8 + $0x3]]
        %s1730 = sld [smem:[#allocation8 + $0x34]]
        %v1731 = vstv %s1729
        %v1732 = vstv %s1730
        %v1733 = vsel %vm1119, %v1731, %v1732
        %v1734 = vmul.f32 %v1733, %v1150
        %v1735 = vmul.f32 %v1733, %v1151
        %v1736 = vmul.f32 %v1733, %v1152
        %v1737 = vadd.f32 %v1734, 0.0
        %v1738 = vadd.f32 %v1735, 0.0
        %v1739 = vadd.f32 %v1736, 0.0
        %s1740 = sld [smem:[#allocation8 + $0xa]]
        %s1741 = sld [smem:[#allocation8 + $0x3b]]
        %v1742 = vstv %s1740
        %v1743 = vstv %s1741
        %v1744 = vsel %vm1119, %v1742, %v1743
        %v1745 = vmul.f32 %v1744, %v1150
        %v1746 = vmul.f32 %v1744, %v1151
        %v1747 = vmul.f32 %v1744, %v1152
        %1751 = vrot.lane.b32.xlu0 %v1745, 112
        %v1752 = vpop.permute.xlu0 %1751
        %1753 = vrot.lane.b32.xlu0 %v1746, 112
        %v1754 = vpop.permute.xlu0 %1753
        %1755 = vrot.lane.b32.xlu0 %v1747, 112
        %v1756 = vpop.permute.xlu0 %1755
        %v1757 = vsel %vm1176, %v1752, %v1754
        %v1758 = vsel %vm1176, %v1754, %v1756
        %v1762 = vadd.f32 %v1737, %v1757
        %v1763 = vadd.f32 %v1738, %v1758
        %v1764 = vadd.f32 %v1739, %v1756
        %s1765 = sld [smem:[#allocation8 + $0x11]]
        %s1766 = sld [smem:[#allocation8 + $0x42]]
        %v1767 = vstv %s1765
        %v1768 = vstv %s1766
        %v1769 = vsel %vm1119, %v1767, %v1768
        %v1770 = vmul.f32 %v1769, %v1150
        %v1771 = vmul.f32 %v1769, %v1151
        %v1772 = vmul.f32 %v1769, %v1152
        %1776 = vrot.lane.b32.xlu0 %v1770, 96
        %v1777 = vpop.permute.xlu0 %1776
        %1778 = vrot.lane.b32.xlu0 %v1771, 96
        %v1779 = vpop.permute.xlu0 %1778
        %1780 = vrot.lane.b32.xlu0 %v1772, 96
        %v1781 = vpop.permute.xlu0 %1780
        %v1782 = vsel %vm1202, %v1777, %v1779
        %v1783 = vsel %vm1202, %v1779, %v1781
        %v1787 = vadd.f32 %v1762, %v1782
        %v1788 = vadd.f32 %v1763, %v1783
        %v1789 = vadd.f32 %v1764, %v1781
        %s1790 = sld [smem:[#allocation8 + $0x18]]
        %s1791 = sld [smem:[#allocation8 + $0x49]]
        %v1792 = vstv %s1790
        %v1793 = vstv %s1791
        %v1794 = vsel %vm1119, %v1792, %v1793
        %v1795 = vmul.f32 %v1794, %v1151
        %v1796 = vmul.f32 %v1794, %v1152
        %1799 = vrot.lane.b32.xlu0 %v1795, 80
        %v1800 = vpop.permute.xlu0 %1799
        %1801 = vrot.lane.b32.xlu0 %v1796, 80
        %v1802 = vpop.permute.xlu0 %1801
        %v1803 = vsel %vm1228, %v1800, %v1802
        %v1807 = vadd.f32 %v1787, %v1800
        %v1808 = vadd.f32 %v1788, %v1803
        %v1809 = vadd.f32 %v1789, %v1802
        %s1810 = sld [smem:[#allocation8 + $0x1f]]
        %s1811 = sld [smem:[#allocation8 + $0x50]]
        %v1812 = vstv %s1810
        %v1813 = vstv %s1811
        %v1814 = vsel %vm1119, %v1812, %v1813
        %v1815 = vmul.f32 %v1814, %v1242
        %v1816 = vmul.f32 %v1814, %v1243
        %v1817 = vmul.f32 %v1814, %v1244
        %1821 = vrot.lane.b32.xlu0 %v1815, 64
        %v1822 = vpop.permute.xlu0 %1821
        %1823 = vrot.lane.b32.xlu0 %v1816, 64
        %v1824 = vpop.permute.xlu0 %1823
        %1825 = vrot.lane.b32.xlu0 %v1817, 64
        %v1826 = vpop.permute.xlu0 %1825
        %v1827 = vsel %vm1257, %v1822, %v1824
        %v1828 = vsel %vm1257, %v1824, %v1826
        %v1832 = vadd.f32 %v1807, %v1822
        %v1833 = vadd.f32 %v1808, %v1827
        %v1834 = vadd.f32 %v1809, %v1828
        %s1835 = sld [smem:[#allocation8 + $0x26]]
        %s1836 = sld [smem:[#allocation8 + $0x57]]
        %v1837 = vstv %s1835
        %v1838 = vstv %s1836
        %v1839 = vsel %vm1119, %v1837, %v1838
        %v1840 = vmul.f32 %v1839, %v1242
        %v1841 = vmul.f32 %v1839, %v1243
        %v1842 = vmul.f32 %v1839, %v1244
        %1846 = vrot.lane.b32.xlu0 %v1840, 48
        %v1847 = vpop.permute.xlu0 %1846
        %1848 = vrot.lane.b32.xlu0 %v1841, 48
        %v1849 = vpop.permute.xlu0 %1848
        %1850 = vrot.lane.b32.xlu0 %v1842, 48
        %v1851 = vpop.permute.xlu0 %1850
        %v1852 = vsel %vm1283, %v1847, %v1849
        %v1853 = vsel %vm1283, %v1849, %v1851
        %v1857 = vadd.f32 %v1832, %v1847
        %v1858 = vadd.f32 %v1833, %v1852
        %v1859 = vadd.f32 %v1834, %v1853
        %s1860 = sld [smem:[#allocation8 + $0x2d]]
        %s1861 = sld [smem:[#allocation8 + $0x5e]]
        %v1862 = vstv %s1860
        %v1863 = vstv %s1861
        %v1864 = vsel %vm1119, %v1862, %v1863
        %v1865 = vmul.f32 %v1864, %v1242
        %v1866 = vmul.f32 %v1864, %v1243
        %v1867 = vmul.f32 %v1864, %v1244
        %1871 = vrot.lane.b32.xlu0 %v1865, 32
        %v1872 = vpop.permute.xlu0 %1871
        %1873 = vrot.lane.b32.xlu0 %v1866, 32
        %v1874 = vpop.permute.xlu0 %1873
        %1875 = vrot.lane.b32.xlu0 %v1867, 32
        %v1876 = vpop.permute.xlu0 %1875
        %v1877 = vsel %vm827, %v1872, %v1874
        %v1878 = vsel %vm827, %v1874, %v1876
        %v1882 = vadd.f32 %v1857, %v1872
        %v1883 = vadd.f32 %v1858, %v1877
        %v1884 = vadd.f32 %v1859, %v1878
        %vm1885 = vcmp.ge.s32.totalorder %v1143, 0
        %vm1886 = vcmp.ge.s32.totalorder %v1144, 0
        %vm1887 = vcmp.lt.s32.totalorder %v1143, 16
        %vm1888 = vcmp.lt.s32.totalorder %v1144, 16
        %vm1889 = vmand %vm1885, %vm1887
        %vm1890 = vmand %vm1886, %vm1888
        %v1891 = vsel %vm1889, 1, 0
        %v1892 = vsel %vm1890, 1, 0
        %vm1893 = vcmp.eq.s32.totalorder %v1891, 1
        %vm1894 = vcmp.eq.s32.totalorder %v1892, 1
        %1898 = vrot.lane.b32.xlu0 %v1882, 48
        %v1899 = vpop.permute.xlu0 %1898
        %1900 = vrot.lane.b32.xlu0 %v1883, 48
        %v1901 = vpop.permute.xlu0 %1900
        %1902 = vrot.lane.b32.xlu0 %v1884, 48
        %v1903 = vpop.permute.xlu0 %1902
        %v1904 = vsel %vm1283, %v1899, %v1901
        %v1905 = vsel %vm1283, %v1901, %v1903
        %v1908 = vsel %vm1893, %v1904, 0.0
        %v1909 = vsel %vm1894, %v1905, 0.0
        %v1910 = vadd.f32 %v1727, %v1908
        %v1911 = vadd.f32 %v1728, %v1909
        %s1912 = sld [smem:[#allocation8 + $0x4]]
        %s1913 = sld [smem:[#allocation8 + $0x35]]
        %v1914 = vstv %s1912
        %v1915 = vstv %s1913
        %v1916 = vsel %vm1119, %v1914, %v1915
        %v1917 = vmul.f32 %v1916, %v1150
        %v1918 = vmul.f32 %v1916, %v1151
        %v1919 = vmul.f32 %v1916, %v1152
        %v1920 = vadd.f32 %v1917, 0.0
        %v1921 = vadd.f32 %v1918, 0.0
        %v1922 = vadd.f32 %v1919, 0.0
        %s1923 = sld [smem:[#allocation8 + $0xb]]
        %s1924 = sld [smem:[#allocation8 + $0x3c]]
        %v1925 = vstv %s1923
        %v1926 = vstv %s1924
        %v1927 = vsel %vm1119, %v1925, %v1926
        %v1928 = vmul.f32 %v1927, %v1150
        %v1929 = vmul.f32 %v1927, %v1151
        %v1930 = vmul.f32 %v1927, %v1152
        %1934 = vrot.lane.b32.xlu0 %v1928, 112
        %v1935 = vpop.permute.xlu0 %1934
        %1936 = vrot.lane.b32.xlu0 %v1929, 112
        %v1937 = vpop.permute.xlu0 %1936
        %1938 = vrot.lane.b32.xlu0 %v1930, 112
        %v1939 = vpop.permute.xlu0 %1938
        %v1940 = vsel %vm1176, %v1935, %v1937
        %v1941 = vsel %vm1176, %v1937, %v1939
        %v1945 = vadd.f32 %v1920, %v1940
        %v1946 = vadd.f32 %v1921, %v1941
        %v1947 = vadd.f32 %v1922, %v1939
        %s1948 = sld [smem:[#allocation8 + $0x12]]
        %s1949 = sld [smem:[#allocation8 + $0x43]]
        %v1950 = vstv %s1948
        %v1951 = vstv %s1949
        %v1952 = vsel %vm1119, %v1950, %v1951
        %v1953 = vmul.f32 %v1952, %v1150
        %v1954 = vmul.f32 %v1952, %v1151
        %v1955 = vmul.f32 %v1952, %v1152
        %1959 = vrot.lane.b32.xlu0 %v1953, 96
        %v1960 = vpop.permute.xlu0 %1959
        %1961 = vrot.lane.b32.xlu0 %v1954, 96
        %v1962 = vpop.permute.xlu0 %1961
        %1963 = vrot.lane.b32.xlu0 %v1955, 96
        %v1964 = vpop.permute.xlu0 %1963
        %v1965 = vsel %vm1202, %v1960, %v1962
        %v1966 = vsel %vm1202, %v1962, %v1964
        %v1970 = vadd.f32 %v1945, %v1965
        %v1971 = vadd.f32 %v1946, %v1966
        %v1972 = vadd.f32 %v1947, %v1964
        %s1973 = sld [smem:[#allocation8 + $0x19]]
        %s1974 = sld [smem:[#allocation8 + $0x4a]]
        %v1975 = vstv %s1973
        %v1976 = vstv %s1974
        %v1977 = vsel %vm1119, %v1975, %v1976
        %v1978 = vmul.f32 %v1977, %v1242
        %v1979 = vmul.f32 %v1977, %v1243
        %v1980 = vmul.f32 %v1977, %v1244
        %1984 = vrot.lane.b32.xlu0 %v1978, 80
        %v1985 = vpop.permute.xlu0 %1984
        %1986 = vrot.lane.b32.xlu0 %v1979, 80
        %v1987 = vpop.permute.xlu0 %1986
        %1988 = vrot.lane.b32.xlu0 %v1980, 80
        %v1989 = vpop.permute.xlu0 %1988
        %v1990 = vsel %vm1228, %v1985, %v1987
        %v1991 = vsel %vm1228, %v1987, %v1989
        %v1995 = vadd.f32 %v1970, %v1985
        %v1996 = vadd.f32 %v1971, %v1990
        %v1997 = vadd.f32 %v1972, %v1991
        %s1998 = sld [smem:[#allocation8 + $0x20]]
        %s1999 = sld [smem:[#allocation8 + $0x51]]
        %v2000 = vstv %s1998
        %v2001 = vstv %s1999
        %v2002 = vsel %vm1119, %v2000, %v2001
        %v2003 = vmul.f32 %v2002, %v1242
        %v2004 = vmul.f32 %v2002, %v1243
        %v2005 = vmul.f32 %v2002, %v1244
        %2009 = vrot.lane.b32.xlu0 %v2003, 64
        %v2010 = vpop.permute.xlu0 %2009
        %2011 = vrot.lane.b32.xlu0 %v2004, 64
        %v2012 = vpop.permute.xlu0 %2011
        %2013 = vrot.lane.b32.xlu0 %v2005, 64
        %v2014 = vpop.permute.xlu0 %2013
        %v2015 = vsel %vm1257, %v2010, %v2012
        %v2016 = vsel %vm1257, %v2012, %v2014
        %v2020 = vadd.f32 %v1995, %v2010
        %v2021 = vadd.f32 %v1996, %v2015
        %v2022 = vadd.f32 %v1997, %v2016
        %s2023 = sld [smem:[#allocation8 + $0x27]]
        %s2024 = sld [smem:[#allocation8 + $0x58]]
        %v2025 = vstv %s2023
        %v2026 = vstv %s2024
        %v2027 = vsel %vm1119, %v2025, %v2026
        %v2028 = vmul.f32 %v2027, %v1242
        %v2029 = vmul.f32 %v2027, %v1243
        %v2030 = vmul.f32 %v2027, %v1244
        %2034 = vrot.lane.b32.xlu0 %v2028, 48
        %v2035 = vpop.permute.xlu0 %2034
        %2036 = vrot.lane.b32.xlu0 %v2029, 48
        %v2037 = vpop.permute.xlu0 %2036
        %2038 = vrot.lane.b32.xlu0 %v2030, 48
        %v2039 = vpop.permute.xlu0 %2038
        %v2040 = vsel %vm1283, %v2035, %v2037
        %v2041 = vsel %vm1283, %v2037, %v2039
        %v2045 = vadd.f32 %v2020, %v2035
        %v2046 = vadd.f32 %v2021, %v2040
        %v2047 = vadd.f32 %v2022, %v2041
        %s2048 = sld [smem:[#allocation8 + $0x2e]]
        %s2049 = sld [smem:[#allocation8 + $0x5f]]
        %v2050 = vstv %s2048
        %v2051 = vstv %s2049
        %v2052 = vsel %vm1119, %v2050, %v2051
        %v2053 = vmul.f32 %v2052, %v1242
        %v2054 = vmul.f32 %v2052, %v1243
        %v2055 = vmul.f32 %v2052, %v1244
        %2059 = vrot.lane.b32.xlu0 %v2053, 32
        %v2060 = vpop.permute.xlu0 %2059
        %2061 = vrot.lane.b32.xlu0 %v2054, 32
        %v2062 = vpop.permute.xlu0 %2061
        %2063 = vrot.lane.b32.xlu0 %v2055, 32
        %v2064 = vpop.permute.xlu0 %2063
        %v2065 = vsel %vm827, %v2060, %v2062
        %v2066 = vsel %vm827, %v2062, %v2064
        %v2070 = vadd.f32 %v2045, %v2060
        %v2071 = vadd.f32 %v2046, %v2065
        %v2072 = vadd.f32 %v2047, %v2066
        %v2073 = vadd.s32 %v1143, 1
        %v2074 = vadd.s32 %v1144, 1
        %vm2075 = vcmp.ge.s32.totalorder %v2073, 0
        %vm2076 = vcmp.ge.s32.totalorder %v2074, 0
        %vm2077 = vcmp.lt.s32.totalorder %v2073, 16
        %vm2078 = vcmp.lt.s32.totalorder %v2074, 16
        %vm2079 = vmand %vm2075, %vm2077
        %vm2080 = vmand %vm2076, %vm2078
        %v2081 = vsel %vm2079, 1, 0
        %v2082 = vsel %vm2080, 1, 0
        %vm2083 = vcmp.eq.s32.totalorder %v2081, 1
        %vm2084 = vcmp.eq.s32.totalorder %v2082, 1
        %2088 = vrot.lane.b32.xlu0 %v2070, 47
        %v2089 = vpop.permute.xlu0 %2088
        %2090 = vrot.lane.b32.xlu0 %v2071, 47
        %v2091 = vpop.permute.xlu0 %2090
        %2092 = vrot.lane.b32.xlu0 %v2072, 47
        %v2093 = vpop.permute.xlu0 %2092
        %vm2094 = vcmask 384000
        %v2095 = vsel %vm2094, %v2089, %v2091
        %v2096 = vsel %vm2094, %v2091, %v2093
        %v2099 = vsel %vm2083, %v2095, 0.0
        %v2100 = vsel %vm2084, %v2096, 0.0
        %v2101 = vadd.f32 %v1910, %v2099
        %v2102 = vadd.f32 %v1911, %v2100
        %s2103 = sld [smem:[#allocation8 + $0x5]]
        %s2104 = sld [smem:[#allocation8 + $0x36]]
        %v2105 = vstv %s2103
        %v2106 = vstv %s2104
        %v2107 = vsel %vm1119, %v2105, %v2106
        %v2108 = vmul.f32 %v2107, %v1150
        %v2109 = vmul.f32 %v2107, %v1151
        %v2110 = vmul.f32 %v2107, %v1152
        %v2111 = vadd.f32 %v2108, 0.0
        %v2112 = vadd.f32 %v2109, 0.0
        %v2113 = vadd.f32 %v2110, 0.0
        %s2114 = sld [smem:[#allocation8 + $0xc]]
        %s2115 = sld [smem:[#allocation8 + $0x3d]]
        %v2116 = vstv %s2114
        %v2117 = vstv %s2115
        %v2118 = vsel %vm1119, %v2116, %v2117
        %v2119 = vmul.f32 %v2118, %v1150
        %v2120 = vmul.f32 %v2118, %v1151
        %v2121 = vmul.f32 %v2118, %v1152
        %2125 = vrot.lane.b32.xlu0 %v2119, 112
        %v2126 = vpop.permute.xlu0 %2125
        %2127 = vrot.lane.b32.xlu0 %v2120, 112
        %v2128 = vpop.permute.xlu0 %2127
        %2129 = vrot.lane.b32.xlu0 %v2121, 112
        %v2130 = vpop.permute.xlu0 %2129
        %v2131 = vsel %vm1176, %v2126, %v2128
        %v2132 = vsel %vm1176, %v2128, %v2130
        %v2136 = vadd.f32 %v2111, %v2131
        %v2137 = vadd.f32 %v2112, %v2132
        %v2138 = vadd.f32 %v2113, %v2130
        %s2139 = sld [smem:[#allocation8 + $0x13]]
        %s2140 = sld [smem:[#allocation8 + $0x44]]
        %v2141 = vstv %s2139
        %v2142 = vstv %s2140
        %v2143 = vsel %vm1119, %v2141, %v2142
        %v2144 = vmul.f32 %v2143, %v1150
        %v2145 = vmul.f32 %v2143, %v1151
        %v2146 = vmul.f32 %v2143, %v1152
        %2150 = vrot.lane.b32.xlu0 %v2144, 96
        %v2151 = vpop.permute.xlu0 %2150
        %2152 = vrot.lane.b32.xlu0 %v2145, 96
        %v2153 = vpop.permute.xlu0 %2152
        %2154 = vrot.lane.b32.xlu0 %v2146, 96
        %v2155 = vpop.permute.xlu0 %2154
        %v2156 = vsel %vm1202, %v2151, %v2153
        %v2157 = vsel %vm1202, %v2153, %v2155
        %v2161 = vadd.f32 %v2136, %v2156
        %v2162 = vadd.f32 %v2137, %v2157
        %v2163 = vadd.f32 %v2138, %v2155
        %s2164 = sld [smem:[#allocation8 + $0x1a]]
        %s2165 = sld [smem:[#allocation8 + $0x4b]]
        %v2166 = vstv %s2164
        %v2167 = vstv %s2165
        %v2168 = vsel %vm1119, %v2166, %v2167
        %v2169 = vmul.f32 %v2168, %v1242
        %v2170 = vmul.f32 %v2168, %v1243
        %v2171 = vmul.f32 %v2168, %v1244
        %2175 = vrot.lane.b32.xlu0 %v2169, 80
        %v2176 = vpop.permute.xlu0 %2175
        %2177 = vrot.lane.b32.xlu0 %v2170, 80
        %v2178 = vpop.permute.xlu0 %2177
        %2179 = vrot.lane.b32.xlu0 %v2171, 80
        %v2180 = vpop.permute.xlu0 %2179
        %v2181 = vsel %vm1228, %v2176, %v2178
        %v2182 = vsel %vm1228, %v2178, %v2180
        %v2186 = vadd.f32 %v2161, %v2176
        %v2187 = vadd.f32 %v2162, %v2181
        %v2188 = vadd.f32 %v2163, %v2182
        %s2189 = sld [smem:[#allocation8 + $0x21]]
        %s2190 = sld [smem:[#allocation8 + $0x52]]
        %v2191 = vstv %s2189
        %v2192 = vstv %s2190
        %v2193 = vsel %vm1119, %v2191, %v2192
        %v2194 = vmul.f32 %v2193, %v1242
        %v2195 = vmul.f32 %v2193, %v1243
        %v2196 = vmul.f32 %v2193, %v1244
        %2200 = vrot.lane.b32.xlu0 %v2194, 64
        %v2201 = vpop.permute.xlu0 %2200
        %2202 = vrot.lane.b32.xlu0 %v2195, 64
        %v2203 = vpop.permute.xlu0 %2202
        %2204 = vrot.lane.b32.xlu0 %v2196, 64
        %v2205 = vpop.permute.xlu0 %2204
        %v2206 = vsel %vm1257, %v2201, %v2203
        %v2207 = vsel %vm1257, %v2203, %v2205
        %v2211 = vadd.f32 %v2186, %v2201
        %v2212 = vadd.f32 %v2187, %v2206
        %v2213 = vadd.f32 %v2188, %v2207
        %s2214 = sld [smem:[#allocation8 + $0x28]]
        %s2215 = sld [smem:[#allocation8 + $0x59]]
        %v2216 = vstv %s2214
        %v2217 = vstv %s2215
        %v2218 = vsel %vm1119, %v2216, %v2217
        %v2219 = vmul.f32 %v2218, %v1242
        %v2220 = vmul.f32 %v2218, %v1243
        %v2221 = vmul.f32 %v2218, %v1244
        %2225 = vrot.lane.b32.xlu0 %v2219, 48
        %v2226 = vpop.permute.xlu0 %2225
        %2227 = vrot.lane.b32.xlu0 %v2220, 48
        %v2228 = vpop.permute.xlu0 %2227
        %2229 = vrot.lane.b32.xlu0 %v2221, 48
        %v2230 = vpop.permute.xlu0 %2229
        %v2231 = vsel %vm1283, %v2226, %v2228
        %v2232 = vsel %vm1283, %v2228, %v2230
        %v2236 = vadd.f32 %v2211, %v2226
        %v2237 = vadd.f32 %v2212, %v2231
        %v2238 = vadd.f32 %v2213, %v2232
        %s2239 = sld [smem:[#allocation8 + $0x2f]]
        %s2240 = sld [smem:[#allocation8 + $0x60]]
        %v2241 = vstv %s2239
        %v2242 = vstv %s2240
        %v2243 = vsel %vm1119, %v2241, %v2242
        %v2244 = vmul.f32 %v2243, %v1242
        %v2245 = vmul.f32 %v2243, %v1243
        %v2246 = vmul.f32 %v2243, %v1244
        %2250 = vrot.lane.b32.xlu0 %v2244, 32
        %v2251 = vpop.permute.xlu0 %2250
        %2252 = vrot.lane.b32.xlu0 %v2245, 32
        %v2253 = vpop.permute.xlu0 %2252
        %2254 = vrot.lane.b32.xlu0 %v2246, 32
        %v2255 = vpop.permute.xlu0 %2254
        %v2256 = vsel %vm827, %v2251, %v2253
        %v2257 = vsel %vm827, %v2253, %v2255
        %v2261 = vadd.f32 %v2236, %v2251
        %v2262 = vadd.f32 %v2237, %v2256
        %v2263 = vadd.f32 %v2238, %v2257
        %v2264 = vadd.s32 %v1143, 2
        %v2265 = vadd.s32 %v1144, 2
        %vm2266 = vcmp.ge.s32.totalorder %v2264, 0
        %vm2267 = vcmp.ge.s32.totalorder %v2265, 0
        %vm2268 = vcmp.lt.s32.totalorder %v2264, 16
        %vm2269 = vcmp.lt.s32.totalorder %v2265, 16
        %vm2270 = vmand %vm2266, %vm2268
        %vm2271 = vmand %vm2267, %vm2269
        %v2272 = vsel %vm2270, 1, 0
        %v2273 = vsel %vm2271, 1, 0
        %vm2274 = vcmp.eq.s32.totalorder %v2272, 1
        %vm2275 = vcmp.eq.s32.totalorder %v2273, 1
        %2279 = vrot.lane.b32.xlu0 %v2261, 46
        %v2280 = vpop.permute.xlu0 %2279
        %2281 = vrot.lane.b32.xlu0 %v2262, 46
        %v2282 = vpop.permute.xlu0 %2281
        %2283 = vrot.lane.b32.xlu0 %v2263, 46
        %v2284 = vpop.permute.xlu0 %2283
        %vm2285 = vcmask 375808
        %v2286 = vsel %vm2285, %v2280, %v2282
        %v2287 = vsel %vm2285, %v2282, %v2284
        %v2290 = vsel %vm2274, %v2286, 0.0
        %v2291 = vsel %vm2275, %v2287, 0.0
        %v2292 = vadd.f32 %v2101, %v2290
        %v2293 = vadd.f32 %v2102, %v2291
        %s2294 = sld [smem:[#allocation8 + $0x6]]
        %s2295 = sld [smem:[#allocation8 + $0x37]]
        %v2296 = vstv %s2294
        %v2297 = vstv %s2295
        %v2298 = vsel %vm1119, %v2296, %v2297
        %v2299 = vmul.f32 %v2298, %v1150
        %v2300 = vmul.f32 %v2298, %v1151
        %v2301 = vmul.f32 %v2298, %v1152
        %v2302 = vadd.f32 %v2299, 0.0
        %v2303 = vadd.f32 %v2300, 0.0
        %v2304 = vadd.f32 %v2301, 0.0
        %s2305 = sld [smem:[#allocation8 + $0xd]]
        %s2306 = sld [smem:[#allocation8 + $0x3e]]
        %v2307 = vstv %s2305
        %v2308 = vstv %s2306
        %v2309 = vsel %vm1119, %v2307, %v2308
        %v2310 = vmul.f32 %v2309, %v1150
        %v2311 = vmul.f32 %v2309, %v1151
        %v2312 = vmul.f32 %v2309, %v1152
        %2316 = vrot.lane.b32.xlu0 %v2310, 112
        %v2317 = vpop.permute.xlu0 %2316
        %2318 = vrot.lane.b32.xlu0 %v2311, 112
        %v2319 = vpop.permute.xlu0 %2318
        %2320 = vrot.lane.b32.xlu0 %v2312, 112
        %v2321 = vpop.permute.xlu0 %2320
        %v2322 = vsel %vm1176, %v2317, %v2319
        %v2323 = vsel %vm1176, %v2319, %v2321
        %v2327 = vadd.f32 %v2302, %v2322
        %v2328 = vadd.f32 %v2303, %v2323
        %v2329 = vadd.f32 %v2304, %v2321
        %s2330 = sld [smem:[#allocation8 + $0x14]]
        %s2331 = sld [smem:[#allocation8 + $0x45]]
        %v2332 = vstv %s2330
        %v2333 = vstv %s2331
        %v2334 = vsel %vm1119, %v2332, %v2333
        %v2335 = vmul.f32 %v2334, %v1150
        %v2336 = vmul.f32 %v2334, %v1151
        %v2337 = vmul.f32 %v2334, %v1152
        %2341 = vrot.lane.b32.xlu0 %v2335, 96
        %v2342 = vpop.permute.xlu0 %2341
        %2343 = vrot.lane.b32.xlu0 %v2336, 96
        %v2344 = vpop.permute.xlu0 %2343
        %2345 = vrot.lane.b32.xlu0 %v2337, 96
        %v2346 = vpop.permute.xlu0 %2345
        %v2347 = vsel %vm1202, %v2342, %v2344
        %v2348 = vsel %vm1202, %v2344, %v2346
        %v2352 = vadd.f32 %v2327, %v2347
        %v2353 = vadd.f32 %v2328, %v2348
        %v2354 = vadd.f32 %v2329, %v2346
        %s2355 = sld [smem:[#allocation8 + $0x1b]]
        %s2356 = sld [smem:[#allocation8 + $0x4c]]
        %v2357 = vstv %s2355
        %v2358 = vstv %s2356
        %v2359 = vsel %vm1119, %v2357, %v2358
        %v2360 = vmul.f32 %v2359, %v1242
        %v2361 = vmul.f32 %v2359, %v1243
        %v2362 = vmul.f32 %v2359, %v1244
        %2366 = vrot.lane.b32.xlu0 %v2360, 80
        %v2367 = vpop.permute.xlu0 %2366
        %2368 = vrot.lane.b32.xlu0 %v2361, 80
        %v2369 = vpop.permute.xlu0 %2368
        %2370 = vrot.lane.b32.xlu0 %v2362, 80
        %v2371 = vpop.permute.xlu0 %2370
        %v2372 = vsel %vm1228, %v2367, %v2369
        %v2373 = vsel %vm1228, %v2369, %v2371
        %v2377 = vadd.f32 %v2352, %v2367
        %v2378 = vadd.f32 %v2353, %v2372
        %v2379 = vadd.f32 %v2354, %v2373
        %s2380 = sld [smem:[#allocation8 + $0x22]]
        %s2381 = sld [smem:[#allocation8 + $0x53]]
        %v2382 = vstv %s2380
        %v2383 = vstv %s2381
        %v2384 = vsel %vm1119, %v2382, %v2383
        %v2385 = vmul.f32 %v2384, %v1242
        %v2386 = vmul.f32 %v2384, %v1243
        %v2387 = vmul.f32 %v2384, %v1244
        %2391 = vrot.lane.b32.xlu0 %v2385, 64
        %v2392 = vpop.permute.xlu0 %2391
        %2393 = vrot.lane.b32.xlu0 %v2386, 64
        %v2394 = vpop.permute.xlu0 %2393
        %2395 = vrot.lane.b32.xlu0 %v2387, 64
        %v2396 = vpop.permute.xlu0 %2395
        %v2397 = vsel %vm1257, %v2392, %v2394
        %v2398 = vsel %vm1257, %v2394, %v2396
        %v2402 = vadd.f32 %v2377, %v2392
        %v2403 = vadd.f32 %v2378, %v2397
        %v2404 = vadd.f32 %v2379, %v2398
        %s2405 = sld [smem:[#allocation8 + $0x29]]
        %s2406 = sld [smem:[#allocation8 + $0x5a]]
        %v2407 = vstv %s2405
        %v2408 = vstv %s2406
        %v2409 = vsel %vm1119, %v2407, %v2408
        %v2410 = vmul.f32 %v2409, %v1242
        %v2411 = vmul.f32 %v2409, %v1243
        %v2412 = vmul.f32 %v2409, %v1244
        %2416 = vrot.lane.b32.xlu0 %v2410, 48
        %v2417 = vpop.permute.xlu0 %2416
        %2418 = vrot.lane.b32.xlu0 %v2411, 48
        %v2419 = vpop.permute.xlu0 %2418
        %2420 = vrot.lane.b32.xlu0 %v2412, 48
        %v2421 = vpop.permute.xlu0 %2420
        %v2422 = vsel %vm1283, %v2417, %v2419
        %v2423 = vsel %vm1283, %v2419, %v2421
        %v2427 = vadd.f32 %v2402, %v2417
        %v2428 = vadd.f32 %v2403, %v2422
        %v2429 = vadd.f32 %v2404, %v2423
        %s2430 = sld [smem:[#allocation8 + $0x30]]
        %s2431 = sld [smem:[#allocation8 + $0x61]]
        %v2432 = vstv %s2430
        %v2433 = vstv %s2431
        %v2434 = vsel %vm1119, %v2432, %v2433
        %v2435 = vmul.f32 %v2434, %v1242
        %v2436 = vmul.f32 %v2434, %v1243
        %v2437 = vmul.f32 %v2434, %v1244
        %2441 = vrot.lane.b32.xlu0 %v2435, 32
        %v2442 = vpop.permute.xlu0 %2441
        %2443 = vrot.lane.b32.xlu0 %v2436, 32
        %v2444 = vpop.permute.xlu0 %2443
        %2445 = vrot.lane.b32.xlu0 %v2437, 32
        %v2446 = vpop.permute.xlu0 %2445
        %v2447 = vsel %vm827, %v2442, %v2444
        %v2448 = vsel %vm827, %v2444, %v2446
        %v2452 = vadd.f32 %v2427, %v2442
        %v2453 = vadd.f32 %v2428, %v2447
        %v2454 = vadd.f32 %v2429, %v2448
        %v2455 = vadd.s32 %v1143, 3
        %v2456 = vadd.s32 %v1144, 3
        %vm2457 = vcmp.ge.s32.totalorder %v2455, 0
        %vm2458 = vcmp.ge.s32.totalorder %v2456, 0
        %vm2459 = vcmp.lt.s32.totalorder %v2455, 16
        %vm2460 = vcmp.lt.s32.totalorder %v2456, 16
        %vm2461 = vmand %vm2457, %vm2459
        %vm2462 = vmand %vm2458, %vm2460
        %v2463 = vsel %vm2461, 1, 0
        %v2464 = vsel %vm2462, 1, 0
        %vm2465 = vcmp.eq.s32.totalorder %v2463, 1
        %vm2466 = vcmp.eq.s32.totalorder %v2464, 1
        %2470 = vrot.lane.b32.xlu0 %v2452, 45
        %v2471 = vpop.permute.xlu0 %2470
        %2472 = vrot.lane.b32.xlu0 %v2453, 45
        %v2473 = vpop.permute.xlu0 %2472
        %2474 = vrot.lane.b32.xlu0 %v2454, 45
        %v2475 = vpop.permute.xlu0 %2474
        %vm2476 = vcmask 367616
        %v2477 = vsel %vm2476, %v2471, %v2473
        %v2478 = vsel %vm2476, %v2473, %v2475
        %v2481 = vsel %vm2465, %v2477, 0.0
        %v2482 = vsel %vm2466, %v2478, 0.0
        %v2483 = vadd.f32 %v2292, %v2481
        %v2484 = vadd.f32 %v2293, %v2482
        %v2487 = vrot.slane %v2483, 4
        %v2488 = vrot.slane %v2484, 4
        %v2491 = vadd.f32 %v2483, %v2487
        %v2492 = vadd.f32 %v2484, %v2488
        %s2493 = sld [smem:[#allocation3]]
        %v2494 = vstv %s2493
        %v2495 = vadd.f32 %v2491, %v2494
        %v2496 = vadd.f32 %v2492, %v2494
        %v2497 = vxor.u32 %v2495, 2147483648
        %v2498 = vxor.u32 %v2496, 2147483648
        %v2499 = vmul.f32 %v2497, 1.442695
        %v2500 = vpow.pop %v2499
        %v2501 = vmul.f32 %v2498, 1.442695
        %v2502 = vpow.pop %v2501
        %v2503 = vadd.f32 %v2500, 1.0
        %v2504 = vadd.f32 %v2502, 1.0
        %v2505 = vrcp.pop %v2503
        %v2506 = vmul.f32 1.0, %v2505
        %v2507 = vrcp.pop %v2504
        %v2508 = vmul.f32 1.0, %v2507
        %v2509 = vld [vmem:[%s277] sm:$0xff]
        %v2510 = vld [vmem:[%s277 + $0x8] sm:$0xff]
        %v2511 = vld [vmem:[%s277 + $0x10] sm:$0xff]
        %v2512 = vld [vmem:[%s277 + $0x18] sm:$0xff]
        %v2513 = vld [vmem:[%s277 + $0x20] sm:$0xff]
        %v2514 = vld [vmem:[%s277 + $0x28] sm:$0xff]
        %v2515 = vld [vmem:[%s277 + $0x30] sm:$0xff]
        %v2516 = vld [vmem:[%s277 + $0x38] sm:$0xff]
        %2518 = vset.pattern.permute.xlu0 0
        %2519 = vperm.xlu0 %2518, %v1072
        %v2520 = vpop.permute.xlu0 %2519
        %2523 = vset.pattern.permute.xlu0 0
        %2524 = vperm.xlu0 %2523, %v1074
        %v2525 = vpop.permute.xlu0 %2524
        %2528 = vset.pattern.permute.xlu0 0
        %2529 = vperm.xlu0 %2528, %v1076
        %v2530 = vpop.permute.xlu0 %2529
        %2533 = vset.pattern.permute.xlu0 0
        %2534 = vperm.xlu0 %2533, %v1078
        %v2535 = vpop.permute.xlu0 %2534
        %v2537 = vmul.f32 %v2520, %v2509
        %v2538 = vmul.f32 %v2520, %v2510
        %v2539 = vmul.f32 %v2525, %v2511
        %v2540 = vmul.f32 %v2525, %v2512
        %v2541 = vmul.f32 %v2530, %v2513
        %v2542 = vmul.f32 %v2530, %v2514
        %v2543 = vmul.f32 %v2535, %v2515
        %v2544 = vmul.f32 %v2535, %v2516
        %v2545 = vlaneseq
        %v2546 = vshrl.u32 %v2545, 7
        %v2547 = vsub.s32 0, %v2546
        %v2548 = vrot.slane %v2506, %v2547
        %v2549 = vlaneseq
        %v2550 = vshrl.u32 %v2549, 7
        %v2551 = vsub.s32 0, %v2550
        %v2552 = vrot.slane %v2508, %v2551
        %v2553 = vmul.f32 %v2548, %v2509
        %v2554 = vmul.f32 %v2552, %v2510
        %v2555 = vmul.f32 %v2548, %v2511
        %v2556 = vmul.f32 %v2552, %v2512
        %v2557 = vmul.f32 %v2548, %v2513
        %v2558 = vmul.f32 %v2552, %v2514
        %v2559 = vmul.f32 %v2548, %v2515
        %v2560 = vmul.f32 %v2552, %v2516
        %v2561 = vmul.f32 %v2537, %v2553
        %v2562 = vmul.f32 %v2538, %v2554
        %v2563 = vmul.f32 %v2539, %v2555
        %v2564 = vmul.f32 %v2540, %v2556
        %v2565 = vmul.f32 %v2541, %v2557
        %v2566 = vmul.f32 %v2542, %v2558
        %v2567 = vmul.f32 %v2543, %v2559
        %v2568 = vmul.f32 %v2544, %v2560
        %2569 = vst [vmem:[%s312] sm:$0xff] %v2561
        %2570 = vst [vmem:[%s312 + $0x8] sm:$0xff] %v2562
        %2571 = vst [vmem:[%s312 + $0x10] sm:$0xff] %v2563
        %2572 = vst [vmem:[%s312 + $0x18] sm:$0xff] %v2564
        %2573 = vst [vmem:[%s312 + $0x20] sm:$0xff] %v2565
        %2574 = vst [vmem:[%s312 + $0x28] sm:$0xff] %v2566
        %2575 = vst [vmem:[%s312 + $0x30] sm:$0xff] %v2567
        %2576 = vst [vmem:[%s312 + $0x38] sm:$0xff] %v2568
        %s2577 = scalar_lea.vmem %s277, 64 [#allocation4]
        %v2578 = vld [vmem:[%s2577] sm:$0xff]
        %v2579 = vld [vmem:[%s2577 + $0x8] sm:$0xff]
        %v2580 = vld [vmem:[%s2577 + $0x10] sm:$0xff]
        %v2581 = vld [vmem:[%s2577 + $0x18] sm:$0xff]
        %v2582 = vld [vmem:[%s2577 + $0x20] sm:$0xff]
        %v2583 = vld [vmem:[%s2577 + $0x28] sm:$0xff]
        %v2584 = vld [vmem:[%s2577 + $0x30] sm:$0xff]
        %v2585 = vld [vmem:[%s2577 + $0x38] sm:$0xff]
        %2586 = vset.pattern.permute.xlu0 1
        %2587 = vperm.xlu0 %2586, %v1072
        %v2588 = vpop.permute.xlu0 %2587
        %2590 = vset.pattern.permute.xlu0 1
        %2591 = vperm.xlu0 %2590, %v1074
        %v2592 = vpop.permute.xlu0 %2591
        %2594 = vset.pattern.permute.xlu0 1
        %2595 = vperm.xlu0 %2594, %v1076
        %v2596 = vpop.permute.xlu0 %2595
        %2598 = vset.pattern.permute.xlu0 1
        %2599 = vperm.xlu0 %2598, %v1078
        %v2600 = vpop.permute.xlu0 %2599
        %v2602 = vmul.f32 %v2588, %v2578
        %v2603 = vmul.f32 %v2588, %v2579
        %v2604 = vmul.f32 %v2592, %v2580
        %v2605 = vmul.f32 %v2592, %v2581
        %v2606 = vmul.f32 %v2596, %v2582
        %v2607 = vmul.f32 %v2596, %v2583
        %v2608 = vmul.f32 %v2600, %v2584
        %v2609 = vmul.f32 %v2600, %v2585
        %v2610 = vlaneseq
        %v2611 = vshrl.u32 %v2610, 7
        %v2612 = vsub.s32 1, %v2611
        %v2613 = vrot.slane %v2506, %v2612
        %v2614 = vlaneseq
        %v2615 = vshrl.u32 %v2614, 7
        %v2616 = vsub.s32 1, %v2615
        %v2617 = vrot.slane %v2508, %v2616
        %v2618 = vmul.f32 %v2613, %v2578
        %v2619 = vmul.f32 %v2617, %v2579
        %v2620 = vmul.f32 %v2613, %v2580
        %v2621 = vmul.f32 %v2617, %v2581
        %v2622 = vmul.f32 %v2613, %v2582
        %v2623 = vmul.f32 %v2617, %v2583
        %v2624 = vmul.f32 %v2613, %v2584
        %v2625 = vmul.f32 %v2617, %v2585
        %v2626 = vmul.f32 %v2602, %v2618
        %v2627 = vmul.f32 %v2603, %v2619
        %v2628 = vmul.f32 %v2604, %v2620
        %v2629 = vmul.f32 %v2605, %v2621
        %v2630 = vmul.f32 %v2606, %v2622
        %v2631 = vmul.f32 %v2607, %v2623
        %v2632 = vmul.f32 %v2608, %v2624
        %v2633 = vmul.f32 %v2609, %v2625
        %s2634 = scalar_lea.vmem %s312, 64 [#allocation9]
        %2635 = vst [vmem:[%s2634] sm:$0xff] %v2626
        %2636 = vst [vmem:[%s2634 + $0x8] sm:$0xff] %v2627
        %2637 = vst [vmem:[%s2634 + $0x10] sm:$0xff] %v2628
        %2638 = vst [vmem:[%s2634 + $0x18] sm:$0xff] %v2629
        %2639 = vst [vmem:[%s2634 + $0x20] sm:$0xff] %v2630
        %2640 = vst [vmem:[%s2634 + $0x28] sm:$0xff] %v2631
        %2641 = vst [vmem:[%s2634 + $0x30] sm:$0xff] %v2632
        %2642 = vst [vmem:[%s2634 + $0x38] sm:$0xff] %v2633
        %s2643 = scalar_lea.vmem %s277, 128 [#allocation4]
        %v2644 = vld [vmem:[%s2643] sm:$0xff]
        %v2645 = vld [vmem:[%s2643 + $0x8] sm:$0xff]
        %v2646 = vld [vmem:[%s2643 + $0x10] sm:$0xff]
        %v2647 = vld [vmem:[%s2643 + $0x18] sm:$0xff]
        %v2648 = vld [vmem:[%s2643 + $0x20] sm:$0xff]
        %v2649 = vld [vmem:[%s2643 + $0x28] sm:$0xff]
        %v2650 = vld [vmem:[%s2643 + $0x30] sm:$0xff]
        %v2651 = vld [vmem:[%s2643 + $0x38] sm:$0xff]
        %2652 = vset.pattern.permute.xlu0 2
        %2653 = vperm.xlu0 %2652, %v1072
        %v2654 = vpop.permute.xlu0 %2653
        %2656 = vset.pattern.permute.xlu0 2
        %2657 = vperm.xlu0 %2656, %v1074
        %v2658 = vpop.permute.xlu0 %2657
        %2660 = vset.pattern.permute.xlu0 2
        %2661 = vperm.xlu0 %2660, %v1076
        %v2662 = vpop.permute.xlu0 %2661
        %2664 = vset.pattern.permute.xlu0 2
        %2665 = vperm.xlu0 %2664, %v1078
        %v2666 = vpop.permute.xlu0 %2665
        %v2668 = vmul.f32 %v2654, %v2644
        %v2669 = vmul.f32 %v2654, %v2645
        %v2670 = vmul.f32 %v2658, %v2646
        %v2671 = vmul.f32 %v2658, %v2647
        %v2672 = vmul.f32 %v2662, %v2648
        %v2673 = vmul.f32 %v2662, %v2649
        %v2674 = vmul.f32 %v2666, %v2650
        %v2675 = vmul.f32 %v2666, %v2651
        %v2676 = vlaneseq
        %v2677 = vshrl.u32 %v2676, 7
        %v2678 = vsub.s32 2, %v2677
        %v2679 = vrot.slane %v2506, %v2678
        %v2680 = vlaneseq
        %v2681 = vshrl.u32 %v2680, 7
        %v2682 = vsub.s32 2, %v2681
        %v2683 = vrot.slane %v2508, %v2682
        %v2684 = vmul.f32 %v2679, %v2644
        %v2685 = vmul.f32 %v2683, %v2645
        %v2686 = vmul.f32 %v2679, %v2646
        %v2687 = vmul.f32 %v2683, %v2647
        %v2688 = vmul.f32 %v2679, %v2648
        %v2689 = vmul.f32 %v2683, %v2649
        %v2690 = vmul.f32 %v2679, %v2650
        %v2691 = vmul.f32 %v2683, %v2651
        %v2692 = vmul.f32 %v2668, %v2684
        %v2693 = vmul.f32 %v2669, %v2685
        %v2694 = vmul.f32 %v2670, %v2686
        %v2695 = vmul.f32 %v2671, %v2687
        %v2696 = vmul.f32 %v2672, %v2688
        %v2697 = vmul.f32 %v2673, %v2689
        %v2698 = vmul.f32 %v2674, %v2690
        %v2699 = vmul.f32 %v2675, %v2691
        %s2700 = scalar_lea.vmem %s312, 128 [#allocation9]
        %2701 = vst [vmem:[%s2700] sm:$0xff] %v2692
        %2702 = vst [vmem:[%s2700 + $0x8] sm:$0xff] %v2693
        %2703 = vst [vmem:[%s2700 + $0x10] sm:$0xff] %v2694
        %2704 = vst [vmem:[%s2700 + $0x18] sm:$0xff] %v2695
        %2705 = vst [vmem:[%s2700 + $0x20] sm:$0xff] %v2696
        %2706 = vst [vmem:[%s2700 + $0x28] sm:$0xff] %v2697
        %2707 = vst [vmem:[%s2700 + $0x30] sm:$0xff] %v2698
        %2708 = vst [vmem:[%s2700 + $0x38] sm:$0xff] %v2699
        %s2709 = scalar_lea.vmem %s277, 192 [#allocation4]
        %v2710 = vld [vmem:[%s2709] sm:$0xff]
        %v2711 = vld [vmem:[%s2709 + $0x8] sm:$0xff]
        %v2712 = vld [vmem:[%s2709 + $0x10] sm:$0xff]
        %v2713 = vld [vmem:[%s2709 + $0x18] sm:$0xff]
        %v2714 = vld [vmem:[%s2709 + $0x20] sm:$0xff]
        %v2715 = vld [vmem:[%s2709 + $0x28] sm:$0xff]
        %v2716 = vld [vmem:[%s2709 + $0x30] sm:$0xff]
        %v2717 = vld [vmem:[%s2709 + $0x38] sm:$0xff]
        %2718 = vset.pattern.permute.xlu0 3
        %2719 = vperm.xlu0 %2718, %v1072
        %v2720 = vpop.permute.xlu0 %2719
        %2722 = vset.pattern.permute.xlu0 3
        %2723 = vperm.xlu0 %2722, %v1074
        %v2724 = vpop.permute.xlu0 %2723
        %2726 = vset.pattern.permute.xlu0 3
        %2727 = vperm.xlu0 %2726, %v1076
        %v2728 = vpop.permute.xlu0 %2727
        %2730 = vset.pattern.permute.xlu0 3
        %2731 = vperm.xlu0 %2730, %v1078
        %v2732 = vpop.permute.xlu0 %2731
        %v2734 = vmul.f32 %v2720, %v2710
        %v2735 = vmul.f32 %v2720, %v2711
        %v2736 = vmul.f32 %v2724, %v2712
        %v2737 = vmul.f32 %v2724, %v2713
        %v2738 = vmul.f32 %v2728, %v2714
        %v2739 = vmul.f32 %v2728, %v2715
        %v2740 = vmul.f32 %v2732, %v2716
        %v2741 = vmul.f32 %v2732, %v2717
        %v2742 = vlaneseq
        %v2743 = vshrl.u32 %v2742, 7
        %v2744 = vsub.s32 3, %v2743
        %v2745 = vrot.slane %v2506, %v2744
        %v2746 = vlaneseq
        %v2747 = vshrl.u32 %v2746, 7
        %v2748 = vsub.s32 3, %v2747
        %v2749 = vrot.slane %v2508, %v2748
        %v2750 = vmul.f32 %v2745, %v2710
        %v2751 = vmul.f32 %v2749, %v2711
        %v2752 = vmul.f32 %v2745, %v2712
        %v2753 = vmul.f32 %v2749, %v2713
        %v2754 = vmul.f32 %v2745, %v2714
        %v2755 = vmul.f32 %v2749, %v2715
        %v2756 = vmul.f32 %v2745, %v2716
        %v2757 = vmul.f32 %v2749, %v2717
        %v2758 = vmul.f32 %v2734, %v2750
        %v2759 = vmul.f32 %v2735, %v2751
        %v2760 = vmul.f32 %v2736, %v2752
        %v2761 = vmul.f32 %v2737, %v2753
        %v2762 = vmul.f32 %v2738, %v2754
        %v2763 = vmul.f32 %v2739, %v2755
        %v2764 = vmul.f32 %v2740, %v2756
        %v2765 = vmul.f32 %v2741, %v2757
        %s2766 = scalar_lea.vmem %s312, 192 [#allocation9]
        %2767 = vst [vmem:[%s2766] sm:$0xff] %v2758
        %2768 = vst [vmem:[%s2766 + $0x8] sm:$0xff] %v2759
        %2769 = vst [vmem:[%s2766 + $0x10] sm:$0xff] %v2760
        %2770 = vst [vmem:[%s2766 + $0x18] sm:$0xff] %v2761
        %2771 = vst [vmem:[%s2766 + $0x20] sm:$0xff] %v2762
        %2772 = vst [vmem:[%s2766 + $0x28] sm:$0xff] %v2763
        %2773 = vst [vmem:[%s2766 + $0x30] sm:$0xff] %v2764
        %2774 = vst [vmem:[%s2766 + $0x38] sm:$0xff] %v2765
        %s2775 = sand.u32 %s186, 1
        %s2776 = scalar_lea.sflag [#allocation6], %s2775
        %s2777 = sand.u32 %s186, 1
        %s2778 = smul.addr %s2777, 256
        %s2779 = scalar_lea.vmem [#allocation9], %s2778
        // Predicated region
        $region57: #{tpu_custom_call.1} parent=47 // pred_check
          %p2780 = pneg %p196
        $region58: #{tpu_custom_call.1} parent=47 // pred_check_branch
          %2782 = sbr.rel (%p2780) target = $region60
        $region59: #{tpu_custom_call.1} parent=47 // pred_region
          %s2783 = smul.u32 4, %s26
          %s2785 = ssub.s32 4096, 4096
          %2786 = vsyncadd %s2776, %s2785
          %s2787 = smul.addr %s2783, 8
          %s2788 = smul.addr %s2787, 128
          %s2789 = scalar_lea.hbm %s7, %s2788
          %s2790 = sshll.u32 %s2779, 4
          %s2791 = int_to_ptr.vmem [resolvable:$true] %s2790
          %2796 = dma.vmem_to_hbm [thread:$0]  %s2791, 4096, %s2789, %s2776, 256, 256, 16
        $region60: #{tpu_custom_call.1} parent=47 // pred_fallthru
          _
      $region48: #{tpu_custom_call.1} parent=5 // pred_fallthru
        _
      %p2797 = scmp.le.s32.totalorder 2, %s21
      // Predicated region
      $region61: #{tpu_custom_call.1} parent=5 // pred_check
        %p2798 = pneg %p2797
      $region62: #{tpu_custom_call.1} parent=5 // pred_check_branch
        %2800 = sbr.rel (%p2798) target = $region64
      $region63: #{tpu_custom_call.1} parent=5 // pred_region
        %s2801 = ssub.s32 %s21, 2
        // Predicated region
        $region65: #{tpu_custom_call.1} parent=63 // pred_check
          %p2802 = pneg %p202
        $region66: #{tpu_custom_call.1} parent=63 // pred_check_branch
          %2804 = sbr.rel (%p2802) target = $region68
        $region67: #{tpu_custom_call.1} parent=63 // pred_region
          %s2805 = sand.u32 %s187, 1
          %s2806 = scalar_lea.sflag [#allocation6], %s2805
          %s2807 = sand.u32 %s187, 1
          %s2808 = smul.addr %s2807, 256
          %s2809 = scalar_lea.vmem [#allocation9], %s2808
          %2810 = dma.done %s2806, 4096
        $region68: #{tpu_custom_call.1} parent=63 // pred_fallthru
          _
      $region64: #{tpu_custom_call.1} parent=5 // pred_fallthru
        _
    $region6: #{tpu_custom_call.1} parent=1 // loop_footer
      %s25 = sadd.s32 1, %s21
    $region7: #{tpu_custom_call.1} parent=1 // loop_footer_branch
      %20 = sbr.rel target = $region3
    $region8: #{tpu_custom_call.1} parent=1 // loop_exit
      _
    %2811 = vsyncpa [#allocation5], 1
    %s2812 = scalar_lea.sflag [#allocation5], 1
    %2813 = vsyncpa %s2812, 1
    %2814 = vsyncpa [#allocation6], 1
    %s2815 = scalar_lea.sflag [#allocation6], 1
    %2816 = vsyncpa %s2815, 1
    %2817 = vsyncpa [#allocation7], 1
    %s2818 = scalar_lea.sflag [#allocation7], 1
    %2819 = vsyncpa %s2818, 1

</llo_original>
